<compile_context>
chip_gen: v7x
topology: tpu7x:2x2x1
jax: 0.10.0
libtpu: 0.0.40
codegen_flags: <defaults>
</compile_context>

<pallas_src>
import numpy as np
import jax
import jax.numpy as jnp
from jax import lax
from jax.experimental import pallas as pl
from jax.experimental.pallas import tpu as pltpu


# -----------------------------------------------------------------------------
# Pallas kernel: grid = (batch, time-tile), both axes parallel
# -----------------------------------------------------------------------------
def _diffusion_fwd_kernel(
    # scalar-prefetch (SMEM) refs
    sqrt_ac_ref,       # (B,)  f32  sqrt(alphas_cumprod)[t_b]
    sqrt_om_ref,       # (B,)  f32  sqrt(1 - alphas_cumprod)[t_b]
    len_ref,           # (B,)  i32  valid (non-padded) frame count
    # VMEM input refs
    mel_ref,           # (tT, M)
    cond_ref,          # (tT, C)
    noise_ref,         # (tT, M)
    coeff_ref,         # (8,  M) f32 rows: [cn_a, cn_b, dn_a, dn_b, 0, 0, 0, 0]
    bias_ref,          # (1,  H) f32 style@ws + lang@wl + temb (per batch)
    wx_ref,            # (M,  H) bf16
    wc_ref,            # (C,  H) bf16
    wout_ref,          # (H,  M) bf16
    # VMEM output refs
    out_ref,           # (tT, M) f32  denorm_spec(noised_mel)
    eps_ref,           # (tT, M) f32  denoiser epsilon
    loss_ref,          # (1,  M) f32  per-(b, tile) masked |noise - eps| lane sums
):
    b = pl.program_id(0)
    tt = pl.program_id(1)
    t_tile = mel_ref.shape[0]

    a = sqrt_ac_ref[b]                  # sqrt(alpha_cumprod_t)
    s = sqrt_om_ref[b]                  # sqrt(1 - alpha_cumprod_t)

    cn_a = coeff_ref[0:1, :]            # 2 / (smax - smin)
    cn_b = coeff_ref[1:2, :]            # -(2*smin/(smax-smin) + 1)
    dn_a = coeff_ref[2:3, :]            # 0.5 * (smax - smin)
    dn_b = coeff_ref[3:4, :]            # 0.5 * (smax - smin) + smin

    mel = mel_ref[...].astype(jnp.float32)
    noise = noise_ref[...].astype(jnp.float32)

    # norm_spec + q_sample (elementwise, f32, precomputed FMA coefficients)
    x0 = mel * cn_a + cn_b
    x_t = a * x0 + s * noise

    # denorm_spec of the noised mel — the module's returned `output`
    out_ref[...] = (x_t * dn_a + dn_b).astype(out_ref.dtype)

    # surrogate denoiser: two MXU dots (bf16 in, f32 acc) + hoisted bias
    h = jnp.dot(x_t.astype(jnp.bfloat16), wx_ref[...],
                preferred_element_type=jnp.float32)                 # (tT, H)
    h = h + jnp.dot(cond_ref[...].astype(jnp.bfloat16), wc_ref[...],
                    preferred_element_type=jnp.float32)             # (tT, H)
    h = h + bias_ref[...]                                           # (1, H) bcast
    eps = jnp.dot(jnp.tanh(h).astype(jnp.bfloat16), wout_ref[...],
                  preferred_element_type=jnp.float32)               # (tT, M)
    eps_ref[...] = eps.astype(eps_ref.dtype)

    # Masked L1 partial sums. The mask is rebuilt in-kernel from the per-batch
    # valid length; it simultaneously zeroes padded frames and the ragged tail
    # of the last T tile (where the block overhangs the array).  jnp.where (not
    # multiply) so garbage/NaN in out-of-bounds rows cannot leak into the sum.
    row = lax.broadcasted_iota(jnp.int32, (t_tile, mel.shape[1]), 0) + tt * t_tile
    keep = row < len_ref[b]
    l1 = jnp.where(keep, jnp.abs(noise - eps), 0.0)
    loss_ref[...] = jnp.sum(l1, axis=0, keepdims=True)              # (1, M)


# -----------------------------------------------------------------------------
# Wrapper
# -----------------------------------------------------------------------------
def diffusion_forward(mel, cond, style, lang_vector, mel_mask, params, t, noise,
                      *, t_tile=256):
    """Training-branch forward of GaussianDiffusionShallowStyle_LanguageStyle.

    mel:         (B, T, M) f32 (bf16 also accepted)
    cond:        (B, T, C) f32 (bf16 also accepted)
    style:       (B, S)    f32
    lang_vector: (B, L)    f32
    mel_mask:    (B, T)    bool, True = padded frame (pad-suffix mask)
    t:           (B,)      int32 timesteps in [0, K_step)
    noise:       (B, T, M) f32
    Returns (output, epsilon, loss, t) like the PyTorch forward.
    """
    B, T, M = mel.shape
    C = cond.shape[-1]
    H = params["wx"].shape[-1]
    assert H % 2 == 0, "time embedding requires even H"

    n_t = pl.cdiv(T, t_tile)

    # --- per-batch coefficient gathers ("extract") + valid lengths ----------
    sqrt_ac = params["sqrt_alphas_cumprod"][t].astype(jnp.float32)             # (B,)
    sqrt_om = params["sqrt_one_minus_alphas_cumprod"][t].astype(jnp.float32)   # (B,)
    lengths = jnp.sum(jnp.logical_not(mel_mask).astype(jnp.int32), axis=-1)    # (B,)

    # --- sinusoidal time embedding + hoisted style/lang/temb bias -----------
    half = H // 2
    freqs = jnp.exp(-jnp.log(10000.0) * jnp.arange(half, dtype=jnp.float32) / half)
    ang = t.astype(jnp.float32)[:, None] * freqs[None, :]
    temb = jnp.concatenate([jnp.sin(ang), jnp.cos(ang)], axis=-1)              # (B, H)
    bias = (style @ params["ws"] + lang_vector @ params["wl"] + temb)          # (B, H)
    bias = bias.astype(jnp.float32)[:, None, :]                                # (B, 1, H)

    # --- norm/denorm coefficient rows (tiny) ---------------------------------
    smin = params["spec_min"][0].astype(jnp.float32)                           # (M,)
    smax = params["spec_max"][0].astype(jnp.float32)                           # (M,)
    rng = smax - smin
    zero = jnp.zeros_like(rng)
    coeff = jnp.stack(
        [2.0 / rng, -(2.0 * smin / rng + 1.0), 0.5 * rng, 0.5 * rng + smin,
         zero, zero, zero, zero], axis=0)                                      # (8, M)

    # --- bf16 denoiser weights (tiny, cast once) -----------------------------
    wx = params["wx"].astype(jnp.bfloat16)                                     # (M, H)
    wc = params["wc"].astype(jnp.bfloat16)                                     # (C, H)
    wout = params["wout"].astype(jnp.bfloat16)                                 # (H, M)

    grid_spec = pltpu.PrefetchScalarGridSpec(
        num_scalar_prefetch=3,
        grid=(B, n_t),
        in_specs=[
            pl.BlockSpec((None, t_tile, M), lambda b, tt, *_: (b, tt, 0)),   # mel
            pl.BlockSpec((None, t_tile, C), lambda b, tt, *_: (b, tt, 0)),   # cond
            pl.BlockSpec((None, t_tile, M), lambda b, tt, *_: (b, tt, 0)),   # noise
            pl.BlockSpec((8, M), lambda b, tt, *_: (0, 0)),                  # coeff
            pl.BlockSpec((None, 1, H), lambda b, tt, *_: (b, 0, 0)),         # bias
            pl.BlockSpec((M, H), lambda b, tt, *_: (0, 0)),                  # wx
            pl.BlockSpec((C, H), lambda b, tt, *_: (0, 0)),                  # wc
            pl.BlockSpec((H, M), lambda b, tt, *_: (0, 0)),                  # wout
        ],
        out_specs=[
            pl.BlockSpec((None, t_tile, M), lambda b, tt, *_: (b, tt, 0)),   # output
            pl.BlockSpec((None, t_tile, M), lambda b, tt, *_: (b, tt, 0)),   # epsilon
            pl.BlockSpec((None, None, 1, M),
                         lambda b, tt, *_: (b, tt, 0, 0)),                   # loss partials
        ],
    )

    out_shapes = (
        jax.ShapeDtypeStruct((B, T, M), jnp.float32),
        jax.ShapeDtypeStruct((B, T, M), jnp.float32),
        jax.ShapeDtypeStruct((B, n_t, 1, M), jnp.float32),
    )

    Tg = n_t * t_tile
    cost = pl.CostEstimate(
        flops=int(2 * B * Tg * (M * H + C * H + H * M)),
        transcendentals=int(B * Tg * H),
        bytes_accessed=int(4 * B * Tg * (4 * M + C)           # mel,noise,out,eps,cond
                           + 2 * (M * H + C * H + H * M)      # bf16 weights
                           + 4 * (8 * M + B * H + B * n_t * M)),
    )

    output, epsilon, loss_parts = pl.pallas_call(
        _diffusion_fwd_kernel,
        out_shape=out_shapes,
        grid_spec=grid_spec,
        compiler_params=pltpu.CompilerParams(
            dimension_semantics=("parallel", "parallel"),
        ),
        cost_estimate=cost,
    )(
        sqrt_ac, sqrt_om, lengths,
        mel, cond, noise, coeff, bias, wx, wc, wout,
    )

    # torch: (noise - eps).abs().squeeze(1).masked_fill(mask, 0).mean()
    #   -> mean over all B*T*M elements (masked elements contribute 0).
    loss = jnp.sum(loss_parts) / float(B * T * M)
    return output, epsilon, loss, t


# -----------------------------------------------------------------------------
# Pure-JAX reference (for correctness checking)
# -----------------------------------------------------------------------------
def _reference_forward(mel, cond, style, lang_vector, mel_mask, params, t, noise):
    smin = params["spec_min"][0]
    smax = params["spec_max"][0]
    rng = smax - smin
    a = params["sqrt_alphas_cumprod"][t][:, None, None]
    s = params["sqrt_one_minus_alphas_cumprod"][t][:, None, None]

    x0 = (mel - smin) / rng * 2.0 - 1.0
    x_t = a * x0 + s * noise
    output = (x_t + 1.0) / 2.0 * rng + smin

    H = params["wx"].shape[-1]
    half = H // 2
    freqs = jnp.exp(-jnp.log(10000.0) * jnp.arange(half, dtype=jnp.float32) / half)
    ang = t.astype(jnp.float32)[:, None] * freqs[None, :]
    temb = jnp.concatenate([jnp.sin(ang), jnp.cos(ang)], axis=-1)
    bias = style @ params["ws"] + lang_vector @ params["wl"] + temb

    h = (jnp.dot(x_t.astype(jnp.bfloat16), params["wx"].astype(jnp.bfloat16),
                 preferred_element_type=jnp.float32)
         + jnp.dot(cond.astype(jnp.bfloat16), params["wc"].astype(jnp.bfloat16),
                   preferred_element_type=jnp.float32)
         + bias[:, None, :])
    eps = jnp.dot(jnp.tanh(h).astype(jnp.bfloat16),
                  params["wout"].astype(jnp.bfloat16),
                  preferred_element_type=jnp.float32)

    keep = jnp.logical_not(mel_mask)[:, :, None].astype(jnp.float32)
    loss = jnp.sum(jnp.abs(noise - eps) * keep) / float(mel.size)
    return output, eps, loss


# -----------------------------------------------------------------------------
# Deterministic parameter / buffer construction
# -----------------------------------------------------------------------------
def make_params(M, C, S, L, H, num_timesteps):
    key = jax.random.PRNGKey(0)
    k = jax.random.split(key, 8)

    # noise-schedule buffers (linear schedule stands in for get_noise_schedule_list)
    betas = np.linspace(1e-4, 0.06, num_timesteps, dtype=np.float64)
    alphas = 1.0 - betas
    alphas_cumprod = np.cumprod(alphas, axis=0)

    params = {
        "sqrt_alphas_cumprod": jnp.asarray(np.sqrt(alphas_cumprod), dtype=jnp.float32),
        "sqrt_one_minus_alphas_cumprod": jnp.asarray(
            np.sqrt(1.0 - alphas_cumprod), dtype=jnp.float32),
        # stats.json stand-in: deterministic per-mel-bin normalization range
        "spec_min": (-6.0 + 0.02 * jnp.arange(M, dtype=jnp.float32))[None, :],  # (1, M)
        "spec_max": (2.0 + 0.01 * jnp.arange(M, dtype=jnp.float32))[None, :],   # (1, M)
        # surrogate denoiser weights
        "wx": 0.1 * jax.random.normal(k[0], (M, H), jnp.float32),
        "wc": 0.1 * jax.random.normal(k[1], (C, H), jnp.float32),
        "ws": 0.1 * jax.random.normal(k[2], (S, H), jnp.float32),
        "wl": 0.1 * jax.random.normal(k[3], (L, H), jnp.float32),
        "wout": 0.1 * jax.random.normal(k[4], (H, M), jnp.float32),
    }
    return params


# -----------------------------------------------------------------------------
# Example run
# -----------------------------------------------------------------------------
if __name__ == "__main__":
    B, T, M = 2, 300, 80         # batch, frames (ragged vs t_tile), mel bins
    C, S, L, H = 64, 16, 8, 128
    NUM_TIMESTEPS = 100
    K_STEP = 100

    key = jax.random.PRNGKey(0)
    km, kc, ks, kl, kn, kt = jax.random.split(key, 6)

    mel = jax.random.uniform(km, (B, T, M), jnp.float32, minval=-5.0, maxval=1.0)
    cond = jax.random.normal(kc, (B, T, C), jnp.float32)
    style = jax.random.normal(ks, (B, S), jnp.float32)
    lang_vector = jax.random.normal(kl, (B, L), jnp.float32)
    noise = jax.random.normal(kn, (B, T, M), jnp.float32)

    # mel_mask: True where padded (pad-suffix mask)
    lengths = jnp.array([T, T - 55], dtype=jnp.int32)
    mel_mask = jnp.arange(T)[None, :] >= lengths[:, None]

    # t ~ randint(0, K_step) per batch element
    t = jax.random.randint(kt, (B,), 0, min(K_STEP, NUM_TIMESTEPS), dtype=jnp.int32)

    params = make_params(M, C, S, L, H, NUM_TIMESTEPS)

    output, epsilon, loss, t_out = diffusion_forward(
        mel, cond, style, lang_vector, mel_mask, params, t, noise)
    jax.block_until_ready((output, epsilon, loss, t_out))

    assert output.shape == (B, T, M)
    assert epsilon.shape == (B, T, M)
    assert loss.shape == ()
    assert bool(jnp.isfinite(loss))

    # correctness check vs. pure-JAX reference
    ref_out, ref_eps, ref_loss = _reference_forward(
        mel, cond, style, lang_vector, mel_mask, params, t, noise)
    np.testing.assert_allclose(np.asarray(output), np.asarray(ref_out),
                               rtol=1e-3, atol=1e-3)
    np.testing.assert_allclose(np.asarray(epsilon), np.asarray(ref_eps),
                               rtol=5e-2, atol=5e-2)
    np.testing.assert_allclose(float(loss), float(ref_loss), rtol=1e-3, atol=1e-3)

    print("KERNEL_OK")
</pallas_src>

<mosaic_0001>
module attributes {stable_mosaic.version = 11 : i64} {
  func.func @_diffusion_fwd_kernel(%arg0: i32, %arg1: i32, %arg2: memref<2xf32, #tpu.memory_space<smem>>, %arg3: memref<2xf32, #tpu.memory_space<smem>>, %arg4: memref<2xi32, #tpu.memory_space<smem>>, %arg5: memref<1x256x80xf32, #tpu.memory_space<vmem>>, %arg6: memref<1x256x64xf32, #tpu.memory_space<vmem>>, %arg7: memref<1x256x80xf32, #tpu.memory_space<vmem>>, %arg8: memref<8x80xf32, #tpu.memory_space<vmem>>, %arg9: memref<1x1x128xf32, #tpu.memory_space<vmem>>, %arg10: memref<80x128xbf16, #tpu.memory_space<vmem>>, %arg11: memref<64x128xbf16, #tpu.memory_space<vmem>>, %arg12: memref<128x80xbf16, #tpu.memory_space<vmem>>, %arg13: memref<1x256x80xf32, #tpu.memory_space<vmem>>, %arg14: memref<1x256x80xf32, #tpu.memory_space<vmem>>, %arg15: memref<1x1x1x80xf32, #tpu.memory_space<vmem>>) attributes {dimension_semantics = [#tpu.dimension_semantics<parallel>, #tpu.dimension_semantics<parallel>], iteration_bounds = array<i64: 2, 2>, scalar_prefetch = 3 : i64, scratch_operands = 0 : i64, tpu.core_type = #tpu.core_type<tc>, window_params = [{transform_indices = @transform_0, window_bounds = array<i64: 1, 256, 80>}, {transform_indices = @transform_1, window_bounds = array<i64: 1, 256, 64>}, {transform_indices = @transform_2, window_bounds = array<i64: 1, 256, 80>}, {pipeline_mode = #tpu.pipeline_mode<synchronous>, transform_indices = @transform_3, window_bounds = array<i64: 8, 80>}, {transform_indices = @transform_4, window_bounds = array<i64: 1, 1, 128>}, {pipeline_mode = #tpu.pipeline_mode<synchronous>, transform_indices = @transform_5, window_bounds = array<i64: 80, 128>}, {pipeline_mode = #tpu.pipeline_mode<synchronous>, transform_indices = @transform_6, window_bounds = array<i64: 64, 128>}, {pipeline_mode = #tpu.pipeline_mode<synchronous>, transform_indices = @transform_7, window_bounds = array<i64: 128, 80>}, {transform_indices = @transform_8, window_bounds = array<i64: 1, 256, 80>}, {transform_indices = @transform_9, window_bounds = array<i64: 1, 256, 80>}, {transform_indices = @transform_10, window_bounds = array<i64: 1, 1, 1, 80>}]} {
    %0 = arith.index_cast %arg0 : i32 to index
    %1 = memref.load %arg2[%0] : memref<2xf32, #tpu.memory_space<smem>>
    %2 = arith.index_cast %arg0 : i32 to index
    %3 = memref.load %arg3[%2] : memref<2xf32, #tpu.memory_space<smem>>
    %c0 = arith.constant 0 : index
    %c0_0 = arith.constant 0 : index
    %4 = vector.load %arg8[%c0, %c0_0] : memref<8x80xf32, #tpu.memory_space<vmem>>, vector<1x80xf32>
    %c1 = arith.constant 1 : index
    %c0_1 = arith.constant 0 : index
    %5 = vector.load %arg8[%c1, %c0_1] : memref<8x80xf32, #tpu.memory_space<vmem>>, vector<1x80xf32>
    %c2 = arith.constant 2 : index
    %c0_2 = arith.constant 0 : index
    %6 = vector.load %arg8[%c2, %c0_2] : memref<8x80xf32, #tpu.memory_space<vmem>>, vector<1x80xf32>
    %c3 = arith.constant 3 : index
    %c0_3 = arith.constant 0 : index
    %7 = vector.load %arg8[%c3, %c0_3] : memref<8x80xf32, #tpu.memory_space<vmem>>, vector<1x80xf32>
    %c0_4 = arith.constant 0 : index
    %c0_5 = arith.constant 0 : index
    %c0_6 = arith.constant 0 : index
    %8 = vector.load %arg5[%c0_4, %c0_5, %c0_6] : memref<1x256x80xf32, #tpu.memory_space<vmem>>, vector<1x256x80xf32>
    %9 = vector.shape_cast %8 : vector<1x256x80xf32> to vector<256x80xf32>
    %c0_7 = arith.constant 0 : index
    %c0_8 = arith.constant 0 : index
    %c0_9 = arith.constant 0 : index
    %10 = vector.load %arg7[%c0_7, %c0_8, %c0_9] : memref<1x256x80xf32, #tpu.memory_space<vmem>>, vector<1x256x80xf32>
    %11 = vector.shape_cast %10 : vector<1x256x80xf32> to vector<256x80xf32>
    %12 = vector.broadcast %4 : vector<1x80xf32> to vector<256x80xf32>
    %13 = arith.mulf %9, %12 : vector<256x80xf32>
    %14 = vector.broadcast %5 : vector<1x80xf32> to vector<256x80xf32>
    %15 = arith.addf %13, %14 : vector<256x80xf32>
    %16 = vector.broadcast %1 : f32 to vector<256x80xf32>
    %17 = arith.mulf %16, %15 : vector<256x80xf32>
    %18 = vector.broadcast %3 : f32 to vector<256x80xf32>
    %19 = arith.mulf %18, %11 : vector<256x80xf32>
    %20 = arith.addf %17, %19 : vector<256x80xf32>
    %21 = vector.broadcast %6 : vector<1x80xf32> to vector<256x80xf32>
    %22 = arith.mulf %20, %21 : vector<256x80xf32>
    %23 = vector.broadcast %7 : vector<1x80xf32> to vector<256x80xf32>
    %24 = arith.addf %22, %23 : vector<256x80xf32>
    %c0_10 = arith.constant 0 : index
    %c0_11 = arith.constant 0 : index
    %c0_12 = arith.constant 0 : index
    %25 = vector.load %arg13[%c0_10, %c0_11, %c0_12] : memref<1x256x80xf32, #tpu.memory_space<vmem>>, vector<1x256x80xf32>
    %26 = vector.shape_cast %25 : vector<1x256x80xf32> to vector<256x80xf32>
    %27 = vector.shape_cast %24 : vector<256x80xf32> to vector<1x256x80xf32>
    tpu.vector_store %arg13[%c0_10, %c0_11, %c0_12], %27 {strides = array<i32>} : memref<1x256x80xf32, #tpu.memory_space<vmem>>, vector<1x256x80xf32>,
    %28 = arith.truncf %20 : vector<256x80xf32> to vector<256x80xbf16>
    %c0_13 = arith.constant 0 : index
    %c0_14 = arith.constant 0 : index
    %29 = vector.load %arg10[%c0_13, %c0_14] : memref<80x128xbf16, #tpu.memory_space<vmem>>, vector<80x128xbf16>
    %cst = arith.constant dense<0.000000e+00> : vector<256x128xf32>
    %30 = tpu.matmul %28, %29, %cst {dimension_numbers = #tpu.dot_dimension_numbers<[1], [0], [0], [1], [0, 0, 1, 1], [], []>} : vector<256x80xbf16>, vector<80x128xbf16>, vector<256x128xf32> -> vector<256x128xf32>
    %c0_15 = arith.constant 0 : index
    %c0_16 = arith.constant 0 : index
    %c0_17 = arith.constant 0 : index
    %31 = vector.load %arg6[%c0_15, %c0_16, %c0_17] : memref<1x256x64xf32, #tpu.memory_space<vmem>>, vector<1x256x64xf32>
    %32 = vector.shape_cast %31 : vector<1x256x64xf32> to vector<256x64xf32>
    %33 = arith.truncf %32 : vector<256x64xf32> to vector<256x64xbf16>
    %c0_18 = arith.constant 0 : index
    %c0_19 = arith.constant 0 : index
    %34 = vector.load %arg11[%c0_18, %c0_19] : memref<64x128xbf16, #tpu.memory_space<vmem>>, vector<64x128xbf16>
    %cst_20 = arith.constant dense<0.000000e+00> : vector<256x128xf32>
    %35 = tpu.matmul %33, %34, %cst_20 {dimension_numbers = #tpu.dot_dimension_numbers<[1], [0], [0], [1], [0, 0, 1, 1], [], []>} : vector<256x64xbf16>, vector<64x128xbf16>, vector<256x128xf32> -> vector<256x128xf32>
    %36 = arith.addf %30, %35 : vector<256x128xf32>
    %c0_21 = arith.constant 0 : index
    %c0_22 = arith.constant 0 : index
    %c0_23 = arith.constant 0 : index
    %37 = vector.load %arg9[%c0_21, %c0_22, %c0_23] : memref<1x1x128xf32, #tpu.memory_space<vmem>>, vector<1x1x128xf32>
    %38 = vector.shape_cast %37 : vector<1x1x128xf32> to vector<1x128xf32>
    %39 = vector.broadcast %38 : vector<1x128xf32> to vector<256x128xf32>
    %40 = arith.addf %36, %39 : vector<256x128xf32>
    %41 = math.tanh %40 : vector<256x128xf32>
    %42 = arith.truncf %41 : vector<256x128xf32> to vector<256x128xbf16>
    %c0_24 = arith.constant 0 : index
    %c0_25 = arith.constant 0 : index
    %43 = vector.load %arg12[%c0_24, %c0_25] : memref<128x80xbf16, #tpu.memory_space<vmem>>, vector<128x80xbf16>
    %cst_26 = arith.constant dense<0.000000e+00> : vector<256x80xf32>
    %44 = tpu.matmul %42, %43, %cst_26 {dimension_numbers = #tpu.dot_dimension_numbers<[1], [0], [0], [1], [0, 0, 1, 1], [], []>} : vector<256x128xbf16>, vector<128x80xbf16>, vector<256x80xf32> -> vector<256x80xf32>
    %c0_27 = arith.constant 0 : index
    %c0_28 = arith.constant 0 : index
    %c0_29 = arith.constant 0 : index
    %45 = vector.load %arg14[%c0_27, %c0_28, %c0_29] : memref<1x256x80xf32, #tpu.memory_space<vmem>>, vector<1x256x80xf32>
    %46 = vector.shape_cast %45 : vector<1x256x80xf32> to vector<256x80xf32>
    %47 = vector.shape_cast %44 : vector<256x80xf32> to vector<1x256x80xf32>
    tpu.vector_store %arg14[%c0_27, %c0_28, %c0_29], %47 {strides = array<i32>} : memref<1x256x80xf32, #tpu.memory_space<vmem>>, vector<1x256x80xf32>,
    %48 = tpu.iota {dimensions = array<i32: 0>} : vector<256x80xi32>
    %c256_i32 = arith.constant 256 : i32
    %49 = arith.muli %arg1, %c256_i32 : i32
    %50 = vector.broadcast %49 : i32 to vector<256x80xi32>
    %51 = arith.addi %48, %50 : vector<256x80xi32>
    %52 = arith.index_cast %arg0 : i32 to index
    %53 = memref.load %arg4[%52] : memref<2xi32, #tpu.memory_space<smem>>
    %54 = vector.broadcast %53 : i32 to vector<256x80xi32>
    %55 = arith.cmpi slt, %51, %54 : vector<256x80xi32>
    %56 = arith.subf %11, %44 : vector<256x80xf32>
    %57 = math.absf %56 : vector<256x80xf32>
    %cst_30 = arith.constant 0.000000e+00 : f32
    %58 = vector.broadcast %cst_30 : f32 to vector<256x80xf32>
    %59 = arith.select %55, %57, %58 : vector<256x80xi1>, vector<256x80xf32>
    %cst_31 = arith.constant dense<0.000000e+00> : vector<80xf32>
    %60 = vector.multi_reduction <add>, %59, %cst_31 [0] : vector<256x80xf32> to vector<80xf32>
    %61 = vector.shape_cast %60 : vector<80xf32> to vector<1x80xf32>
    %c0_32 = arith.constant 0 : index
    %c0_33 = arith.constant 0 : index
    %c0_34 = arith.constant 0 : index
    %c0_35 = arith.constant 0 : index
    %62 = vector.load %arg15[%c0_32, %c0_33, %c0_34, %c0_35] : memref<1x1x1x80xf32, #tpu.memory_space<vmem>>, vector<1x1x1x80xf32>
    %63 = vector.shape_cast %62 : vector<1x1x1x80xf32> to vector<1x80xf32>
    %64 = vector.shape_cast %61 : vector<1x80xf32> to vector<1x1x1x80xf32>
    tpu.vector_store %arg15[%c0_32, %c0_33, %c0_34, %c0_35], %64 {strides = array<i32>} : memref<1x1x1x80xf32, #tpu.memory_space<vmem>>, vector<1x1x1x80xf32>,
    return
  }
  func.func @transform_0(%arg0: i32, %arg1: i32, %arg2: memref<2xf32, #tpu.memory_space<smem>>, %arg3: memref<2xf32, #tpu.memory_space<smem>>, %arg4: memref<2xi32, #tpu.memory_space<smem>>) -> (i32, i32, i32) {
    %c0_i32 = arith.constant 0 : i32
    %c0_i32_0 = arith.constant 0 : i32
    return %arg0, %arg1, %c0_i32 : i32, i32, i32
  }
  func.func @transform_1(%arg0: i32, %arg1: i32, %arg2: memref<2xf32, #tpu.memory_space<smem>>, %arg3: memref<2xf32, #tpu.memory_space<smem>>, %arg4: memref<2xi32, #tpu.memory_space<smem>>) -> (i32, i32, i32) {
    %c0_i32 = arith.constant 0 : i32
    %c0_i32_0 = arith.constant 0 : i32
    return %arg0, %arg1, %c0_i32 : i32, i32, i32
  }
  func.func @transform_2(%arg0: i32, %arg1: i32, %arg2: memref<2xf32, #tpu.memory_space<smem>>, %arg3: memref<2xf32, #tpu.memory_space<smem>>, %arg4: memref<2xi32, #tpu.memory_space<smem>>) -> (i32, i32, i32) {
    %c0_i32 = arith.constant 0 : i32
    %c0_i32_0 = arith.constant 0 : i32
    return %arg0, %arg1, %c0_i32 : i32, i32, i32
  }
  func.func @transform_3(%arg0: i32, %arg1: i32, %arg2: memref<2xf32, #tpu.memory_space<smem>>, %arg3: memref<2xf32, #tpu.memory_space<smem>>, %arg4: memref<2xi32, #tpu.memory_space<smem>>) -> (i32, i32) {
    %c0_i32 = arith.constant 0 : i32
    %c0_i32_0 = arith.constant 0 : i32
    %c0_i32_1 = arith.constant 0 : i32
    return %c0_i32, %c0_i32_0 : i32, i32
  }
  func.func @transform_4(%arg0: i32, %arg1: i32, %arg2: memref<2xf32, #tpu.memory_space<smem>>, %arg3: memref<2xf32, #tpu.memory_space<smem>>, %arg4: memref<2xi32, #tpu.memory_space<smem>>) -> (i32, i32, i32) {
    %c0_i32 = arith.constant 0 : i32
    %c0_i32_0 = arith.constant 0 : i32
    %c0_i32_1 = arith.constant 0 : i32
    return %arg0, %c0_i32, %c0_i32_0 : i32, i32, i32
  }
  func.func @transform_5(%arg0: i32, %arg1: i32, %arg2: memref<2xf32, #tpu.memory_space<smem>>, %arg3: memref<2xf32, #tpu.memory_space<smem>>, %arg4: memref<2xi32, #tpu.memory_space<smem>>) -> (i32, i32) {
    %c0_i32 = arith.constant 0 : i32
    %c0_i32_0 = arith.constant 0 : i32
    %c0_i32_1 = arith.constant 0 : i32
    return %c0_i32, %c0_i32_0 : i32, i32
  }
  func.func @transform_6(%arg0: i32, %arg1: i32, %arg2: memref<2xf32, #tpu.memory_space<smem>>, %arg3: memref<2xf32, #tpu.memory_space<smem>>, %arg4: memref<2xi32, #tpu.memory_space<smem>>) -> (i32, i32) {
    %c0_i32 = arith.constant 0 : i32
    %c0_i32_0 = arith.constant 0 : i32
    %c0_i32_1 = arith.constant 0 : i32
    return %c0_i32, %c0_i32_0 : i32, i32
  }
  func.func @transform_7(%arg0: i32, %arg1: i32, %arg2: memref<2xf32, #tpu.memory_space<smem>>, %arg3: memref<2xf32, #tpu.memory_space<smem>>, %arg4: memref<2xi32, #tpu.memory_space<smem>>) -> (i32, i32) {
    %c0_i32 = arith.constant 0 : i32
    %c0_i32_0 = arith.constant 0 : i32
    %c0_i32_1 = arith.constant 0 : i32
    return %c0_i32, %c0_i32_0 : i32, i32
  }
  func.func @transform_8(%arg0: i32, %arg1: i32, %arg2: memref<2xf32, #tpu.memory_space<smem>>, %arg3: memref<2xf32, #tpu.memory_space<smem>>, %arg4: memref<2xi32, #tpu.memory_space<smem>>) -> (i32, i32, i32) {
    %c0_i32 = arith.constant 0 : i32
    %c0_i32_0 = arith.constant 0 : i32
    return %arg0, %arg1, %c0_i32 : i32, i32, i32
  }
  func.func @transform_9(%arg0: i32, %arg1: i32, %arg2: memref<2xf32, #tpu.memory_space<smem>>, %arg3: memref<2xf32, #tpu.memory_space<smem>>, %arg4: memref<2xi32, #tpu.memory_space<smem>>) -> (i32, i32, i32) {
    %c0_i32 = arith.constant 0 : i32
    %c0_i32_0 = arith.constant 0 : i32
    return %arg0, %arg1, %c0_i32 : i32, i32, i32
  }
  func.func @transform_10(%arg0: i32, %arg1: i32, %arg2: memref<2xf32, #tpu.memory_space<smem>>, %arg3: memref<2xf32, #tpu.memory_space<smem>>, %arg4: memref<2xi32, #tpu.memory_space<smem>>) -> (i32, i32, i32, i32) {
    %c0_i32 = arith.constant 0 : i32
    %c0_i32_0 = arith.constant 0 : i32
    %c0_i32_1 = arith.constant 0 : i32
    return %arg0, %arg1, %c0_i32, %c0_i32_0 : i32, i32, i32, i32
  }
}

</mosaic_0001>

<llo_original>
// kernel: tpu_custom_call.1
$region0: #{tpu_custom_call.1}
  #allocation0 [shape = 'u32[]', space=smem, size = 0x4, offset = 0x4, fixed_abs, tag = 'smem constant byte address 0x4 - core index']
  #allocation1 [shape = 'u32[144,128]{1,0:T(1,128)}', space=vmem, size = 0x12000, scoped, tag = 'internal scratch']
  #allocation2 [shape = 's32[1]{0}', space=sflag, size = 0x4, scoped, tag = 'scoped memory for tpu_custom_call.1']
  #allocation3 [shape = 'u8[512]{0}', space=smem, size = 0x200, scoped, tag = 'prefetched SMEM operand 0']
  #allocation4 [shape = 'u8[512]{0}', space=smem, size = 0x200, scoped, tag = 'prefetched SMEM operand 1']
  #allocation5 [shape = 'u8[512]{0}', space=smem, size = 0x200, scoped, tag = 'prefetched SMEM operand 2']
  %s0 = inlined_call_operand.vmem [shape: f32[2], index: 0, kind: input, shape index: {}]
  %s1 = inlined_call_operand.vmem [shape: f32[2], index: 1, kind: input, shape index: {}]
  %s2 = inlined_call_operand.vmem [shape: s32[2], index: 2, kind: input, shape index: {}]
  %s3 = inlined_call_operand.vmem [shape: f32[2,300,80], index: 3, kind: input, shape index: {}]
  %s4 = inlined_call_operand.vmem [shape: f32[2,300,64], index: 4, kind: input, shape index: {}]
  %s5 = inlined_call_operand.vmem [shape: f32[2,300,80], index: 5, kind: input, shape index: {}]
  %s6 = inlined_call_operand.vmem [shape: f32[8,80], index: 6, kind: input, shape index: {}]
  %s7 = inlined_call_operand.vmem [shape: f32[2,1,128], index: 7, kind: input, shape index: {}]
  %s8 = inlined_call_operand.vmem [shape: bf16[80,128], index: 8, kind: input, shape index: {}]
  %s9 = inlined_call_operand.vmem [shape: bf16[64,128], index: 9, kind: input, shape index: {}]
  %s10 = inlined_call_operand.vmem [shape: bf16[128,80], index: 10, kind: input, shape index: {}]
  %s11 = inlined_call_operand.vmem [shape: f32[2,300,80], index: 11, kind: output, shape index: {0}]
  %s12 = inlined_call_operand.vmem [shape: f32[2,300,80], index: 12, kind: output, shape index: {1}]
  %s13 = inlined_call_operand.hbm [shape: f32[2,2,1,80], index: 13, kind: output, shape index: {2}]
  %14 = xla_tuple %s11, %s12, %s13
  %s15 = sld [smem:[#allocation0]]
  $region177: #{tpu_custom_call.1} parent=0
    _
  %s17 = ssub.s32 1, %s15
  %s18 = scalar_select 0, %s17, %s15
  %s19 = sshll.u32 %s0, 4
  %s20 = int_to_ptr.vmem [resolvable:$true] %s19
  %22 = dma.vmem_to_smem %s20, 16, [#allocation3], [#allocation2]
  %s23 = sshll.u32 %s1, 4
  %s24 = int_to_ptr.vmem [resolvable:$true] %s23
  %26 = dma.vmem_to_smem %s24, 16, [#allocation4], [#allocation2]
  %s27 = sshll.u32 %s2, 4
  %s28 = int_to_ptr.vmem [resolvable:$true] %s27
  %30 = dma.vmem_to_smem %s28, 16, [#allocation5], [#allocation2]
  %31 = dma.done [#allocation2], 48
  %32 = sfence
  $region1: #{tpu_custom_call.1} parent=0
    #allocation6 [shape = 'u8[262144]{0}', space=vmem, size = 0x40000, scoped, tag = 'output window, operand 0']
    #allocation7 [shape = 'u8[262144]{0}', space=vmem, size = 0x40000, scoped, tag = 'output window, operand 1']
    #allocation8 [shape = 'u8[1024]{0}', space=vmem, size = 0x400, scoped, tag = 'output window, operand 2']
    #allocation9 [shape = 's32[2]{0}', space=sflag, size = 0x8, scoped, tag = 'scoped memory for tpu_custom_call.1']
    %33 = vsyncpa [#allocation9], 0
    %s34 = scalar_lea.sflag [#allocation9], 1
    %35 = vsyncpa %s34, 0
    loop: start=0, step=1, limit=6
    $region2: #{tpu_custom_call.1} parent=1 // loop_pre_header
      _
    $region3: #{tpu_custom_call.1} parent=1 // loop_header
      %s37 = sphi 0, %s41
      %p38 = scmp.ge.s32.totalorder %s37, 6
      %s44 = sphi 0, %s56
      %s45 = sphi 0, %s52
      %s46 = sphi 0, %s44
      %s47 = sphi 0, %s45
      %s48 = sphi 0, %s46
      %s49 = sphi 0, %s47
      %s61 = sphi 0, %s63
      %s64 = sphi 0, %s61
      %s65 = sphi 0, %s64
      %s81 = sphi 0, %s65
      %s89 = sphi 0, %s91
      %s92 = sphi 0, %s89
      %s93 = sphi 0, %s92
      %s109 = sphi 0, %s93
      %s117 = sphi 0, %s119
      %s120 = sphi 0, %s117
      %s121 = sphi 0, %s120
      %s137 = sphi 0, %s121
      %s141 = sphi 0, %s141
      %s143 = sphi 0, %s141
      %s144 = sphi 0, %s143
      %s158 = sphi 0, %s144
      %s164 = sphi 0, %s166
      %s167 = sphi 0, %s164
      %s168 = sphi 0, %s167
      %s184 = sphi 0, %s168
      %s188 = sphi 0, %s188
      %s190 = sphi 0, %s188
      %s191 = sphi 0, %s190
      %s205 = sphi 0, %s191
      %s209 = sphi 0, %s209
      %s211 = sphi 0, %s209
      %s212 = sphi 0, %s211
      %s226 = sphi 0, %s212
      %s230 = sphi 0, %s230
      %s232 = sphi 0, %s230
      %s233 = sphi 0, %s232
      %s247 = sphi 0, %s233
      %s255 = sphi 0, %s257
      %s258 = sphi 0, %s255
      %s259 = sphi 0, %s258
      %s275 = sphi 0, %s259
      %s283 = sphi 0, %s285
      %s286 = sphi 0, %s283
      %s287 = sphi 0, %s286
      %s303 = sphi 0, %s287
      %s311 = sphi 0, %s313
      %s314 = sphi 0, %s311
      %s315 = sphi 0, %s314
      %s331 = sphi 0, %s315
    $region4: #{tpu_custom_call.1} parent=1 // loop_header_branch
      %40 = sbr.rel (%p38) target = $region8
    $region5: #{tpu_custom_call.1} parent=1 // loop_body
      %s42 = ssub.s32 %s37, 1
      %s43 = ssub.s32 %s37, 2
      %s50 = sadd.s32 1, %s45
      %p51 = scmp.ge.s32.totalorder %s50, 2
      %s52 = scalar_select %p51, 0, %s50
      %s53 = sadd.s32 1, %s44
      %s54 = scalar_select %p51, %s53, %s44
      %p55 = scmp.ge.s32.totalorder %s54, 2
      %s56 = scalar_select %p55, 0, %s54
      %s57 = ssub.s32 %s44, %s56
      %s58 = ssub.s32 %s45, %s52
      %s59 = sor.u32 %s57, %s58
      %p60 = scmp.eq.s32.totalorder %s59, 0
      %s62 = sadd.s32 %s61, 1
      %s63 = scalar_select %p60, %s61, %s62
      %p66 = pneg %p60
      %p67 = scmp.eq.s32.totalorder %s37, 3
      %p68 = por %p66, %p67
      %p69 = scmp.ne.s32.totalorder %s61, %s64
      %p70 = scmp.eq.s32.totalorder %s37, 0
      %p71 = por %p69, %p70
      %p72 = scmp.ne.s32.totalorder %s61, %s64
      %p73 = scmp.eq.s32.totalorder %s42, 3
      %p74 = por %p72, %p73
      %p75 = scmp.ne.s32.totalorder %s64, %s65
      %p76 = scmp.eq.s32.totalorder %s42, 0
      %p77 = por %p75, %p76
      %p78 = scmp.ne.s32.totalorder %s64, %s65
      %p79 = scmp.eq.s32.totalorder %s43, 3
      %p80 = por %p78, %p79
      %p82 = scmp.ne.s32.totalorder %s65, %s81
      %p83 = scmp.eq.s32.totalorder %s43, 0
      %p84 = por %p82, %p83
      %s85 = ssub.s32 %s44, %s56
      %s86 = ssub.s32 %s45, %s52
      %s87 = sor.u32 %s85, %s86
      %p88 = scmp.eq.s32.totalorder %s87, 0
      %s90 = sadd.s32 %s89, 1
      %s91 = scalar_select %p88, %s89, %s90
      %p94 = pneg %p88
      %p95 = scmp.eq.s32.totalorder %s37, 3
      %p96 = por %p94, %p95
      %p97 = scmp.ne.s32.totalorder %s89, %s92
      %p98 = scmp.eq.s32.totalorder %s37, 0
      %p99 = por %p97, %p98
      %p100 = scmp.ne.s32.totalorder %s89, %s92
      %p101 = scmp.eq.s32.totalorder %s42, 3
      %p102 = por %p100, %p101
      %p103 = scmp.ne.s32.totalorder %s92, %s93
      %p104 = scmp.eq.s32.totalorder %s42, 0
      %p105 = por %p103, %p104
      %p106 = scmp.ne.s32.totalorder %s92, %s93
      %p107 = scmp.eq.s32.totalorder %s43, 3
      %p108 = por %p106, %p107
      %p110 = scmp.ne.s32.totalorder %s93, %s109
      %p111 = scmp.eq.s32.totalorder %s43, 0
      %p112 = por %p110, %p111
      %s113 = ssub.s32 %s44, %s56
      %s114 = ssub.s32 %s45, %s52
      %s115 = sor.u32 %s113, %s114
      %p116 = scmp.eq.s32.totalorder %s115, 0
      %s118 = sadd.s32 %s117, 1
      %s119 = scalar_select %p116, %s117, %s118
      %p122 = pneg %p116
      %p123 = scmp.eq.s32.totalorder %s37, 3
      %p124 = por %p122, %p123
      %p125 = scmp.ne.s32.totalorder %s117, %s120
      %p126 = scmp.eq.s32.totalorder %s37, 0
      %p127 = por %p125, %p126
      %p128 = scmp.ne.s32.totalorder %s117, %s120
      %p129 = scmp.eq.s32.totalorder %s42, 3
      %p130 = por %p128, %p129
      %p131 = scmp.ne.s32.totalorder %s120, %s121
      %p132 = scmp.eq.s32.totalorder %s42, 0
      %p133 = por %p131, %p132
      %p134 = scmp.ne.s32.totalorder %s120, %s121
      %p135 = scmp.eq.s32.totalorder %s43, 3
      %p136 = por %p134, %p135
      %p138 = scmp.ne.s32.totalorder %s121, %s137
      %p139 = scmp.eq.s32.totalorder %s43, 0
      %p140 = por %p138, %p139
      %s142 = sadd.s32 %s141, 1
      %p145 = scmp.eq.s32.totalorder %s37, 3
      %p146 = scmp.ne.s32.totalorder %s141, %s143
      %p147 = scmp.eq.s32.totalorder %s37, 0
      %p148 = por %p146, %p147
      %p149 = scmp.ne.s32.totalorder %s141, %s143
      %p150 = scmp.eq.s32.totalorder %s42, 3
      %p151 = por %p149, %p150
      %p152 = scmp.ne.s32.totalorder %s143, %s144
      %p153 = scmp.eq.s32.totalorder %s42, 0
      %p154 = por %p152, %p153
      %p155 = scmp.ne.s32.totalorder %s143, %s144
      %p156 = scmp.eq.s32.totalorder %s43, 3
      %p157 = por %p155, %p156
      %p159 = scmp.ne.s32.totalorder %s144, %s158
      %p160 = scmp.eq.s32.totalorder %s43, 0
      %p161 = por %p159, %p160
      %s162 = ssub.s32 %s44, %s56
      %p163 = scmp.eq.s32.totalorder %s162, 0
      %s165 = sadd.s32 %s164, 1
      %s166 = scalar_select %p163, %s164, %s165
      %p169 = pneg %p163
      %p170 = scmp.eq.s32.totalorder %s37, 3
      %p171 = por %p169, %p170
      %p172 = scmp.ne.s32.totalorder %s164, %s167
      %p173 = scmp.eq.s32.totalorder %s37, 0
      %p174 = por %p172, %p173
      %p175 = scmp.ne.s32.totalorder %s164, %s167
      %p176 = scmp.eq.s32.totalorder %s42, 3
      %p177 = por %p175, %p176
      %p178 = scmp.ne.s32.totalorder %s167, %s168
      %p179 = scmp.eq.s32.totalorder %s42, 0
      %p180 = por %p178, %p179
      %p181 = scmp.ne.s32.totalorder %s167, %s168
      %p182 = scmp.eq.s32.totalorder %s43, 3
      %p183 = por %p181, %p182
      %p185 = scmp.ne.s32.totalorder %s168, %s184
      %p186 = scmp.eq.s32.totalorder %s43, 0
      %p187 = por %p185, %p186
      %s189 = sadd.s32 %s188, 1
      %p192 = scmp.eq.s32.totalorder %s37, 3
      %p193 = scmp.ne.s32.totalorder %s188, %s190
      %p194 = scmp.eq.s32.totalorder %s37, 0
      %p195 = por %p193, %p194
      %p196 = scmp.ne.s32.totalorder %s188, %s190
      %p197 = scmp.eq.s32.totalorder %s42, 3
      %p198 = por %p196, %p197
      %p199 = scmp.ne.s32.totalorder %s190, %s191
      %p200 = scmp.eq.s32.totalorder %s42, 0
      %p201 = por %p199, %p200
      %p202 = scmp.ne.s32.totalorder %s190, %s191
      %p203 = scmp.eq.s32.totalorder %s43, 3
      %p204 = por %p202, %p203
      %p206 = scmp.ne.s32.totalorder %s191, %s205
      %p207 = scmp.eq.s32.totalorder %s43, 0
      %p208 = por %p206, %p207
      %s210 = sadd.s32 %s209, 1
      %p213 = scmp.eq.s32.totalorder %s37, 3
      %p214 = scmp.ne.s32.totalorder %s209, %s211
      %p215 = scmp.eq.s32.totalorder %s37, 0
      %p216 = por %p214, %p215
      %p217 = scmp.ne.s32.totalorder %s209, %s211
      %p218 = scmp.eq.s32.totalorder %s42, 3
      %p219 = por %p217, %p218
      %p220 = scmp.ne.s32.totalorder %s211, %s212
      %p221 = scmp.eq.s32.totalorder %s42, 0
      %p222 = por %p220, %p221
      %p223 = scmp.ne.s32.totalorder %s211, %s212
      %p224 = scmp.eq.s32.totalorder %s43, 3
      %p225 = por %p223, %p224
      %p227 = scmp.ne.s32.totalorder %s212, %s226
      %p228 = scmp.eq.s32.totalorder %s43, 0
      %p229 = por %p227, %p228
      %s231 = sadd.s32 %s230, 1
      %p234 = scmp.eq.s32.totalorder %s37, 3
      %p235 = scmp.ne.s32.totalorder %s230, %s232
      %p236 = scmp.eq.s32.totalorder %s37, 0
      %p237 = por %p235, %p236
      %p238 = scmp.ne.s32.totalorder %s230, %s232
      %p239 = scmp.eq.s32.totalorder %s42, 3
      %p240 = por %p238, %p239
      %p241 = scmp.ne.s32.totalorder %s232, %s233
      %p242 = scmp.eq.s32.totalorder %s42, 0
      %p243 = por %p241, %p242
      %p244 = scmp.ne.s32.totalorder %s232, %s233
      %p245 = scmp.eq.s32.totalorder %s43, 3
      %p246 = por %p244, %p245
      %p248 = scmp.ne.s32.totalorder %s233, %s247
      %p249 = scmp.eq.s32.totalorder %s43, 0
      %p250 = por %p248, %p249
      %s251 = ssub.s32 %s44, %s56
      %s252 = ssub.s32 %s45, %s52
      %s253 = sor.u32 %s251, %s252
      %p254 = scmp.eq.s32.totalorder %s253, 0
      %s256 = sadd.s32 %s255, 1
      %s257 = scalar_select %p254, %s255, %s256
      %p260 = pneg %p254
      %p261 = scmp.eq.s32.totalorder %s37, 3
      %p262 = por %p260, %p261
      %p263 = scmp.ne.s32.totalorder %s255, %s258
      %p264 = scmp.eq.s32.totalorder %s37, 0
      %p265 = por %p263, %p264
      %p266 = scmp.ne.s32.totalorder %s255, %s258
      %p267 = scmp.eq.s32.totalorder %s42, 3
      %p268 = por %p266, %p267
      %p269 = scmp.ne.s32.totalorder %s258, %s259
      %p270 = scmp.eq.s32.totalorder %s42, 0
      %p271 = por %p269, %p270
      %p272 = scmp.ne.s32.totalorder %s258, %s259
      %p273 = scmp.eq.s32.totalorder %s43, 3
      %p274 = por %p272, %p273
      %p276 = scmp.ne.s32.totalorder %s259, %s275
      %p277 = scmp.eq.s32.totalorder %s43, 0
      %p278 = por %p276, %p277
      %s279 = ssub.s32 %s44, %s56
      %s280 = ssub.s32 %s45, %s52
      %s281 = sor.u32 %s279, %s280
      %p282 = scmp.eq.s32.totalorder %s281, 0
      %s284 = sadd.s32 %s283, 1
      %s285 = scalar_select %p282, %s283, %s284
      %p288 = pneg %p282
      %p289 = scmp.eq.s32.totalorder %s37, 3
      %p290 = por %p288, %p289
      %p291 = scmp.ne.s32.totalorder %s283, %s286
      %p292 = scmp.eq.s32.totalorder %s37, 0
      %p293 = por %p291, %p292
      %p294 = scmp.ne.s32.totalorder %s283, %s286
      %p295 = scmp.eq.s32.totalorder %s42, 3
      %p296 = por %p294, %p295
      %p297 = scmp.ne.s32.totalorder %s286, %s287
      %p298 = scmp.eq.s32.totalorder %s42, 0
      %p299 = por %p297, %p298
      %p300 = scmp.ne.s32.totalorder %s286, %s287
      %p301 = scmp.eq.s32.totalorder %s43, 3
      %p302 = por %p300, %p301
      %p304 = scmp.ne.s32.totalorder %s287, %s303
      %p305 = scmp.eq.s32.totalorder %s43, 0
      %p306 = por %p304, %p305
      %s307 = ssub.s32 %s44, %s56
      %s308 = ssub.s32 %s45, %s52
      %s309 = sor.u32 %s307, %s308
      %p310 = scmp.eq.s32.totalorder %s309, 0
      %s312 = sadd.s32 %s311, 1
      %s313 = scalar_select %p310, %s311, %s312
      %p316 = pneg %p310
      %p317 = scmp.eq.s32.totalorder %s37, 3
      %p318 = por %p316, %p317
      %p319 = scmp.ne.s32.totalorder %s311, %s314
      %p320 = scmp.eq.s32.totalorder %s37, 0
      %p321 = por %p319, %p320
      %p322 = scmp.ne.s32.totalorder %s311, %s314
      %p323 = scmp.eq.s32.totalorder %s42, 3
      %p324 = por %p322, %p323
      %p325 = scmp.ne.s32.totalorder %s314, %s315
      %p326 = scmp.eq.s32.totalorder %s42, 0
      %p327 = por %p325, %p326
      %p328 = scmp.ne.s32.totalorder %s314, %s315
      %p329 = scmp.eq.s32.totalorder %s43, 3
      %p330 = por %p328, %p329
      %p332 = scmp.ne.s32.totalorder %s315, %s331
      %p333 = scmp.eq.s32.totalorder %s43, 0
      %p334 = por %p332, %p333
      %p335 = scmp.le.s32.totalorder 1, %s37
      %p336 = scmp.lt.s32.totalorder %s37, 5
      %p337 = pnand %p335, %p336
      %p338 = pneg %p337
      // Predicated region
      $region9: #{tpu_custom_call.1} parent=5 // pred_check
        _
      $region10: #{tpu_custom_call.1} parent=5 // pred_check_branch
        %340 = sbr.rel (%p337) target = $region12
      $region11: #{tpu_custom_call.1} parent=5 // pred_region
        %s341 = ssub.s32 %s37, 1
        // Predicated region
        $region13: #{tpu_custom_call.1} parent=11 // pred_check
          %p342 = pneg %p154
        $region14: #{tpu_custom_call.1} parent=11 // pred_check_branch
          %344 = sbr.rel (%p342) target = $region16
        $region15: #{tpu_custom_call.1} parent=11 // pred_region
          _
        $region16: #{tpu_custom_call.1} parent=11 // pred_fallthru
          _
        // Predicated region
        $region17: #{tpu_custom_call.1} parent=11 // pred_check
          %p345 = pneg %p201
        $region18: #{tpu_custom_call.1} parent=11 // pred_check_branch
          %347 = sbr.rel (%p345) target = $region20
        $region19: #{tpu_custom_call.1} parent=11 // pred_region
          _
        $region20: #{tpu_custom_call.1} parent=11 // pred_fallthru
          _
        // Predicated region
        $region21: #{tpu_custom_call.1} parent=11 // pred_check
          %p348 = pneg %p222
        $region22: #{tpu_custom_call.1} parent=11 // pred_check_branch
          %350 = sbr.rel (%p348) target = $region24
        $region23: #{tpu_custom_call.1} parent=11 // pred_region
          _
        $region24: #{tpu_custom_call.1} parent=11 // pred_fallthru
          _
        // Predicated region
        $region25: #{tpu_custom_call.1} parent=11 // pred_check
          %p351 = pneg %p243
        $region26: #{tpu_custom_call.1} parent=11 // pred_check_branch
          %353 = sbr.rel (%p351) target = $region28
        $region27: #{tpu_custom_call.1} parent=11 // pred_region
          _
        $region28: #{tpu_custom_call.1} parent=11 // pred_fallthru
          _
      $region12: #{tpu_custom_call.1} parent=5 // pred_fallthru
        _
      %p354 = scmp.lt.s32.totalorder %s37, 4
      // Predicated region
      $region29: #{tpu_custom_call.1} parent=5 // pred_check
        %p355 = pneg %p354
      $region30: #{tpu_custom_call.1} parent=5 // pred_check_branch
        %357 = sbr.rel (%p355) target = $region32
      $region31: #{tpu_custom_call.1} parent=5 // pred_region
        // Predicated region
        $region33: #{tpu_custom_call.1} parent=31 // pred_check
          %p358 = pneg %p71
        $region34: #{tpu_custom_call.1} parent=31 // pred_check_branch
          %360 = sbr.rel (%p358) target = $region36
        $region35: #{tpu_custom_call.1} parent=31 // pred_region
          %s361 = smul.u32 32, %s45
          %s362 = ssub.s32 38, %s361
          %p363 = scmp.lt.s32.totalorder %s362, 32
          %s364 = scalar_select %p363, %s362, 32
          %s365 = smul.u32 128, %s364
          %p366 = scmp.lt.s32.totalorder %s44, 1
          %s367 = scalar_select %p366, %s44, 1
          %p368 = scmp.lt.s32.totalorder %s361, 37
          %s369 = scalar_select %p368, %s361, 37
          %s370 = smul.addr %s367, 38
          %s371 = sadd.s32 %s369, %s370
          %s372 = smul.addr %s371, 8
          %s373 = scalar_lea.vmem %s3, %s372
          %s374 = smul.u32 32, %s45
          %s375 = ssub.s32 38, %s374
          %p376 = scmp.lt.s32.totalorder %s375, 32
          %s377 = scalar_select %p376, %s375, 32
          %s378 = smul.u32 128, %s377
        $region36: #{tpu_custom_call.1} parent=31 // pred_fallthru
          _
        // Predicated region
        $region37: #{tpu_custom_call.1} parent=31 // pred_check
          %p379 = pneg %p99
        $region38: #{tpu_custom_call.1} parent=31 // pred_check_branch
          %381 = sbr.rel (%p379) target = $region40
        $region39: #{tpu_custom_call.1} parent=31 // pred_region
          %s382 = smul.u32 32, %s45
          %s383 = ssub.s32 38, %s382
          %p384 = scmp.lt.s32.totalorder %s383, 32
          %s385 = scalar_select %p384, %s383, 32
          %s386 = smul.u32 128, %s385
          %p387 = scmp.lt.s32.totalorder %s44, 1
          %s388 = scalar_select %p387, %s44, 1
          %p389 = scmp.lt.s32.totalorder %s382, 37
          %s390 = scalar_select %p389, %s382, 37
          %s391 = smul.addr %s388, 38
          %s392 = sadd.s32 %s390, %s391
          %s393 = smul.addr %s392, 8
          %s394 = scalar_lea.vmem %s4, %s393
          %s395 = smul.u32 32, %s45
          %s396 = ssub.s32 38, %s395
          %p397 = scmp.lt.s32.totalorder %s396, 32
          %s398 = scalar_select %p397, %s396, 32
          %s399 = smul.u32 128, %s398
        $region40: #{tpu_custom_call.1} parent=31 // pred_fallthru
          _
        // Predicated region
        $region41: #{tpu_custom_call.1} parent=31 // pred_check
          %p400 = pneg %p127
        $region42: #{tpu_custom_call.1} parent=31 // pred_check_branch
          %402 = sbr.rel (%p400) target = $region44
        $region43: #{tpu_custom_call.1} parent=31 // pred_region
          %s403 = smul.u32 32, %s45
          %s404 = ssub.s32 38, %s403
          %p405 = scmp.lt.s32.totalorder %s404, 32
          %s406 = scalar_select %p405, %s404, 32
          %s407 = smul.u32 128, %s406
          %p408 = scmp.lt.s32.totalorder %s44, 1
          %s409 = scalar_select %p408, %s44, 1
          %p410 = scmp.lt.s32.totalorder %s403, 37
          %s411 = scalar_select %p410, %s403, 37
          %s412 = smul.addr %s409, 38
          %s413 = sadd.s32 %s411, %s412
          %s414 = smul.addr %s413, 8
          %s415 = scalar_lea.vmem %s5, %s414
          %s416 = smul.u32 32, %s45
          %s417 = ssub.s32 38, %s416
          %p418 = scmp.lt.s32.totalorder %s417, 32
          %s419 = scalar_select %p418, %s417, 32
          %s420 = smul.u32 128, %s419
        $region44: #{tpu_custom_call.1} parent=31 // pred_fallthru
          _
        // Predicated region
        $region45: #{tpu_custom_call.1} parent=31 // pred_check
          %p421 = pneg %p174
        $region46: #{tpu_custom_call.1} parent=31 // pred_check_branch
          %423 = sbr.rel (%p421) target = $region48
        $region47: #{tpu_custom_call.1} parent=31 // pred_region
          %p424 = scmp.lt.s32.totalorder %s44, 1
          %s425 = scalar_select %p424, %s44, 1
          %s426 = scalar_lea.vmem %s7, %s425
        $region48: #{tpu_custom_call.1} parent=31 // pred_fallthru
          _
      $region32: #{tpu_custom_call.1} parent=5 // pred_fallthru
        _
      %p427 = scmp.le.s32.totalorder 1, %s37
      %p428 = scmp.lt.s32.totalorder %s37, 5
      %p429 = pnand %p427, %p428
      %p430 = pneg %p429
      // Predicated region
      $region49: #{tpu_custom_call.1} parent=5 // pred_check
        _
      $region50: #{tpu_custom_call.1} parent=5 // pred_check_branch
        %432 = sbr.rel (%p429) target = $region52
      $region51: #{tpu_custom_call.1} parent=5 // pred_region
        %s433 = ssub.s32 %s37, 1
        %s434 = smul.u32 32, %s47
        %s435 = ssub.s32 38, %s434
        %p436 = scmp.lt.s32.totalorder %s435, 32
        %s437 = scalar_select %p436, %s435, 32
        %s438 = smul.u32 128, %s437
        %p439 = scmp.lt.s32.totalorder %s46, 1
        %s440 = scalar_select %p439, %s46, 1
        %p441 = scmp.lt.s32.totalorder %s434, 37
        %s442 = scalar_select %p441, %s434, 37
        %s443 = smul.addr %s440, 38
        %s444 = sadd.s32 %s442, %s443
        %s445 = smul.addr %s444, 8
        %s446 = scalar_lea.vmem %s3, %s445
        %p447 = pneg %p77
        %p448 = pneg %p74
        %s449 = smul.u32 32, %s47
        %s450 = ssub.s32 38, %s449
        %p451 = scmp.lt.s32.totalorder %s450, 32
        %s452 = scalar_select %p451, %s450, 32
        %s453 = smul.u32 128, %s452
        %p454 = scmp.lt.s32.totalorder %s46, 1
        %s455 = scalar_select %p454, %s46, 1
        %p456 = scmp.lt.s32.totalorder %s449, 37
        %s457 = scalar_select %p456, %s449, 37
        %s458 = smul.addr %s455, 38
        %s459 = sadd.s32 %s457, %s458
        %s460 = smul.addr %s459, 8
        %s461 = scalar_lea.vmem %s4, %s460
        %p462 = pneg %p105
        %p463 = pneg %p102
        %s464 = smul.u32 32, %s47
        %s465 = ssub.s32 38, %s464
        %p466 = scmp.lt.s32.totalorder %s465, 32
        %s467 = scalar_select %p466, %s465, 32
        %s468 = smul.u32 128, %s467
        %p469 = scmp.lt.s32.totalorder %s46, 1
        %s470 = scalar_select %p469, %s46, 1
        %p471 = scmp.lt.s32.totalorder %s464, 37
        %s472 = scalar_select %p471, %s464, 37
        %s473 = smul.addr %s470, 38
        %s474 = sadd.s32 %s472, %s473
        %s475 = smul.addr %s474, 8
        %s476 = scalar_lea.vmem %s5, %s475
        %p477 = pneg %p133
        %p478 = pneg %p130
        %p479 = pneg %p154
        %p480 = pneg %p151
        %p481 = scmp.lt.s32.totalorder %s46, 1
        %s482 = scalar_select %p481, %s46, 1
        %s483 = scalar_lea.vmem %s7, %s482
        %p484 = pneg %p180
        %p485 = pneg %p177
        %p486 = pneg %p201
        %p487 = pneg %p198
        %p488 = pneg %p222
        %p489 = pneg %p219
        %p490 = pneg %p243
        %p491 = pneg %p240
        %p492 = pneg %p271
        %p493 = pneg %p268
        %s494 = sand.u32 %s258, 1
        %s495 = sand.u32 %s258, 1
        %s496 = smul.addr %s495, 256
        %s497 = scalar_lea.vmem [#allocation6], %s496
        %p498 = pneg %p299
        %p499 = pneg %p296
        %s500 = sand.u32 %s286, 1
        %s501 = sand.u32 %s286, 1
        %s502 = smul.addr %s501, 256
        %s503 = scalar_lea.vmem [#allocation7], %s502
        %p504 = pneg %p327
        %p505 = pneg %p324
        %s506 = sand.u32 %s314, 1
        %s507 = scalar_lea.sflag [#allocation9], %s506
        %s508 = sand.u32 %s314, 1
        %s509 = scalar_lea.vmem [#allocation8], %s508
        %s510 = smul.u32 32, %s47
        %s511 = ssub.s32 38, %s510
        %p512 = scmp.lt.s32.totalorder %s511, 32
        %s513 = scalar_select %p512, %s511, 32
        %s514 = smul.u32 128, %s513
        %p515 = scmp.lt.s32.totalorder %s46, 1
        %s516 = scalar_select %p515, %s46, 1
        %p517 = scmp.lt.s32.totalorder %s510, 37
        %s518 = scalar_select %p517, %s510, 37
        %s519 = smul.addr %s516, 38
        %s520 = sadd.s32 %s518, %s519
        %s521 = smul.addr %s520, 8
        %s522 = scalar_lea.vmem %s3, %s521
        %s523 = smul.u32 32, %s47
        %s524 = ssub.s32 38, %s523
        %p525 = scmp.lt.s32.totalorder %s524, 32
        %s526 = scalar_select %p525, %s524, 32
        %s527 = smul.u32 128, %s526
        %s528 = smul.u32 32, %s47
        %s529 = ssub.s32 38, %s528
        %p530 = scmp.lt.s32.totalorder %s529, 32
        %s531 = scalar_select %p530, %s529, 32
        %s532 = smul.u32 128, %s531
        %p533 = scmp.lt.s32.totalorder %s46, 1
        %s534 = scalar_select %p533, %s46, 1
        %p535 = scmp.lt.s32.totalorder %s528, 37
        %s536 = scalar_select %p535, %s528, 37
        %s537 = smul.addr %s534, 38
        %s538 = sadd.s32 %s536, %s537
        %s539 = smul.addr %s538, 8
        %s540 = scalar_lea.vmem %s4, %s539
        %s541 = smul.u32 32, %s47
        %s542 = ssub.s32 38, %s541
        %p543 = scmp.lt.s32.totalorder %s542, 32
        %s544 = scalar_select %p543, %s542, 32
        %s545 = smul.u32 128, %s544
        %s546 = smul.u32 32, %s47
        %s547 = ssub.s32 38, %s546
        %p548 = scmp.lt.s32.totalorder %s547, 32
        %s549 = scalar_select %p548, %s547, 32
        %s550 = smul.u32 128, %s549
        %p551 = scmp.lt.s32.totalorder %s46, 1
        %s552 = scalar_select %p551, %s46, 1
        %p553 = scmp.lt.s32.totalorder %s546, 37
        %s554 = scalar_select %p553, %s546, 37
        %s555 = smul.addr %s552, 38
        %s556 = sadd.s32 %s554, %s555
        %s557 = smul.addr %s556, 8
        %s558 = scalar_lea.vmem %s5, %s557
        %s559 = smul.u32 32, %s47
        %s560 = ssub.s32 38, %s559
        %p561 = scmp.lt.s32.totalorder %s560, 32
        %s562 = scalar_select %p561, %s560, 32
        %s563 = smul.u32 128, %s562
        %p564 = scmp.lt.s32.totalorder %s46, 1
        %s565 = scalar_select %p564, %s46, 1
        %s566 = scalar_lea.vmem %s7, %s565
        %s567 = smul.u32 32, %s47
        %s568 = ssub.s32 38, %s567
        %p569 = scmp.lt.s32.totalorder %s568, 32
        %s570 = scalar_select %p569, %s568, 32
        %s571 = smul.u32 128, %s570
        %s572 = smul.u32 32, %s47
        %s573 = ssub.s32 38, %s572
        %p574 = scmp.lt.s32.totalorder %s573, 32
        %s575 = scalar_select %p574, %s573, 32
        %s576 = smul.u32 128, %s575
        %s578 = sld [smem:[#allocation3 + %s46]]
        %s579 = sld [smem:[#allocation4 + %s46]]
        %v580 = vld [vmem:[%s6] sm:$0x1]
        %v581 = vld [vmem:[%s6 + $0x1] sm:$0x1]
        %v582 = vld [vmem:[%s6 + $0x2] sm:$0x1]
        %v583 = vld [vmem:[%s6 + $0x3] sm:$0x1]
        %v584 = vld [vmem:[%s522] sm:$0xff]
        %v585 = vld [vmem:[%s522 + $0x8] sm:$0xff]
        %v586 = vld [vmem:[%s522 + $0x10] sm:$0xff]
        %v587 = vld [vmem:[%s522 + $0x18] sm:$0xff]
        %v588 = vld [vmem:[%s522 + $0x20] sm:$0xff]
        %v589 = vld [vmem:[%s522 + $0x28] sm:$0xff]
        %v590 = vld [vmem:[%s522 + $0x30] sm:$0xff]
        %v591 = vld [vmem:[%s522 + $0x38] sm:$0xff]
        %v592 = vld [vmem:[%s522 + $0x40] sm:$0xff]
        %v593 = vld [vmem:[%s522 + $0x48] sm:$0xff]
        %v594 = vld [vmem:[%s522 + $0x50] sm:$0xff]
        %v595 = vld [vmem:[%s522 + $0x58] sm:$0xff]
        %v596 = vld [vmem:[%s522 + $0x60] sm:$0xff]
        %v597 = vld [vmem:[%s522 + $0x68] sm:$0xff]
        %v598 = vld [vmem:[%s522 + $0x70] sm:$0xff]
        %v599 = vld [vmem:[%s522 + $0x78] sm:$0xff]
        %v600 = vld [vmem:[%s522 + $0x80] sm:$0xff]
        %v601 = vld [vmem:[%s522 + $0x88] sm:$0xff]
        %v602 = vld [vmem:[%s522 + $0x90] sm:$0xff]
        %v603 = vld [vmem:[%s522 + $0x98] sm:$0xff]
        %v604 = vld [vmem:[%s522 + $0xa0] sm:$0xff]
        %v605 = vld [vmem:[%s522 + $0xa8] sm:$0xff]
        %v606 = vld [vmem:[%s522 + $0xb0] sm:$0xff]
        %v607 = vld [vmem:[%s522 + $0xb8] sm:$0xff]
        %v608 = vld [vmem:[%s522 + $0xc0] sm:$0xff]
        %v609 = vld [vmem:[%s522 + $0xc8] sm:$0xff]
        %v610 = vld [vmem:[%s522 + $0xd0] sm:$0xff]
        %v611 = vld [vmem:[%s522 + $0xd8] sm:$0xff]
        %v612 = vld [vmem:[%s522 + $0xe0] sm:$0xff]
        %v613 = vld [vmem:[%s522 + $0xe8] sm:$0xff]
        %v614 = vld [vmem:[%s522 + $0xf0] sm:$0xff]
        %v615 = vld [vmem:[%s522 + $0xf8] sm:$0xff]
        %v616 = vld [vmem:[%s558] sm:$0xff]
        %v617 = vld [vmem:[%s558 + $0x8] sm:$0xff]
        %v618 = vld [vmem:[%s558 + $0x10] sm:$0xff]
        %v619 = vld [vmem:[%s558 + $0x18] sm:$0xff]
        %v620 = vld [vmem:[%s558 + $0x20] sm:$0xff]
        %v621 = vld [vmem:[%s558 + $0x28] sm:$0xff]
        %v622 = vld [vmem:[%s558 + $0x30] sm:$0xff]
        %v623 = vld [vmem:[%s558 + $0x38] sm:$0xff]
        %v624 = vld [vmem:[%s558 + $0x40] sm:$0xff]
        %v625 = vld [vmem:[%s558 + $0x48] sm:$0xff]
        %v626 = vld [vmem:[%s558 + $0x50] sm:$0xff]
        %v627 = vld [vmem:[%s558 + $0x58] sm:$0xff]
        %v628 = vld [vmem:[%s558 + $0x60] sm:$0xff]
        %v629 = vld [vmem:[%s558 + $0x68] sm:$0xff]
        %v630 = vld [vmem:[%s558 + $0x70] sm:$0xff]
        %v631 = vld [vmem:[%s558 + $0x78] sm:$0xff]
        %v632 = vld [vmem:[%s558 + $0x80] sm:$0xff]
        %v633 = vld [vmem:[%s558 + $0x88] sm:$0xff]
        %v634 = vld [vmem:[%s558 + $0x90] sm:$0xff]
        %v635 = vld [vmem:[%s558 + $0x98] sm:$0xff]
        %v636 = vld [vmem:[%s558 + $0xa0] sm:$0xff]
        %v637 = vld [vmem:[%s558 + $0xa8] sm:$0xff]
        %v638 = vld [vmem:[%s558 + $0xb0] sm:$0xff]
        %v639 = vld [vmem:[%s558 + $0xb8] sm:$0xff]
        %v640 = vld [vmem:[%s558 + $0xc0] sm:$0xff]
        %v641 = vld [vmem:[%s558 + $0xc8] sm:$0xff]
        %v642 = vld [vmem:[%s558 + $0xd0] sm:$0xff]
        %v643 = vld [vmem:[%s558 + $0xd8] sm:$0xff]
        %v644 = vld [vmem:[%s558 + $0xe0] sm:$0xff]
        %v645 = vld [vmem:[%s558 + $0xe8] sm:$0xff]
        %v646 = vld [vmem:[%s558 + $0xf0] sm:$0xff]
        %v647 = vld [vmem:[%s558 + $0xf8] sm:$0xff]
        %v648 = vlaneseq
        %v649 = vshrl.u32 %v648, 7
        %v650 = vsub.s32 0, %v649
        %v651 = vrot.slane %v580, %v650
        %v652 = vmul.f32 %v584, %v651
        %v653 = vmul.f32 %v585, %v651
        %v654 = vmul.f32 %v586, %v651
        %v655 = vmul.f32 %v587, %v651
        %v656 = vmul.f32 %v588, %v651
        %v657 = vmul.f32 %v589, %v651
        %v658 = vmul.f32 %v590, %v651
        %v659 = vmul.f32 %v591, %v651
        %v660 = vmul.f32 %v592, %v651
        %v661 = vmul.f32 %v593, %v651
        %v662 = vmul.f32 %v594, %v651
        %v663 = vmul.f32 %v595, %v651
        %v664 = vmul.f32 %v596, %v651
        %v665 = vmul.f32 %v597, %v651
        %v666 = vmul.f32 %v598, %v651
        %v667 = vmul.f32 %v599, %v651
        %v668 = vmul.f32 %v600, %v651
        %v669 = vmul.f32 %v601, %v651
        %v670 = vmul.f32 %v602, %v651
        %v671 = vmul.f32 %v603, %v651
        %v672 = vmul.f32 %v604, %v651
        %v673 = vmul.f32 %v605, %v651
        %v674 = vmul.f32 %v606, %v651
        %v675 = vmul.f32 %v607, %v651
        %v676 = vmul.f32 %v608, %v651
        %v677 = vmul.f32 %v609, %v651
        %v678 = vmul.f32 %v610, %v651
        %v679 = vmul.f32 %v611, %v651
        %v680 = vmul.f32 %v612, %v651
        %v681 = vmul.f32 %v613, %v651
        %v682 = vmul.f32 %v614, %v651
        %v683 = vmul.f32 %v615, %v651
        %v684 = vlaneseq
        %v685 = vshrl.u32 %v684, 7
        %v686 = vsub.s32 0, %v685
        %v687 = vrot.slane %v581, %v686
        %v688 = vadd.f32 %v652, %v687
        %v689 = vadd.f32 %v653, %v687
        %v690 = vadd.f32 %v654, %v687
        %v691 = vadd.f32 %v655, %v687
        %v692 = vadd.f32 %v656, %v687
        %v693 = vadd.f32 %v657, %v687
        %v694 = vadd.f32 %v658, %v687
        %v695 = vadd.f32 %v659, %v687
        %v696 = vadd.f32 %v660, %v687
        %v697 = vadd.f32 %v661, %v687
        %v698 = vadd.f32 %v662, %v687
        %v699 = vadd.f32 %v663, %v687
        %v700 = vadd.f32 %v664, %v687
        %v701 = vadd.f32 %v665, %v687
        %v702 = vadd.f32 %v666, %v687
        %v703 = vadd.f32 %v667, %v687
        %v704 = vadd.f32 %v668, %v687
        %v705 = vadd.f32 %v669, %v687
        %v706 = vadd.f32 %v670, %v687
        %v707 = vadd.f32 %v671, %v687
        %v708 = vadd.f32 %v672, %v687
        %v709 = vadd.f32 %v673, %v687
        %v710 = vadd.f32 %v674, %v687
        %v711 = vadd.f32 %v675, %v687
        %v712 = vadd.f32 %v676, %v687
        %v713 = vadd.f32 %v677, %v687
        %v714 = vadd.f32 %v678, %v687
        %v715 = vadd.f32 %v679, %v687
        %v716 = vadd.f32 %v680, %v687
        %v717 = vadd.f32 %v681, %v687
        %v718 = vadd.f32 %v682, %v687
        %v719 = vadd.f32 %v683, %v687
        %v720 = vstv %s578
        %v721 = vmul.f32 %v720, %v688
        %v722 = vmul.f32 %v720, %v689
        %v723 = vmul.f32 %v720, %v690
        %v724 = vmul.f32 %v720, %v691
        %v725 = vmul.f32 %v720, %v692
        %v726 = vmul.f32 %v720, %v693
        %v727 = vmul.f32 %v720, %v694
        %v728 = vmul.f32 %v720, %v695
        %v729 = vmul.f32 %v720, %v696
        %v730 = vmul.f32 %v720, %v697
        %v731 = vmul.f32 %v720, %v698
        %v732 = vmul.f32 %v720, %v699
        %v733 = vmul.f32 %v720, %v700
        %v734 = vmul.f32 %v720, %v701
        %v735 = vmul.f32 %v720, %v702
        %v736 = vmul.f32 %v720, %v703
        %v737 = vmul.f32 %v720, %v704
        %v738 = vmul.f32 %v720, %v705
        %v739 = vmul.f32 %v720, %v706
        %v740 = vmul.f32 %v720, %v707
        %v741 = vmul.f32 %v720, %v708
        %v742 = vmul.f32 %v720, %v709
        %v743 = vmul.f32 %v720, %v710
        %v744 = vmul.f32 %v720, %v711
        %v745 = vmul.f32 %v720, %v712
        %v746 = vmul.f32 %v720, %v713
        %v747 = vmul.f32 %v720, %v714
        %v748 = vmul.f32 %v720, %v715
        %v749 = vmul.f32 %v720, %v716
        %v750 = vmul.f32 %v720, %v717
        %v751 = vmul.f32 %v720, %v718
        %v752 = vmul.f32 %v720, %v719
        %v753 = vstv %s579
        %v754 = vmul.f32 %v753, %v616
        %v755 = vmul.f32 %v753, %v617
        %v756 = vmul.f32 %v753, %v618
        %v757 = vmul.f32 %v753, %v619
        %v758 = vmul.f32 %v753, %v620
        %v759 = vmul.f32 %v753, %v621
        %v760 = vmul.f32 %v753, %v622
        %v761 = vmul.f32 %v753, %v623
        %v762 = vmul.f32 %v753, %v624
        %v763 = vmul.f32 %v753, %v625
        %v764 = vmul.f32 %v753, %v626
        %v765 = vmul.f32 %v753, %v627
        %v766 = vmul.f32 %v753, %v628
        %v767 = vmul.f32 %v753, %v629
        %v768 = vmul.f32 %v753, %v630
        %v769 = vmul.f32 %v753, %v631
        %v770 = vmul.f32 %v753, %v632
        %v771 = vmul.f32 %v753, %v633
        %v772 = vmul.f32 %v753, %v634
        %v773 = vmul.f32 %v753, %v635
        %v774 = vmul.f32 %v753, %v636
        %v775 = vmul.f32 %v753, %v637
        %v776 = vmul.f32 %v753, %v638
        %v777 = vmul.f32 %v753, %v639
        %v778 = vmul.f32 %v753, %v640
        %v779 = vmul.f32 %v753, %v641
        %v780 = vmul.f32 %v753, %v642
        %v781 = vmul.f32 %v753, %v643
        %v782 = vmul.f32 %v753, %v644
        %v783 = vmul.f32 %v753, %v645
        %v784 = vmul.f32 %v753, %v646
        %v785 = vmul.f32 %v753, %v647
        %v786 = vadd.f32 %v721, %v754
        %v787 = vadd.f32 %v722, %v755
        %v788 = vadd.f32 %v723, %v756
        %v789 = vadd.f32 %v724, %v757
        %v790 = vadd.f32 %v725, %v758
        %v791 = vadd.f32 %v726, %v759
        %v792 = vadd.f32 %v727, %v760
        %v793 = vadd.f32 %v728, %v761
        %v794 = vadd.f32 %v729, %v762
        %v795 = vadd.f32 %v730, %v763
        %v796 = vadd.f32 %v731, %v764
        %v797 = vadd.f32 %v732, %v765
        %v798 = vadd.f32 %v733, %v766
        %v799 = vadd.f32 %v734, %v767
        %v800 = vadd.f32 %v735, %v768
        %v801 = vadd.f32 %v736, %v769
        %v802 = vadd.f32 %v737, %v770
        %v803 = vadd.f32 %v738, %v771
        %v804 = vadd.f32 %v739, %v772
        %v805 = vadd.f32 %v740, %v773
        %v806 = vadd.f32 %v741, %v774
        %v807 = vadd.f32 %v742, %v775
        %v808 = vadd.f32 %v743, %v776
        %v809 = vadd.f32 %v744, %v777
        %v810 = vadd.f32 %v745, %v778
        %v811 = vadd.f32 %v746, %v779
        %v812 = vadd.f32 %v747, %v780
        %v813 = vadd.f32 %v748, %v781
        %v814 = vadd.f32 %v749, %v782
        %v815 = vadd.f32 %v750, %v783
        %v816 = vadd.f32 %v751, %v784
        %v817 = vadd.f32 %v752, %v785
        %v818 = vlaneseq
        %v819 = vshrl.u32 %v818, 7
        %v820 = vsub.s32 0, %v819
        %v821 = vrot.slane %v582, %v820
        %v822 = vmul.f32 %v786, %v821
        %v823 = vmul.f32 %v787, %v821
        %v824 = vmul.f32 %v788, %v821
        %v825 = vmul.f32 %v789, %v821
        %v826 = vmul.f32 %v790, %v821
        %v827 = vmul.f32 %v791, %v821
        %v828 = vmul.f32 %v792, %v821
        %v829 = vmul.f32 %v793, %v821
        %v830 = vmul.f32 %v794, %v821
        %v831 = vmul.f32 %v795, %v821
        %v832 = vmul.f32 %v796, %v821
        %v833 = vmul.f32 %v797, %v821
        %v834 = vmul.f32 %v798, %v821
        %v835 = vmul.f32 %v799, %v821
        %v836 = vmul.f32 %v800, %v821
        %v837 = vmul.f32 %v801, %v821
        %v838 = vmul.f32 %v802, %v821
        %v839 = vmul.f32 %v803, %v821
        %v840 = vmul.f32 %v804, %v821
        %v841 = vmul.f32 %v805, %v821
        %v842 = vmul.f32 %v806, %v821
        %v843 = vmul.f32 %v807, %v821
        %v844 = vmul.f32 %v808, %v821
        %v845 = vmul.f32 %v809, %v821
        %v846 = vmul.f32 %v810, %v821
        %v847 = vmul.f32 %v811, %v821
        %v848 = vmul.f32 %v812, %v821
        %v849 = vmul.f32 %v813, %v821
        %v850 = vmul.f32 %v814, %v821
        %v851 = vmul.f32 %v815, %v821
        %v852 = vmul.f32 %v816, %v821
        %v853 = vmul.f32 %v817, %v821
        %v854 = vlaneseq
        %v855 = vshrl.u32 %v854, 7
        %v856 = vsub.s32 0, %v855
        %v857 = vrot.slane %v583, %v856
        %v858 = vadd.f32 %v822, %v857
        %v859 = vadd.f32 %v823, %v857
        %v860 = vadd.f32 %v824, %v857
        %v861 = vadd.f32 %v825, %v857
        %v862 = vadd.f32 %v826, %v857
        %v863 = vadd.f32 %v827, %v857
        %v864 = vadd.f32 %v828, %v857
        %v865 = vadd.f32 %v829, %v857
        %v866 = vadd.f32 %v830, %v857
        %v867 = vadd.f32 %v831, %v857
        %v868 = vadd.f32 %v832, %v857
        %v869 = vadd.f32 %v833, %v857
        %v870 = vadd.f32 %v834, %v857
        %v871 = vadd.f32 %v835, %v857
        %v872 = vadd.f32 %v836, %v857
        %v873 = vadd.f32 %v837, %v857
        %v874 = vadd.f32 %v838, %v857
        %v875 = vadd.f32 %v839, %v857
        %v876 = vadd.f32 %v840, %v857
        %v877 = vadd.f32 %v841, %v857
        %v878 = vadd.f32 %v842, %v857
        %v879 = vadd.f32 %v843, %v857
        %v880 = vadd.f32 %v844, %v857
        %v881 = vadd.f32 %v845, %v857
        %v882 = vadd.f32 %v846, %v857
        %v883 = vadd.f32 %v847, %v857
        %v884 = vadd.f32 %v848, %v857
        %v885 = vadd.f32 %v849, %v857
        %v886 = vadd.f32 %v850, %v857
        %v887 = vadd.f32 %v851, %v857
        %v888 = vadd.f32 %v852, %v857
        %v889 = vadd.f32 %v853, %v857
        %vm890 = vcmask 654336
        %891 = vst.msk [vmem:[%s497] sm:$0xff] %vm890, %v858
        %892 = vst.msk [vmem:[%s497 + $0x8] sm:$0xff] %vm890, %v859
        %893 = vst.msk [vmem:[%s497 + $0x10] sm:$0xff] %vm890, %v860
        %894 = vst.msk [vmem:[%s497 + $0x18] sm:$0xff] %vm890, %v861
        %895 = vst.msk [vmem:[%s497 + $0x20] sm:$0xff] %vm890, %v862
        %896 = vst.msk [vmem:[%s497 + $0x28] sm:$0xff] %vm890, %v863
        %897 = vst.msk [vmem:[%s497 + $0x30] sm:$0xff] %vm890, %v864
        %898 = vst.msk [vmem:[%s497 + $0x38] sm:$0xff] %vm890, %v865
        %899 = vst.msk [vmem:[%s497 + $0x40] sm:$0xff] %vm890, %v866
        %900 = vst.msk [vmem:[%s497 + $0x48] sm:$0xff] %vm890, %v867
        %901 = vst.msk [vmem:[%s497 + $0x50] sm:$0xff] %vm890, %v868
        %902 = vst.msk [vmem:[%s497 + $0x58] sm:$0xff] %vm890, %v869
        %903 = vst.msk [vmem:[%s497 + $0x60] sm:$0xff] %vm890, %v870
        %904 = vst.msk [vmem:[%s497 + $0x68] sm:$0xff] %vm890, %v871
        %905 = vst.msk [vmem:[%s497 + $0x70] sm:$0xff] %vm890, %v872
        %906 = vst.msk [vmem:[%s497 + $0x78] sm:$0xff] %vm890, %v873
        %907 = vst.msk [vmem:[%s497 + $0x80] sm:$0xff] %vm890, %v874
        %908 = vst.msk [vmem:[%s497 + $0x88] sm:$0xff] %vm890, %v875
        %909 = vst.msk [vmem:[%s497 + $0x90] sm:$0xff] %vm890, %v876
        %910 = vst.msk [vmem:[%s497 + $0x98] sm:$0xff] %vm890, %v877
        %911 = vst.msk [vmem:[%s497 + $0xa0] sm:$0xff] %vm890, %v878
        %912 = vst.msk [vmem:[%s497 + $0xa8] sm:$0xff] %vm890, %v879
        %913 = vst.msk [vmem:[%s497 + $0xb0] sm:$0xff] %vm890, %v880
        %914 = vst.msk [vmem:[%s497 + $0xb8] sm:$0xff] %vm890, %v881
        %915 = vst.msk [vmem:[%s497 + $0xc0] sm:$0xff] %vm890, %v882
        %916 = vst.msk [vmem:[%s497 + $0xc8] sm:$0xff] %vm890, %v883
        %917 = vst.msk [vmem:[%s497 + $0xd0] sm:$0xff] %vm890, %v884
        %918 = vst.msk [vmem:[%s497 + $0xd8] sm:$0xff] %vm890, %v885
        %919 = vst.msk [vmem:[%s497 + $0xe0] sm:$0xff] %vm890, %v886
        %920 = vst.msk [vmem:[%s497 + $0xe8] sm:$0xff] %vm890, %v887
        %921 = vst.msk [vmem:[%s497 + $0xf0] sm:$0xff] %vm890, %v888
        %922 = vst.msk [vmem:[%s497 + $0xf8] sm:$0xff] %vm890, %v889
        %v923 = vpack.c.bf16 %v787, %v786
        %v924 = vpack.c.bf16 %v789, %v788
        %v925 = vpack.c.bf16 %v791, %v790
        %v926 = vpack.c.bf16 %v793, %v792
        %v927 = vpack.c.bf16 %v795, %v794
        %v928 = vpack.c.bf16 %v797, %v796
        %v929 = vpack.c.bf16 %v799, %v798
        %v930 = vpack.c.bf16 %v801, %v800
        %v931 = vpack.c.bf16 %v803, %v802
        %v932 = vpack.c.bf16 %v805, %v804
        %v933 = vpack.c.bf16 %v807, %v806
        %v934 = vpack.c.bf16 %v809, %v808
        %v935 = vpack.c.bf16 %v811, %v810
        %v936 = vpack.c.bf16 %v813, %v812
        %v937 = vpack.c.bf16 %v815, %v814
        %v938 = vpack.c.bf16 %v817, %v816
        %v939 = vld [vmem:[%s8] sm:$0xf]
        %v940 = vld [vmem:[%s8 + $0x4] sm:$0xf]
        %v941 = vld [vmem:[%s8 + $0x8] sm:$0xf]
        %v942 = vld [vmem:[%s8 + $0xc] sm:$0xf]
        %v943 = vld [vmem:[%s8 + $0x10] sm:$0xf]
        %v944 = vld [vmem:[%s8 + $0x14] sm:$0xf]
        %v945 = vld [vmem:[%s8 + $0x18] sm:$0xf]
        %v946 = vld [vmem:[%s8 + $0x1c] sm:$0xf]
        %v947 = vld [vmem:[%s8 + $0x20] sm:$0xf]
        %v948 = vld [vmem:[%s8 + $0x24] sm:$0xf]
        %v949 = vld [vmem:[%s540] sm:$0xff]
        %v950 = vld [vmem:[%s540 + $0x8] sm:$0xff]
        %v951 = vld [vmem:[%s540 + $0x10] sm:$0xff]
        %v952 = vld [vmem:[%s540 + $0x18] sm:$0xff]
        %v953 = vld [vmem:[%s540 + $0x20] sm:$0xff]
        %v954 = vld [vmem:[%s540 + $0x28] sm:$0xff]
        %v955 = vld [vmem:[%s540 + $0x30] sm:$0xff]
        %v956 = vld [vmem:[%s540 + $0x38] sm:$0xff]
        %v957 = vld [vmem:[%s540 + $0x40] sm:$0xff]
        %v958 = vld [vmem:[%s540 + $0x48] sm:$0xff]
        %v959 = vld [vmem:[%s540 + $0x50] sm:$0xff]
        %v960 = vld [vmem:[%s540 + $0x58] sm:$0xff]
        %v961 = vld [vmem:[%s540 + $0x60] sm:$0xff]
        %v962 = vld [vmem:[%s540 + $0x68] sm:$0xff]
        %v963 = vld [vmem:[%s540 + $0x70] sm:$0xff]
        %v964 = vld [vmem:[%s540 + $0x78] sm:$0xff]
        %v965 = vld [vmem:[%s540 + $0x80] sm:$0xff]
        %v966 = vld [vmem:[%s540 + $0x88] sm:$0xff]
        %v967 = vld [vmem:[%s540 + $0x90] sm:$0xff]
        %v968 = vld [vmem:[%s540 + $0x98] sm:$0xff]
        %v969 = vld [vmem:[%s540 + $0xa0] sm:$0xff]
        %v970 = vld [vmem:[%s540 + $0xa8] sm:$0xff]
        %v971 = vld [vmem:[%s540 + $0xb0] sm:$0xff]
        %v972 = vld [vmem:[%s540 + $0xb8] sm:$0xff]
        %v973 = vld [vmem:[%s540 + $0xc0] sm:$0xff]
        %v974 = vld [vmem:[%s540 + $0xc8] sm:$0xff]
        %v975 = vld [vmem:[%s540 + $0xd0] sm:$0xff]
        %v976 = vld [vmem:[%s540 + $0xd8] sm:$0xff]
        %v977 = vld [vmem:[%s540 + $0xe0] sm:$0xff]
        %v978 = vld [vmem:[%s540 + $0xe8] sm:$0xff]
        %v979 = vld [vmem:[%s540 + $0xf0] sm:$0xff]
        %v980 = vld [vmem:[%s540 + $0xf8] sm:$0xff]
        %v981 = vpack.c.bf16 %v950, %v949
        %v982 = vpack.c.bf16 %v952, %v951
        %v983 = vpack.c.bf16 %v954, %v953
        %v984 = vpack.c.bf16 %v956, %v955
        %v985 = vpack.c.bf16 %v958, %v957
        %v986 = vpack.c.bf16 %v960, %v959
        %v987 = vpack.c.bf16 %v962, %v961
        %v988 = vpack.c.bf16 %v964, %v963
        %v989 = vpack.c.bf16 %v966, %v965
        %v990 = vpack.c.bf16 %v968, %v967
        %v991 = vpack.c.bf16 %v970, %v969
        %v992 = vpack.c.bf16 %v972, %v971
        %v993 = vpack.c.bf16 %v974, %v973
        %v994 = vpack.c.bf16 %v976, %v975
        %v995 = vpack.c.bf16 %v978, %v977
        %v996 = vpack.c.bf16 %v980, %v979
        %v997 = vld [vmem:[%s9] sm:$0xf]
        %v998 = vld [vmem:[%s9 + $0x4] sm:$0xf]
        %v999 = vld [vmem:[%s9 + $0x8] sm:$0xf]
        %v1000 = vld [vmem:[%s9 + $0xc] sm:$0xf]
        %v1001 = vld [vmem:[%s9 + $0x10] sm:$0xf]
        %v1002 = vld [vmem:[%s9 + $0x14] sm:$0xf]
        %v1003 = vld [vmem:[%s9 + $0x18] sm:$0xf]
        %v1004 = vld [vmem:[%s9 + $0x1c] sm:$0xf]
        %v1013 = vunpack.c.l.b16 %v997
        %v1014 = vunpack.c.l.b16 %v998
        %v1015 = vunpack.c.l.b16 %v999
        %v1016 = vunpack.c.l.b16 %v1000
        %v1017 = vunpack.c.l.b16 %v1001
        %v1018 = vunpack.c.l.b16 %v1002
        %v1019 = vunpack.c.l.b16 %v1003
        %v1020 = vunpack.c.l.b16 %v1004
        %v1021 = vpack.c.b16 %v1014, %v1013
        %v1022 = vpack.c.b16 %v1016, %v1015
        %v1023 = vpack.c.b16 %v1018, %v1017
        %v1024 = vpack.c.b16 %v1020, %v1019
        %vm1029 = vcmask 523264
        %v1031 = vsel %vm1029, %v981, 0
        %v1034 = vsel %vm1029, %v982, 0
        %v1037 = vsel %vm1029, %v983, 0
        %v1040 = vsel %vm1029, %v984, 0
        %v1043 = vsel %vm1029, %v985, 0
        %v1046 = vsel %vm1029, %v986, 0
        %v1049 = vsel %vm1029, %v987, 0
        %v1052 = vsel %vm1029, %v988, 0
        %v1055 = vsel %vm1029, %v989, 0
        %v1058 = vsel %vm1029, %v990, 0
        %v1061 = vsel %vm1029, %v991, 0
        %v1064 = vsel %vm1029, %v992, 0
        %v1067 = vsel %vm1029, %v993, 0
        %v1070 = vsel %vm1029, %v994, 0
        %v1073 = vsel %vm1029, %v995, 0
        %v1076 = vsel %vm1029, %v996, 0
        %1078 = vmatprep.subr.bf16.mxu0 0
        %1079 = vmatpush1.bf16.msra.mxu0 %v1021
        %1080 = vmatprep.subr.bf16.mxu0 0
        %1081 = vmatpush1.bf16.msra.mxu0 %v1022
        %1082 = vmatprep.subr.bf16.mxu0 0
        %1083 = vmatpush1.bf16.msra.mxu0 %v1023
        %1084 = vmatprep.subr.bf16.mxu0 0
        %1085 = vmatpush1.bf16.msra.mxu0 %v1024
        %1086 = vmatprep.subr.bf16.mxu0 0
        %1087 = vmatpush1.bf16.msra.mxu0 0
        %1088 = vmatprep.subr.bf16.mxu0 0
        %1089 = vmatpush1.bf16.msra.mxu0 0
        %1090 = vmatprep.subr.bf16.mxu0 0
        %1091 = vmatpush1.bf16.msra.mxu0 0
        %1092 = vmatprep.subr.bf16.mxu0 0
        %1093 = vmatpush1.bf16.msra.mxu0 0
        %1094 = vmatprep.subr.bf16.mxu0 0
        %1095 = vmatpush1.bf16.msra.mxu0 0
        %1096 = vmatprep.subr.bf16.mxu0 0
        %1097 = vmatpush1.bf16.msra.mxu0 0
        %1098 = vmatprep.subr.bf16.mxu0 0
        %1099 = vmatpush1.bf16.msra.mxu0 0
        %1100 = vmatprep.subr.bf16.mxu0 0
        %1101 = vmatpush1.bf16.msra.mxu0 0
        %1102 = vmatprep.subr.bf16.mxu0 0
        %1103 = vmatpush1.bf16.msra.mxu0 0
        %1104 = vmatprep.subr.bf16.mxu0 0
        %1105 = vmatpush1.bf16.msra.mxu0 0
        %1106 = vmatprep.subr.bf16.mxu0 0
        %1107 = vmatpush1.bf16.msra.mxu0 0
        %1108 = vmatprep.subr.bf16.mxu0 0
        %1109 = vmatpush1.bf16.msra.mxu0 0
        %1110 = vmatprep.mubr.bf16.mxu0 0
        %1111 = vmatmul.mubr.bf16.gmra.mrb[0].mxu0 %v1031
        %v1112 = vpop.f32.mrb[0].mxu0
        %v1113 = vadd.f32 0.0, %v1112
        %v1114 = vpop.f32.mrb[0].mxu0
        %v1115 = vpop.f32.mrb[0].mxu0
        %v1116 = vadd.f32 0.0, %v1115
        %v1117 = vpop.f32.mrb[0].mxu0
        %1118 = vmatprep.mubr.bf16.mxu0 0
        %1119 = vmatmul.mubr.bf16.gmra.mrb[0].mxu0 %v1034
        %v1120 = vpop.f32.mrb[0].mxu0
        %v1121 = vadd.f32 0.0, %v1120
        %v1122 = vpop.f32.mrb[0].mxu0
        %v1123 = vpop.f32.mrb[0].mxu0
        %v1124 = vadd.f32 0.0, %v1123
        %v1125 = vpop.f32.mrb[0].mxu0
        %1126 = vmatprep.mubr.bf16.mxu0 0
        %1127 = vmatmul.mubr.bf16.gmra.mrb[0].mxu0 %v1037
        %v1128 = vpop.f32.mrb[0].mxu0
        %v1129 = vadd.f32 0.0, %v1128
        %v1130 = vpop.f32.mrb[0].mxu0
        %v1131 = vpop.f32.mrb[0].mxu0
        %v1132 = vadd.f32 0.0, %v1131
        %v1133 = vpop.f32.mrb[0].mxu0
        %1134 = vmatprep.mubr.bf16.mxu0 0
        %1135 = vmatmul.mubr.bf16.gmra.mrb[0].mxu0 %v1040
        %v1136 = vpop.f32.mrb[0].mxu0
        %v1137 = vadd.f32 0.0, %v1136
        %v1138 = vpop.f32.mrb[0].mxu0
        %v1139 = vpop.f32.mrb[0].mxu0
        %v1140 = vadd.f32 0.0, %v1139
        %v1141 = vpop.f32.mrb[0].mxu0
        %1142 = vmatprep.mubr.bf16.mxu0 0
        %1143 = vmatmul.mubr.bf16.gmra.mrb[0].mxu0 %v1043
        %v1144 = vpop.f32.mrb[0].mxu0
        %v1145 = vadd.f32 0.0, %v1144
        %v1146 = vpop.f32.mrb[0].mxu0
        %v1147 = vpop.f32.mrb[0].mxu0
        %v1148 = vadd.f32 0.0, %v1147
        %v1149 = vpop.f32.mrb[0].mxu0
        %1150 = vmatprep.mubr.bf16.mxu0 0
        %1151 = vmatmul.mubr.bf16.gmra.mrb[0].mxu0 %v1046
        %v1152 = vpop.f32.mrb[0].mxu0
        %v1153 = vadd.f32 0.0, %v1152
        %v1154 = vpop.f32.mrb[0].mxu0
        %v1155 = vpop.f32.mrb[0].mxu0
        %v1156 = vadd.f32 0.0, %v1155
        %v1157 = vpop.f32.mrb[0].mxu0
        %1158 = vmatprep.mubr.bf16.mxu0 0
        %1159 = vmatmul.mubr.bf16.gmra.mrb[0].mxu0 %v1049
        %v1160 = vpop.f32.mrb[0].mxu0
        %v1161 = vadd.f32 0.0, %v1160
        %v1162 = vpop.f32.mrb[0].mxu0
        %v1163 = vpop.f32.mrb[0].mxu0
        %v1164 = vadd.f32 0.0, %v1163
        %v1165 = vpop.f32.mrb[0].mxu0
        %1166 = vmatprep.mubr.bf16.mxu0 0
        %1167 = vmatmul.mubr.bf16.gmra.mrb[0].mxu0 %v1052
        %v1168 = vpop.f32.mrb[0].mxu0
        %v1169 = vadd.f32 0.0, %v1168
        %v1170 = vpop.f32.mrb[0].mxu0
        %v1171 = vpop.f32.mrb[0].mxu0
        %v1172 = vadd.f32 0.0, %v1171
        %v1173 = vpop.f32.mrb[0].mxu0
        %1174 = vmatprep.mubr.bf16.mxu0 0
        %1175 = vmatmul.mubr.bf16.gmra.mrb[0].mxu0 %v1055
        %v1176 = vpop.f32.mrb[0].mxu0
        %v1177 = vadd.f32 0.0, %v1176
        %v1178 = vpop.f32.mrb[0].mxu0
        %v1179 = vpop.f32.mrb[0].mxu0
        %v1180 = vadd.f32 0.0, %v1179
        %v1181 = vpop.f32.mrb[0].mxu0
        %1182 = vmatprep.mubr.bf16.mxu0 0
        %1183 = vmatmul.mubr.bf16.gmra.mrb[0].mxu0 %v1058
        %v1184 = vpop.f32.mrb[0].mxu0
        %v1185 = vadd.f32 0.0, %v1184
        %v1186 = vpop.f32.mrb[0].mxu0
        %v1187 = vpop.f32.mrb[0].mxu0
        %v1188 = vadd.f32 0.0, %v1187
        %v1189 = vpop.f32.mrb[0].mxu0
        %1190 = vmatprep.mubr.bf16.mxu0 0
        %1191 = vmatmul.mubr.bf16.gmra.mrb[0].mxu0 %v1061
        %v1192 = vpop.f32.mrb[0].mxu0
        %v1193 = vadd.f32 0.0, %v1192
        %v1194 = vpop.f32.mrb[0].mxu0
        %v1195 = vpop.f32.mrb[0].mxu0
        %v1196 = vadd.f32 0.0, %v1195
        %v1197 = vpop.f32.mrb[0].mxu0
        %1198 = vmatprep.mubr.bf16.mxu0 0
        %1199 = vmatmul.mubr.bf16.gmra.mrb[0].mxu0 %v1064
        %v1200 = vpop.f32.mrb[0].mxu0
        %v1201 = vadd.f32 0.0, %v1200
        %v1202 = vpop.f32.mrb[0].mxu0
        %v1203 = vpop.f32.mrb[0].mxu0
        %v1204 = vadd.f32 0.0, %v1203
        %v1205 = vpop.f32.mrb[0].mxu0
        %1206 = vmatprep.mubr.bf16.mxu0 0
        %1207 = vmatmul.mubr.bf16.gmra.mrb[0].mxu0 %v1067
        %v1208 = vpop.f32.mrb[0].mxu0
        %v1209 = vadd.f32 0.0, %v1208
        %v1210 = vpop.f32.mrb[0].mxu0
        %v1211 = vpop.f32.mrb[0].mxu0
        %v1212 = vadd.f32 0.0, %v1211
        %v1213 = vpop.f32.mrb[0].mxu0
        %1214 = vmatprep.mubr.bf16.mxu0 0
        %1215 = vmatmul.mubr.bf16.gmra.mrb[0].mxu0 %v1070
        %v1216 = vpop.f32.mrb[0].mxu0
        %v1217 = vadd.f32 0.0, %v1216
        %v1218 = vpop.f32.mrb[0].mxu0
        %v1219 = vpop.f32.mrb[0].mxu0
        %v1220 = vadd.f32 0.0, %v1219
        %v1221 = vpop.f32.mrb[0].mxu0
        %1222 = vmatprep.mubr.bf16.mxu0 0
        %1223 = vmatmul.mubr.bf16.gmra.mrb[0].mxu0 %v1073
        %v1224 = vpop.f32.mrb[0].mxu0
        %v1225 = vadd.f32 0.0, %v1224
        %v1226 = vpop.f32.mrb[0].mxu0
        %v1227 = vpop.f32.mrb[0].mxu0
        %v1228 = vadd.f32 0.0, %v1227
        %v1229 = vpop.f32.mrb[0].mxu0
        %1230 = vmatprep.mubr.bf16.mxu0 0
        %1231 = vmatmul.mubr.bf16.gmra.mrb[0].mxu0 %v1076
        %v1232 = vpop.f32.mrb[0].mxu0
        %v1233 = vadd.f32 0.0, %v1232
        %v1234 = vpop.f32.mrb[0].mxu0
        %v1235 = vpop.f32.mrb[0].mxu0
        %v1236 = vadd.f32 0.0, %v1235
        %v1237 = vpop.f32.mrb[0].mxu0
        %1238 = vdwg.mxu0
        %v1249 = vunpack.c.l.b16 %v939
        %v1250 = vunpack.c.l.b16 %v940
        %v1251 = vunpack.c.l.b16 %v941
        %v1252 = vunpack.c.l.b16 %v942
        %v1253 = vunpack.c.l.b16 %v943
        %v1254 = vunpack.c.l.b16 %v944
        %v1255 = vunpack.c.l.b16 %v945
        %v1256 = vunpack.c.l.b16 %v946
        %v1257 = vunpack.c.l.b16 %v947
        %v1258 = vunpack.c.l.b16 %v948
        %v1259 = vpack.c.b16 %v1250, %v1249
        %v1260 = vpack.c.b16 %v1252, %v1251
        %v1261 = vpack.c.b16 %v1254, %v1253
        %v1262 = vpack.c.b16 %v1256, %v1255
        %v1263 = vpack.c.b16 %v1258, %v1257
        %v1270 = vsel %vm890, %v923, 0
        %v1273 = vsel %vm890, %v924, 0
        %v1276 = vsel %vm890, %v925, 0
        %v1279 = vsel %vm890, %v926, 0
        %v1282 = vsel %vm890, %v927, 0
        %v1285 = vsel %vm890, %v928, 0
        %v1288 = vsel %vm890, %v929, 0
        %v1291 = vsel %vm890, %v930, 0
        %v1294 = vsel %vm890, %v931, 0
        %v1297 = vsel %vm890, %v932, 0
        %v1300 = vsel %vm890, %v933, 0
        %v1303 = vsel %vm890, %v934, 0
        %v1306 = vsel %vm890, %v935, 0
        %v1309 = vsel %vm890, %v936, 0
        %v1312 = vsel %vm890, %v937, 0
        %v1315 = vsel %vm890, %v938, 0
        %1317 = vmatprep.subr.bf16.mxu0 0
        %1318 = vmatpush1.bf16.msra.mxu0 %v1259
        %1319 = vmatprep.subr.bf16.mxu0 0
        %1320 = vmatpush1.bf16.msra.mxu0 %v1260
        %1321 = vmatprep.subr.bf16.mxu0 0
        %1322 = vmatpush1.bf16.msra.mxu0 %v1261
        %1323 = vmatprep.subr.bf16.mxu0 0
        %1324 = vmatpush1.bf16.msra.mxu0 %v1262
        %1325 = vmatprep.subr.bf16.mxu0 0
        %1326 = vmatpush1.bf16.msra.mxu0 %v1263
        %1327 = vmatprep.subr.bf16.mxu0 0
        %1328 = vmatpush1.bf16.msra.mxu0 0
        %1329 = vmatprep.subr.bf16.mxu0 0
        %1330 = vmatpush1.bf16.msra.mxu0 0
        %1331 = vmatprep.subr.bf16.mxu0 0
        %1332 = vmatpush1.bf16.msra.mxu0 0
        %1333 = vmatprep.subr.bf16.mxu0 0
        %1334 = vmatpush1.bf16.msra.mxu0 0
        %1335 = vmatprep.subr.bf16.mxu0 0
        %1336 = vmatpush1.bf16.msra.mxu0 0
        %1337 = vmatprep.subr.bf16.mxu0 0
        %1338 = vmatpush1.bf16.msra.mxu0 0
        %1339 = vmatprep.subr.bf16.mxu0 0
        %1340 = vmatpush1.bf16.msra.mxu0 0
        %1341 = vmatprep.subr.bf16.mxu0 0
        %1342 = vmatpush1.bf16.msra.mxu0 0
        %1343 = vmatprep.subr.bf16.mxu0 0
        %1344 = vmatpush1.bf16.msra.mxu0 0
        %1345 = vmatprep.subr.bf16.mxu0 0
        %1346 = vmatpush1.bf16.msra.mxu0 0
        %1347 = vmatprep.subr.bf16.mxu0 0
        %1348 = vmatpush1.bf16.msra.mxu0 0
        %1349 = vmatprep.mubr.bf16.mxu0 0
        %1350 = vmatmul.mubr.bf16.gmra.mrb[0].mxu0 %v1270
        %v1351 = vpop.f32.mrb[0].mxu0
        %v1352 = vadd.f32 %v1113, %v1351
        %v1353 = vpop.f32.mrb[0].mxu0
        %v1354 = vpop.f32.mrb[0].mxu0
        %v1355 = vadd.f32 %v1116, %v1354
        %v1356 = vpop.f32.mrb[0].mxu0
        %1357 = vmatprep.mubr.bf16.mxu0 0
        %1358 = vmatmul.mubr.bf16.gmra.mrb[0].mxu0 %v1273
        %v1359 = vpop.f32.mrb[0].mxu0
        %v1360 = vadd.f32 %v1121, %v1359
        %v1361 = vpop.f32.mrb[0].mxu0
        %v1362 = vpop.f32.mrb[0].mxu0
        %v1363 = vadd.f32 %v1124, %v1362
        %v1364 = vpop.f32.mrb[0].mxu0
        %1365 = vmatprep.mubr.bf16.mxu0 0
        %1366 = vmatmul.mubr.bf16.gmra.mrb[0].mxu0 %v1276
        %v1367 = vpop.f32.mrb[0].mxu0
        %v1368 = vadd.f32 %v1129, %v1367
        %v1369 = vpop.f32.mrb[0].mxu0
        %v1370 = vpop.f32.mrb[0].mxu0
        %v1371 = vadd.f32 %v1132, %v1370
        %v1372 = vpop.f32.mrb[0].mxu0
        %1373 = vmatprep.mubr.bf16.mxu0 0
        %1374 = vmatmul.mubr.bf16.gmra.mrb[0].mxu0 %v1279
        %v1375 = vpop.f32.mrb[0].mxu0
        %v1376 = vadd.f32 %v1137, %v1375
        %v1377 = vpop.f32.mrb[0].mxu0
        %v1378 = vpop.f32.mrb[0].mxu0
        %v1379 = vadd.f32 %v1140, %v1378
        %v1380 = vpop.f32.mrb[0].mxu0
        %1381 = vmatprep.mubr.bf16.mxu0 0
        %1382 = vmatmul.mubr.bf16.gmra.mrb[0].mxu0 %v1282
        %v1383 = vpop.f32.mrb[0].mxu0
        %v1384 = vadd.f32 %v1145, %v1383
        %v1385 = vpop.f32.mrb[0].mxu0
        %v1386 = vpop.f32.mrb[0].mxu0
        %v1387 = vadd.f32 %v1148, %v1386
        %v1388 = vpop.f32.mrb[0].mxu0
        %1389 = vmatprep.mubr.bf16.mxu0 0
        %1390 = vmatmul.mubr.bf16.gmra.mrb[0].mxu0 %v1285
        %v1391 = vpop.f32.mrb[0].mxu0
        %v1392 = vadd.f32 %v1153, %v1391
        %v1393 = vpop.f32.mrb[0].mxu0
        %v1394 = vpop.f32.mrb[0].mxu0
        %v1395 = vadd.f32 %v1156, %v1394
        %v1396 = vpop.f32.mrb[0].mxu0
        %1397 = vmatprep.mubr.bf16.mxu0 0
        %1398 = vmatmul.mubr.bf16.gmra.mrb[0].mxu0 %v1288
        %v1399 = vpop.f32.mrb[0].mxu0
        %v1400 = vadd.f32 %v1161, %v1399
        %v1401 = vpop.f32.mrb[0].mxu0
        %v1402 = vpop.f32.mrb[0].mxu0
        %v1403 = vadd.f32 %v1164, %v1402
        %v1404 = vpop.f32.mrb[0].mxu0
        %1405 = vmatprep.mubr.bf16.mxu0 0
        %1406 = vmatmul.mubr.bf16.gmra.mrb[0].mxu0 %v1291
        %v1407 = vpop.f32.mrb[0].mxu0
        %v1408 = vadd.f32 %v1169, %v1407
        %v1409 = vpop.f32.mrb[0].mxu0
        %v1410 = vpop.f32.mrb[0].mxu0
        %v1411 = vadd.f32 %v1172, %v1410
        %v1412 = vpop.f32.mrb[0].mxu0
        %1413 = vmatprep.mubr.bf16.mxu0 0
        %1414 = vmatmul.mubr.bf16.gmra.mrb[0].mxu0 %v1294
        %v1415 = vpop.f32.mrb[0].mxu0
        %v1416 = vadd.f32 %v1177, %v1415
        %v1417 = vpop.f32.mrb[0].mxu0
        %v1418 = vpop.f32.mrb[0].mxu0
        %v1419 = vadd.f32 %v1180, %v1418
        %v1420 = vpop.f32.mrb[0].mxu0
        %1421 = vmatprep.mubr.bf16.mxu0 0
        %1422 = vmatmul.mubr.bf16.gmra.mrb[0].mxu0 %v1297
        %v1423 = vpop.f32.mrb[0].mxu0
        %v1424 = vadd.f32 %v1185, %v1423
        %v1425 = vpop.f32.mrb[0].mxu0
        %v1426 = vpop.f32.mrb[0].mxu0
        %v1427 = vadd.f32 %v1188, %v1426
        %v1428 = vpop.f32.mrb[0].mxu0
        %1429 = vmatprep.mubr.bf16.mxu0 0
        %1430 = vmatmul.mubr.bf16.gmra.mrb[0].mxu0 %v1300
        %v1431 = vpop.f32.mrb[0].mxu0
        %v1432 = vadd.f32 %v1193, %v1431
        %v1433 = vpop.f32.mrb[0].mxu0
        %v1434 = vpop.f32.mrb[0].mxu0
        %v1435 = vadd.f32 %v1196, %v1434
        %v1436 = vpop.f32.mrb[0].mxu0
        %1437 = vmatprep.mubr.bf16.mxu0 0
        %1438 = vmatmul.mubr.bf16.gmra.mrb[0].mxu0 %v1303
        %v1439 = vpop.f32.mrb[0].mxu0
        %v1440 = vadd.f32 %v1201, %v1439
        %v1441 = vpop.f32.mrb[0].mxu0
        %v1442 = vpop.f32.mrb[0].mxu0
        %v1443 = vadd.f32 %v1204, %v1442
        %v1444 = vpop.f32.mrb[0].mxu0
        %1445 = vmatprep.mubr.bf16.mxu0 0
        %1446 = vmatmul.mubr.bf16.gmra.mrb[0].mxu0 %v1306
        %v1447 = vpop.f32.mrb[0].mxu0
        %v1448 = vadd.f32 %v1209, %v1447
        %v1449 = vpop.f32.mrb[0].mxu0
        %v1450 = vpop.f32.mrb[0].mxu0
        %v1451 = vadd.f32 %v1212, %v1450
        %v1452 = vpop.f32.mrb[0].mxu0
        %1453 = vmatprep.mubr.bf16.mxu0 0
        %1454 = vmatmul.mubr.bf16.gmra.mrb[0].mxu0 %v1309
        %v1455 = vpop.f32.mrb[0].mxu0
        %v1456 = vadd.f32 %v1217, %v1455
        %v1457 = vpop.f32.mrb[0].mxu0
        %v1458 = vpop.f32.mrb[0].mxu0
        %v1459 = vadd.f32 %v1220, %v1458
        %v1460 = vpop.f32.mrb[0].mxu0
        %1461 = vmatprep.mubr.bf16.mxu0 0
        %1462 = vmatmul.mubr.bf16.gmra.mrb[0].mxu0 %v1312
        %v1463 = vpop.f32.mrb[0].mxu0
        %v1464 = vadd.f32 %v1225, %v1463
        %v1465 = vpop.f32.mrb[0].mxu0
        %v1466 = vpop.f32.mrb[0].mxu0
        %v1467 = vadd.f32 %v1228, %v1466
        %v1468 = vpop.f32.mrb[0].mxu0
        %1469 = vmatprep.mubr.bf16.mxu0 0
        %1470 = vmatmul.mubr.bf16.gmra.mrb[0].mxu0 %v1315
        %v1471 = vpop.f32.mrb[0].mxu0
        %v1472 = vadd.f32 %v1233, %v1471
        %v1473 = vpop.f32.mrb[0].mxu0
        %v1474 = vpop.f32.mrb[0].mxu0
        %v1475 = vadd.f32 %v1236, %v1474
        %v1476 = vpop.f32.mrb[0].mxu0
        %1477 = vdwg.mxu0
        %v1478 = vld [vmem:[%s566] sm:$0x1]
        %v1480 = vlaneseq
        %v1481 = vshrl.u32 %v1480, 7
        %v1482 = vsub.s32 0, %v1481
        %v1483 = vrot.slane %v1478, %v1482
        %v1485 = vadd.f32 %v1352, %v1483
        %v1486 = vadd.f32 %v1355, %v1483
        %v1487 = vadd.f32 %v1360, %v1483
        %v1488 = vadd.f32 %v1363, %v1483
        %v1489 = vadd.f32 %v1368, %v1483
        %v1490 = vadd.f32 %v1371, %v1483
        %v1491 = vadd.f32 %v1376, %v1483
        %v1492 = vadd.f32 %v1379, %v1483
        %v1493 = vadd.f32 %v1384, %v1483
        %v1494 = vadd.f32 %v1387, %v1483
        %v1495 = vadd.f32 %v1392, %v1483
        %v1496 = vadd.f32 %v1395, %v1483
        %v1497 = vadd.f32 %v1400, %v1483
        %v1498 = vadd.f32 %v1403, %v1483
        %v1499 = vadd.f32 %v1408, %v1483
        %v1500 = vadd.f32 %v1411, %v1483
        %v1501 = vadd.f32 %v1416, %v1483
        %v1502 = vadd.f32 %v1419, %v1483
        %v1503 = vadd.f32 %v1424, %v1483
        %v1504 = vadd.f32 %v1427, %v1483
        %v1505 = vadd.f32 %v1432, %v1483
        %v1506 = vadd.f32 %v1435, %v1483
        %v1507 = vadd.f32 %v1440, %v1483
        %v1508 = vadd.f32 %v1443, %v1483
        %v1509 = vadd.f32 %v1448, %v1483
        %v1510 = vadd.f32 %v1451, %v1483
        %v1511 = vadd.f32 %v1456, %v1483
        %v1512 = vadd.f32 %v1459, %v1483
        %v1513 = vadd.f32 %v1464, %v1483
        %v1514 = vadd.f32 %v1467, %v1483
        %v1515 = vadd.f32 %v1472, %v1483
        %v1516 = vadd.f32 %v1475, %v1483
        %v1517 = vtanh.pop %v1485
        %v1518 = vtanh.pop %v1486
        %v1519 = vtanh.pop %v1487
        %v1520 = vtanh.pop %v1488
        %v1521 = vtanh.pop %v1489
        %v1522 = vtanh.pop %v1490
        %v1523 = vtanh.pop %v1491
        %v1524 = vtanh.pop %v1492
        %v1525 = vtanh.pop %v1493
        %v1526 = vtanh.pop %v1494
        %v1527 = vtanh.pop %v1495
        %v1528 = vtanh.pop %v1496
        %v1529 = vtanh.pop %v1497
        %v1530 = vtanh.pop %v1498
        %v1531 = vtanh.pop %v1499
        %v1532 = vtanh.pop %v1500
        %v1533 = vtanh.pop %v1501
        %v1534 = vtanh.pop %v1502
        %v1535 = vtanh.pop %v1503
        %v1536 = vtanh.pop %v1504
        %v1537 = vtanh.pop %v1505
        %v1538 = vtanh.pop %v1506
        %v1539 = vtanh.pop %v1507
        %v1540 = vtanh.pop %v1508
        %v1541 = vtanh.pop %v1509
        %v1542 = vtanh.pop %v1510
        %v1543 = vtanh.pop %v1511
        %v1544 = vtanh.pop %v1512
        %v1545 = vtanh.pop %v1513
        %v1546 = vtanh.pop %v1514
        %v1547 = vtanh.pop %v1515
        %v1548 = vtanh.pop %v1516
        %v1549 = vpack.c.bf16 %v1518, %v1517
        %v1550 = vpack.c.bf16 %v1520, %v1519
        %v1551 = vpack.c.bf16 %v1522, %v1521
        %v1552 = vpack.c.bf16 %v1524, %v1523
        %v1553 = vpack.c.bf16 %v1526, %v1525
        %v1554 = vpack.c.bf16 %v1528, %v1527
        %v1555 = vpack.c.bf16 %v1530, %v1529
        %v1556 = vpack.c.bf16 %v1532, %v1531
        %v1557 = vpack.c.bf16 %v1534, %v1533
        %v1558 = vpack.c.bf16 %v1536, %v1535
        %v1559 = vpack.c.bf16 %v1538, %v1537
        %v1560 = vpack.c.bf16 %v1540, %v1539
        %v1561 = vpack.c.bf16 %v1542, %v1541
        %v1562 = vpack.c.bf16 %v1544, %v1543
        %v1563 = vpack.c.bf16 %v1546, %v1545
        %v1564 = vpack.c.bf16 %v1548, %v1547
        %v1565 = vld [vmem:[%s10] sm:$0xf]
        %v1566 = vld [vmem:[%s10 + $0x4] sm:$0xf]
        %v1567 = vld [vmem:[%s10 + $0x8] sm:$0xf]
        %v1568 = vld [vmem:[%s10 + $0xc] sm:$0xf]
        %v1569 = vld [vmem:[%s10 + $0x10] sm:$0xf]
        %v1570 = vld [vmem:[%s10 + $0x14] sm:$0xf]
        %v1571 = vld [vmem:[%s10 + $0x18] sm:$0xf]
        %v1572 = vld [vmem:[%s10 + $0x1c] sm:$0xf]
        %v1573 = vld [vmem:[%s10 + $0x20] sm:$0xf]
        %v1574 = vld [vmem:[%s10 + $0x24] sm:$0xf]
        %v1575 = vld [vmem:[%s10 + $0x28] sm:$0xf]
        %v1576 = vld [vmem:[%s10 + $0x2c] sm:$0xf]
        %v1577 = vld [vmem:[%s10 + $0x30] sm:$0xf]
        %v1578 = vld [vmem:[%s10 + $0x34] sm:$0xf]
        %v1579 = vld [vmem:[%s10 + $0x38] sm:$0xf]
        %v1580 = vld [vmem:[%s10 + $0x3c] sm:$0xf]
        %v1597 = vunpack.c.l.b16 %v1565
        %v1598 = vunpack.c.l.b16 %v1566
        %v1599 = vunpack.c.l.b16 %v1567
        %v1600 = vunpack.c.l.b16 %v1568
        %v1601 = vunpack.c.l.b16 %v1569
        %v1602 = vunpack.c.l.b16 %v1570
        %v1603 = vunpack.c.l.b16 %v1571
        %v1604 = vunpack.c.l.b16 %v1572
        %v1605 = vunpack.c.l.b16 %v1573
        %v1606 = vunpack.c.l.b16 %v1574
        %v1607 = vunpack.c.l.b16 %v1575
        %v1608 = vunpack.c.l.b16 %v1576
        %v1609 = vunpack.c.l.b16 %v1577
        %v1610 = vunpack.c.l.b16 %v1578
        %v1611 = vunpack.c.l.b16 %v1579
        %v1612 = vunpack.c.l.b16 %v1580
        %v1613 = vpack.c.b16 %v1598, %v1597
        %v1614 = vpack.c.b16 %v1600, %v1599
        %v1615 = vpack.c.b16 %v1602, %v1601
        %v1616 = vpack.c.b16 %v1604, %v1603
        %v1617 = vpack.c.b16 %v1606, %v1605
        %v1618 = vpack.c.b16 %v1608, %v1607
        %v1619 = vpack.c.b16 %v1610, %v1609
        %v1620 = vpack.c.b16 %v1612, %v1611
        %1629 = vmatprep.subr.bf16.mxu0 0
        %1630 = vmatpush1.bf16.msra.mxu0 %v1613
        %1631 = vmatprep.subr.bf16.mxu0 0
        %1632 = vmatpush1.bf16.msra.mxu0 %v1614
        %1633 = vmatprep.subr.bf16.mxu0 0
        %1634 = vmatpush1.bf16.msra.mxu0 %v1615
        %1635 = vmatprep.subr.bf16.mxu0 0
        %1636 = vmatpush1.bf16.msra.mxu0 %v1616
        %1637 = vmatprep.subr.bf16.mxu0 0
        %1638 = vmatpush1.bf16.msra.mxu0 %v1617
        %1639 = vmatprep.subr.bf16.mxu0 0
        %1640 = vmatpush1.bf16.msra.mxu0 %v1618
        %1641 = vmatprep.subr.bf16.mxu0 0
        %1642 = vmatpush1.bf16.msra.mxu0 %v1619
        %1643 = vmatprep.subr.bf16.mxu0 0
        %1644 = vmatpush1.bf16.msra.mxu0 %v1620
        %1645 = vmatprep.subr.bf16.mxu0 0
        %1646 = vmatpush1.bf16.msra.mxu0 0
        %1647 = vmatprep.subr.bf16.mxu0 0
        %1648 = vmatpush1.bf16.msra.mxu0 0
        %1649 = vmatprep.subr.bf16.mxu0 0
        %1650 = vmatpush1.bf16.msra.mxu0 0
        %1651 = vmatprep.subr.bf16.mxu0 0
        %1652 = vmatpush1.bf16.msra.mxu0 0
        %1653 = vmatprep.subr.bf16.mxu0 0
        %1654 = vmatpush1.bf16.msra.mxu0 0
        %1655 = vmatprep.subr.bf16.mxu0 0
        %1656 = vmatpush1.bf16.msra.mxu0 0
        %1657 = vmatprep.subr.bf16.mxu0 0
        %1658 = vmatpush1.bf16.msra.mxu0 0
        %1659 = vmatprep.subr.bf16.mxu0 0
        %1660 = vmatpush1.bf16.msra.mxu0 0
        %1661 = vmatprep.mubr.bf16.mxu0 0
        %1662 = vmatmul.mubr.bf16.gmra.mrb[0].mxu0 %v1549
        %v1663 = vpop.f32.mrb[0].mxu0
        %v1664 = vadd.f32 0.0, %v1663
        %v1665 = vpop.f32.mrb[0].mxu0
        %v1666 = vpop.f32.mrb[0].mxu0
        %v1667 = vadd.f32 0.0, %v1666
        %v1668 = vpop.f32.mrb[0].mxu0
        %1669 = vmatprep.mubr.bf16.mxu0 0
        %1670 = vmatmul.mubr.bf16.gmra.mrb[0].mxu0 %v1550
        %v1671 = vpop.f32.mrb[0].mxu0
        %v1672 = vadd.f32 0.0, %v1671
        %v1673 = vpop.f32.mrb[0].mxu0
        %v1674 = vpop.f32.mrb[0].mxu0
        %v1675 = vadd.f32 0.0, %v1674
        %v1676 = vpop.f32.mrb[0].mxu0
        %1677 = vmatprep.mubr.bf16.mxu0 0
        %1678 = vmatmul.mubr.bf16.gmra.mrb[0].mxu0 %v1551
        %v1679 = vpop.f32.mrb[0].mxu0
        %v1680 = vadd.f32 0.0, %v1679
        %v1681 = vpop.f32.mrb[0].mxu0
        %v1682 = vpop.f32.mrb[0].mxu0
        %v1683 = vadd.f32 0.0, %v1682
        %v1684 = vpop.f32.mrb[0].mxu0
        %1685 = vmatprep.mubr.bf16.mxu0 0
        %1686 = vmatmul.mubr.bf16.gmra.mrb[0].mxu0 %v1552
        %v1687 = vpop.f32.mrb[0].mxu0
        %v1688 = vadd.f32 0.0, %v1687
        %v1689 = vpop.f32.mrb[0].mxu0
        %v1690 = vpop.f32.mrb[0].mxu0
        %v1691 = vadd.f32 0.0, %v1690
        %v1692 = vpop.f32.mrb[0].mxu0
        %1693 = vmatprep.mubr.bf16.mxu0 0
        %1694 = vmatmul.mubr.bf16.gmra.mrb[0].mxu0 %v1553
        %v1695 = vpop.f32.mrb[0].mxu0
        %v1696 = vadd.f32 0.0, %v1695
        %v1697 = vpop.f32.mrb[0].mxu0
        %v1698 = vpop.f32.mrb[0].mxu0
        %v1699 = vadd.f32 0.0, %v1698
        %v1700 = vpop.f32.mrb[0].mxu0
        %1701 = vmatprep.mubr.bf16.mxu0 0
        %1702 = vmatmul.mubr.bf16.gmra.mrb[0].mxu0 %v1554
        %v1703 = vpop.f32.mrb[0].mxu0
        %v1704 = vadd.f32 0.0, %v1703
        %v1705 = vpop.f32.mrb[0].mxu0
        %v1706 = vpop.f32.mrb[0].mxu0
        %v1707 = vadd.f32 0.0, %v1706
        %v1708 = vpop.f32.mrb[0].mxu0
        %1709 = vmatprep.mubr.bf16.mxu0 0
        %1710 = vmatmul.mubr.bf16.gmra.mrb[0].mxu0 %v1555
        %v1711 = vpop.f32.mrb[0].mxu0
        %v1712 = vadd.f32 0.0, %v1711
        %v1713 = vpop.f32.mrb[0].mxu0
        %v1714 = vpop.f32.mrb[0].mxu0
        %v1715 = vadd.f32 0.0, %v1714
        %v1716 = vpop.f32.mrb[0].mxu0
        %1717 = vmatprep.mubr.bf16.mxu0 0
        %1718 = vmatmul.mubr.bf16.gmra.mrb[0].mxu0 %v1556
        %v1719 = vpop.f32.mrb[0].mxu0
        %v1720 = vadd.f32 0.0, %v1719
        %v1721 = vpop.f32.mrb[0].mxu0
        %v1722 = vpop.f32.mrb[0].mxu0
        %v1723 = vadd.f32 0.0, %v1722
        %v1724 = vpop.f32.mrb[0].mxu0
        %1725 = vmatprep.mubr.bf16.mxu0 0
        %1726 = vmatmul.mubr.bf16.gmra.mrb[0].mxu0 %v1557
        %v1727 = vpop.f32.mrb[0].mxu0
        %v1728 = vadd.f32 0.0, %v1727
        %v1729 = vpop.f32.mrb[0].mxu0
        %v1730 = vpop.f32.mrb[0].mxu0
        %v1731 = vadd.f32 0.0, %v1730
        %v1732 = vpop.f32.mrb[0].mxu0
        %1733 = vmatprep.mubr.bf16.mxu0 0
        %1734 = vmatmul.mubr.bf16.gmra.mrb[0].mxu0 %v1558
        %v1735 = vpop.f32.mrb[0].mxu0
        %v1736 = vadd.f32 0.0, %v1735
        %v1737 = vpop.f32.mrb[0].mxu0
        %v1738 = vpop.f32.mrb[0].mxu0
        %v1739 = vadd.f32 0.0, %v1738
        %v1740 = vpop.f32.mrb[0].mxu0
        %1741 = vmatprep.mubr.bf16.mxu0 0
        %1742 = vmatmul.mubr.bf16.gmra.mrb[0].mxu0 %v1559
        %v1743 = vpop.f32.mrb[0].mxu0
        %v1744 = vadd.f32 0.0, %v1743
        %v1745 = vpop.f32.mrb[0].mxu0
        %v1746 = vpop.f32.mrb[0].mxu0
        %v1747 = vadd.f32 0.0, %v1746
        %v1748 = vpop.f32.mrb[0].mxu0
        %1749 = vmatprep.mubr.bf16.mxu0 0
        %1750 = vmatmul.mubr.bf16.gmra.mrb[0].mxu0 %v1560
        %v1751 = vpop.f32.mrb[0].mxu0
        %v1752 = vadd.f32 0.0, %v1751
        %v1753 = vpop.f32.mrb[0].mxu0
        %v1754 = vpop.f32.mrb[0].mxu0
        %v1755 = vadd.f32 0.0, %v1754
        %v1756 = vpop.f32.mrb[0].mxu0
        %1757 = vmatprep.mubr.bf16.mxu0 0
        %1758 = vmatmul.mubr.bf16.gmra.mrb[0].mxu0 %v1561
        %v1759 = vpop.f32.mrb[0].mxu0
        %v1760 = vadd.f32 0.0, %v1759
        %v1761 = vpop.f32.mrb[0].mxu0
        %v1762 = vpop.f32.mrb[0].mxu0
        %v1763 = vadd.f32 0.0, %v1762
        %v1764 = vpop.f32.mrb[0].mxu0
        %1765 = vmatprep.mubr.bf16.mxu0 0
        %1766 = vmatmul.mubr.bf16.gmra.mrb[0].mxu0 %v1562
        %v1767 = vpop.f32.mrb[0].mxu0
        %v1768 = vadd.f32 0.0, %v1767
        %v1769 = vpop.f32.mrb[0].mxu0
        %v1770 = vpop.f32.mrb[0].mxu0
        %v1771 = vadd.f32 0.0, %v1770
        %v1772 = vpop.f32.mrb[0].mxu0
        %1773 = vmatprep.mubr.bf16.mxu0 0
        %1774 = vmatmul.mubr.bf16.gmra.mrb[0].mxu0 %v1563
        %v1775 = vpop.f32.mrb[0].mxu0
        %v1776 = vadd.f32 0.0, %v1775
        %v1777 = vpop.f32.mrb[0].mxu0
        %v1778 = vpop.f32.mrb[0].mxu0
        %v1779 = vadd.f32 0.0, %v1778
        %v1780 = vpop.f32.mrb[0].mxu0
        %1781 = vmatprep.mubr.bf16.mxu0 0
        %1782 = vmatmul.mubr.bf16.gmra.mrb[0].mxu0 %v1564
        %v1783 = vpop.f32.mrb[0].mxu0
        %v1784 = vadd.f32 0.0, %v1783
        %v1785 = vpop.f32.mrb[0].mxu0
        %v1786 = vpop.f32.mrb[0].mxu0
        %v1787 = vadd.f32 0.0, %v1786
        %v1788 = vpop.f32.mrb[0].mxu0
        %1789 = vdwg.mxu0
        %1790 = vst.msk [vmem:[%s503] sm:$0xff] %vm890, %v1664
        %1791 = vst.msk [vmem:[%s503 + $0x8] sm:$0xff] %vm890, %v1667
        %1792 = vst.msk [vmem:[%s503 + $0x10] sm:$0xff] %vm890, %v1672
        %1793 = vst.msk [vmem:[%s503 + $0x18] sm:$0xff] %vm890, %v1675
        %1794 = vst.msk [vmem:[%s503 + $0x20] sm:$0xff] %vm890, %v1680
        %1795 = vst.msk [vmem:[%s503 + $0x28] sm:$0xff] %vm890, %v1683
        %1796 = vst.msk [vmem:[%s503 + $0x30] sm:$0xff] %vm890, %v1688
        %1797 = vst.msk [vmem:[%s503 + $0x38] sm:$0xff] %vm890, %v1691
        %1798 = vst.msk [vmem:[%s503 + $0x40] sm:$0xff] %vm890, %v1696
        %1799 = vst.msk [vmem:[%s503 + $0x48] sm:$0xff] %vm890, %v1699
        %1800 = vst.msk [vmem:[%s503 + $0x50] sm:$0xff] %vm890, %v1704
        %1801 = vst.msk [vmem:[%s503 + $0x58] sm:$0xff] %vm890, %v1707
        %1802 = vst.msk [vmem:[%s503 + $0x60] sm:$0xff] %vm890, %v1712
        %1803 = vst.msk [vmem:[%s503 + $0x68] sm:$0xff] %vm890, %v1715
        %1804 = vst.msk [vmem:[%s503 + $0x70] sm:$0xff] %vm890, %v1720
        %1805 = vst.msk [vmem:[%s503 + $0x78] sm:$0xff] %vm890, %v1723
        %1806 = vst.msk [vmem:[%s503 + $0x80] sm:$0xff] %vm890, %v1728
        %1807 = vst.msk [vmem:[%s503 + $0x88] sm:$0xff] %vm890, %v1731
        %1808 = vst.msk [vmem:[%s503 + $0x90] sm:$0xff] %vm890, %v1736
        %1809 = vst.msk [vmem:[%s503 + $0x98] sm:$0xff] %vm890, %v1739
        %1810 = vst.msk [vmem:[%s503 + $0xa0] sm:$0xff] %vm890, %v1744
        %1811 = vst.msk [vmem:[%s503 + $0xa8] sm:$0xff] %vm890, %v1747
        %1812 = vst.msk [vmem:[%s503 + $0xb0] sm:$0xff] %vm890, %v1752
        %1813 = vst.msk [vmem:[%s503 + $0xb8] sm:$0xff] %vm890, %v1755
        %1814 = vst.msk [vmem:[%s503 + $0xc0] sm:$0xff] %vm890, %v1760
        %1815 = vst.msk [vmem:[%s503 + $0xc8] sm:$0xff] %vm890, %v1763
        %1816 = vst.msk [vmem:[%s503 + $0xd0] sm:$0xff] %vm890, %v1768
        %1817 = vst.msk [vmem:[%s503 + $0xd8] sm:$0xff] %vm890, %v1771
        %1818 = vst.msk [vmem:[%s503 + $0xe0] sm:$0xff] %vm890, %v1776
        %1819 = vst.msk [vmem:[%s503 + $0xe8] sm:$0xff] %vm890, %v1779
        %1820 = vst.msk [vmem:[%s503 + $0xf0] sm:$0xff] %vm890, %v1784
        %1821 = vst.msk [vmem:[%s503 + $0xf8] sm:$0xff] %vm890, %v1787
        %v1822 = vlaneseq
        %v1823 = vshrl.u32 %v1822, 7
        %v1824 = vadd.s32 %v1823, 8
        %v1825 = vadd.s32 %v1823, 16
        %v1826 = vadd.s32 %v1823, 24
        %v1827 = vadd.s32 %v1823, 32
        %v1828 = vadd.s32 %v1823, 40
        %v1829 = vadd.s32 %v1823, 48
        %v1830 = vadd.s32 %v1823, 56
        %v1831 = vadd.s32 %v1823, 64
        %v1832 = vadd.s32 %v1823, 72
        %v1833 = vadd.s32 %v1823, 80
        %v1834 = vadd.s32 %v1823, 88
        %v1835 = vadd.s32 %v1823, 96
        %v1836 = vadd.s32 %v1823, 104
        %v1837 = vadd.s32 %v1823, 112
        %v1838 = vadd.s32 %v1823, 120
        %v1839 = vadd.s32 %v1823, 128
        %v1840 = vadd.s32 %v1823, 136
        %v1841 = vadd.s32 %v1823, 144
        %v1842 = vadd.s32 %v1823, 152
        %v1843 = vadd.s32 %v1823, 160
        %v1844 = vadd.s32 %v1823, 168
        %v1845 = vadd.s32 %v1823, 176
        %v1846 = vadd.s32 %v1823, 184
        %v1847 = vadd.s32 %v1823, 192
        %v1848 = vadd.s32 %v1823, 200
        %v1849 = vadd.s32 %v1823, 208
        %v1850 = vadd.s32 %v1823, 216
        %v1851 = vadd.s32 %v1823, 224
        %v1852 = vadd.s32 %v1823, 232
        %v1853 = vadd.s32 %v1823, 240
        %v1854 = vadd.s32 %v1823, 248
        %s1855 = smul.u32 %s47, 256
        %v1856 = vstv %s1855
        %v1857 = vadd.s32 %v1823, %v1856
        %v1858 = vadd.s32 %v1824, %v1856
        %v1859 = vadd.s32 %v1825, %v1856
        %v1860 = vadd.s32 %v1826, %v1856
        %v1861 = vadd.s32 %v1827, %v1856
        %v1862 = vadd.s32 %v1828, %v1856
        %v1863 = vadd.s32 %v1829, %v1856
        %v1864 = vadd.s32 %v1830, %v1856
        %v1865 = vadd.s32 %v1831, %v1856
        %v1866 = vadd.s32 %v1832, %v1856
        %v1867 = vadd.s32 %v1833, %v1856
        %v1868 = vadd.s32 %v1834, %v1856
        %v1869 = vadd.s32 %v1835, %v1856
        %v1870 = vadd.s32 %v1836, %v1856
        %v1871 = vadd.s32 %v1837, %v1856
        %v1872 = vadd.s32 %v1838, %v1856
        %v1873 = vadd.s32 %v1839, %v1856
        %v1874 = vadd.s32 %v1840, %v1856
        %v1875 = vadd.s32 %v1841, %v1856
        %v1876 = vadd.s32 %v1842, %v1856
        %v1877 = vadd.s32 %v1843, %v1856
        %v1878 = vadd.s32 %v1844, %v1856
        %v1879 = vadd.s32 %v1845, %v1856
        %v1880 = vadd.s32 %v1846, %v1856
        %v1881 = vadd.s32 %v1847, %v1856
        %v1882 = vadd.s32 %v1848, %v1856
        %v1883 = vadd.s32 %v1849, %v1856
        %v1884 = vadd.s32 %v1850, %v1856
        %v1885 = vadd.s32 %v1851, %v1856
        %v1886 = vadd.s32 %v1852, %v1856
        %v1887 = vadd.s32 %v1853, %v1856
        %v1888 = vadd.s32 %v1854, %v1856
        %s1889 = sld [smem:[#allocation5 + %s46]]
        %v1890 = vstv %s1889
        %vm1891 = vcmp.lt.s32.totalorder %v1857, %v1890
        %vm1892 = vcmp.lt.s32.totalorder %v1858, %v1890
        %vm1893 = vcmp.lt.s32.totalorder %v1859, %v1890
        %vm1894 = vcmp.lt.s32.totalorder %v1860, %v1890
        %vm1895 = vcmp.lt.s32.totalorder %v1861, %v1890
        %vm1896 = vcmp.lt.s32.totalorder %v1862, %v1890
        %vm1897 = vcmp.lt.s32.totalorder %v1863, %v1890
        %vm1898 = vcmp.lt.s32.totalorder %v1864, %v1890
        %vm1899 = vcmp.lt.s32.totalorder %v1865, %v1890
        %vm1900 = vcmp.lt.s32.totalorder %v1866, %v1890
        %vm1901 = vcmp.lt.s32.totalorder %v1867, %v1890
        %vm1902 = vcmp.lt.s32.totalorder %v1868, %v1890
        %vm1903 = vcmp.lt.s32.totalorder %v1869, %v1890
        %vm1904 = vcmp.lt.s32.totalorder %v1870, %v1890
        %vm1905 = vcmp.lt.s32.totalorder %v1871, %v1890
        %vm1906 = vcmp.lt.s32.totalorder %v1872, %v1890
        %vm1907 = vcmp.lt.s32.totalorder %v1873, %v1890
        %vm1908 = vcmp.lt.s32.totalorder %v1874, %v1890
        %vm1909 = vcmp.lt.s32.totalorder %v1875, %v1890
        %vm1910 = vcmp.lt.s32.totalorder %v1876, %v1890
        %vm1911 = vcmp.lt.s32.totalorder %v1877, %v1890
        %vm1912 = vcmp.lt.s32.totalorder %v1878, %v1890
        %vm1913 = vcmp.lt.s32.totalorder %v1879, %v1890
        %vm1914 = vcmp.lt.s32.totalorder %v1880, %v1890
        %vm1915 = vcmp.lt.s32.totalorder %v1881, %v1890
        %vm1916 = vcmp.lt.s32.totalorder %v1882, %v1890
        %vm1917 = vcmp.lt.s32.totalorder %v1883, %v1890
        %vm1918 = vcmp.lt.s32.totalorder %v1884, %v1890
        %vm1919 = vcmp.lt.s32.totalorder %v1885, %v1890
        %vm1920 = vcmp.lt.s32.totalorder %v1886, %v1890
        %vm1921 = vcmp.lt.s32.totalorder %v1887, %v1890
        %vm1922 = vcmp.lt.s32.totalorder %v1888, %v1890
        %v1923 = vsub.f32 %v616, %v1664
        %v1924 = vsub.f32 %v617, %v1667
        %v1925 = vsub.f32 %v618, %v1672
        %v1926 = vsub.f32 %v619, %v1675
        %v1927 = vsub.f32 %v620, %v1680
        %v1928 = vsub.f32 %v621, %v1683
        %v1929 = vsub.f32 %v622, %v1688
        %v1930 = vsub.f32 %v623, %v1691
        %v1931 = vsub.f32 %v624, %v1696
        %v1932 = vsub.f32 %v625, %v1699
        %v1933 = vsub.f32 %v626, %v1704
        %v1934 = vsub.f32 %v627, %v1707
        %v1935 = vsub.f32 %v628, %v1712
        %v1936 = vsub.f32 %v629, %v1715
        %v1937 = vsub.f32 %v630, %v1720
        %v1938 = vsub.f32 %v631, %v1723
        %v1939 = vsub.f32 %v632, %v1728
        %v1940 = vsub.f32 %v633, %v1731
        %v1941 = vsub.f32 %v634, %v1736
        %v1942 = vsub.f32 %v635, %v1739
        %v1943 = vsub.f32 %v636, %v1744
        %v1944 = vsub.f32 %v637, %v1747
        %v1945 = vsub.f32 %v638, %v1752
        %v1946 = vsub.f32 %v639, %v1755
        %v1947 = vsub.f32 %v640, %v1760
        %v1948 = vsub.f32 %v641, %v1763
        %v1949 = vsub.f32 %v642, %v1768
        %v1950 = vsub.f32 %v643, %v1771
        %v1951 = vsub.f32 %v644, %v1776
        %v1952 = vsub.f32 %v645, %v1779
        %v1953 = vsub.f32 %v646, %v1784
        %v1954 = vsub.f32 %v647, %v1787
        %v1955 = vand.u32 2147483647, %v1923
        %v1956 = vand.u32 2147483647, %v1924
        %v1957 = vand.u32 2147483647, %v1925
        %v1958 = vand.u32 2147483647, %v1926
        %v1959 = vand.u32 2147483647, %v1927
        %v1960 = vand.u32 2147483647, %v1928
        %v1961 = vand.u32 2147483647, %v1929
        %v1962 = vand.u32 2147483647, %v1930
        %v1963 = vand.u32 2147483647, %v1931
        %v1964 = vand.u32 2147483647, %v1932
        %v1965 = vand.u32 2147483647, %v1933
        %v1966 = vand.u32 2147483647, %v1934
        %v1967 = vand.u32 2147483647, %v1935
        %v1968 = vand.u32 2147483647, %v1936
        %v1969 = vand.u32 2147483647, %v1937
        %v1970 = vand.u32 2147483647, %v1938
        %v1971 = vand.u32 2147483647, %v1939
        %v1972 = vand.u32 2147483647, %v1940
        %v1973 = vand.u32 2147483647, %v1941
        %v1974 = vand.u32 2147483647, %v1942
        %v1975 = vand.u32 2147483647, %v1943
        %v1976 = vand.u32 2147483647, %v1944
        %v1977 = vand.u32 2147483647, %v1945
        %v1978 = vand.u32 2147483647, %v1946
        %v1979 = vand.u32 2147483647, %v1947
        %v1980 = vand.u32 2147483647, %v1948
        %v1981 = vand.u32 2147483647, %v1949
        %v1982 = vand.u32 2147483647, %v1950
        %v1983 = vand.u32 2147483647, %v1951
        %v1984 = vand.u32 2147483647, %v1952
        %v1985 = vand.u32 2147483647, %v1953
        %v1986 = vand.u32 2147483647, %v1954
        %v1987 = vsel %vm1891, %v1955, 0.0
        %v1988 = vsel %vm1892, %v1956, 0.0
        %v1989 = vsel %vm1893, %v1957, 0.0
        %v1990 = vsel %vm1894, %v1958, 0.0
        %v1991 = vsel %vm1895, %v1959, 0.0
        %v1992 = vsel %vm1896, %v1960, 0.0
        %v1993 = vsel %vm1897, %v1961, 0.0
        %v1994 = vsel %vm1898, %v1962, 0.0
        %v1995 = vsel %vm1899, %v1963, 0.0
        %v1996 = vsel %vm1900, %v1964, 0.0
        %v1997 = vsel %vm1901, %v1965, 0.0
        %v1998 = vsel %vm1902, %v1966, 0.0
        %v1999 = vsel %vm1903, %v1967, 0.0
        %v2000 = vsel %vm1904, %v1968, 0.0
        %v2001 = vsel %vm1905, %v1969, 0.0
        %v2002 = vsel %vm1906, %v1970, 0.0
        %v2003 = vsel %vm1907, %v1971, 0.0
        %v2004 = vsel %vm1908, %v1972, 0.0
        %v2005 = vsel %vm1909, %v1973, 0.0
        %v2006 = vsel %vm1910, %v1974, 0.0
        %v2007 = vsel %vm1911, %v1975, 0.0
        %v2008 = vsel %vm1912, %v1976, 0.0
        %v2009 = vsel %vm1913, %v1977, 0.0
        %v2010 = vsel %vm1914, %v1978, 0.0
        %v2011 = vsel %vm1915, %v1979, 0.0
        %v2012 = vsel %vm1916, %v1980, 0.0
        %v2013 = vsel %vm1917, %v1981, 0.0
        %v2014 = vsel %vm1918, %v1982, 0.0
        %v2015 = vsel %vm1919, %v1983, 0.0
        %v2016 = vsel %vm1920, %v1984, 0.0
        %v2017 = vsel %vm1921, %v1985, 0.0
        %v2018 = vsel %vm1922, %v1986, 0.0
        %v2019 = vsel %vm890, %v1987, 0.0
        %v2020 = vsel %vm890, %v1988, 0.0
        %v2021 = vadd.f32 %v2019, %v2020
        %v2022 = vsel %vm890, %v1989, 0.0
        %v2023 = vadd.f32 %v2021, %v2022
        %v2024 = vsel %vm890, %v1990, 0.0
        %v2025 = vadd.f32 %v2023, %v2024
        %v2026 = vsel %vm890, %v1991, 0.0
        %v2027 = vadd.f32 %v2025, %v2026
        %v2028 = vsel %vm890, %v1992, 0.0
        %v2029 = vadd.f32 %v2027, %v2028
        %v2030 = vsel %vm890, %v1993, 0.0
        %v2031 = vadd.f32 %v2029, %v2030
        %v2032 = vsel %vm890, %v1994, 0.0
        %v2033 = vadd.f32 %v2031, %v2032
        %v2034 = vsel %vm890, %v1995, 0.0
        %v2035 = vadd.f32 %v2033, %v2034
        %v2036 = vsel %vm890, %v1996, 0.0
        %v2037 = vadd.f32 %v2035, %v2036
        %v2038 = vsel %vm890, %v1997, 0.0
        %v2039 = vadd.f32 %v2037, %v2038
        %v2040 = vsel %vm890, %v1998, 0.0
        %v2041 = vadd.f32 %v2039, %v2040
        %v2042 = vsel %vm890, %v1999, 0.0
        %v2043 = vadd.f32 %v2041, %v2042
        %v2044 = vsel %vm890, %v2000, 0.0
        %v2045 = vadd.f32 %v2043, %v2044
        %v2046 = vsel %vm890, %v2001, 0.0
        %v2047 = vadd.f32 %v2045, %v2046
        %v2048 = vsel %vm890, %v2002, 0.0
        %v2049 = vadd.f32 %v2047, %v2048
        %v2050 = vsel %vm890, %v2003, 0.0
        %v2051 = vadd.f32 %v2049, %v2050
        %v2052 = vsel %vm890, %v2004, 0.0
        %v2053 = vadd.f32 %v2051, %v2052
        %v2054 = vsel %vm890, %v2005, 0.0
        %v2055 = vadd.f32 %v2053, %v2054
        %v2056 = vsel %vm890, %v2006, 0.0
        %v2057 = vadd.f32 %v2055, %v2056
        %v2058 = vsel %vm890, %v2007, 0.0
        %v2059 = vadd.f32 %v2057, %v2058
        %v2060 = vsel %vm890, %v2008, 0.0
        %v2061 = vadd.f32 %v2059, %v2060
        %v2062 = vsel %vm890, %v2009, 0.0
        %v2063 = vadd.f32 %v2061, %v2062
        %v2064 = vsel %vm890, %v2010, 0.0
        %v2065 = vadd.f32 %v2063, %v2064
        %v2066 = vsel %vm890, %v2011, 0.0
        %v2067 = vadd.f32 %v2065, %v2066
        %v2068 = vsel %vm890, %v2012, 0.0
        %v2069 = vadd.f32 %v2067, %v2068
        %v2070 = vsel %vm890, %v2013, 0.0
        %v2071 = vadd.f32 %v2069, %v2070
        %v2072 = vsel %vm890, %v2014, 0.0
        %v2073 = vadd.f32 %v2071, %v2072
        %v2074 = vsel %vm890, %v2015, 0.0
        %v2075 = vadd.f32 %v2073, %v2074
        %v2076 = vsel %vm890, %v2016, 0.0
        %v2077 = vadd.f32 %v2075, %v2076
        %v2078 = vsel %vm890, %v2017, 0.0
        %v2079 = vadd.f32 %v2077, %v2078
        %v2080 = vsel %vm890, %v2018, 0.0
        %v2081 = vadd.f32 %v2079, %v2080
        %v2082 = vrot.slane %v2081, 4
        %v2083 = vadd.f32 %v2081, %v2082
        %v2084 = vrot.slane %v2083, 2
        %v2085 = vadd.f32 %v2083, %v2084
        %v2086 = vrot.slane %v2085, 1
        %v2087 = vadd.f32 %v2085, %v2086
        %vm2088 = vcmask 647168
        %2089 = vst.msk [vmem:[%s509] sm:$0x1] %vm2088, %v2087
        %s2090 = sand.u32 %s258, 1
        %s2091 = sand.u32 %s258, 1
        %s2092 = smul.addr %s2091, 256
        %s2093 = scalar_lea.vmem [#allocation6], %s2092
        %s2094 = sand.u32 %s286, 1
        %s2095 = sand.u32 %s286, 1
        %s2096 = smul.addr %s2095, 256
        %s2097 = scalar_lea.vmem [#allocation7], %s2096
        %s2098 = sand.u32 %s314, 1
        %s2099 = scalar_lea.sflag [#allocation9], %s2098
        %s2100 = sand.u32 %s314, 1
        %s2101 = scalar_lea.vmem [#allocation8], %s2100
        // Predicated region
        $region53: #{tpu_custom_call.1} parent=51 // pred_check
          %p2102 = pneg %p268
        $region54: #{tpu_custom_call.1} parent=51 // pred_check_branch
          %2104 = sbr.rel (%p2102) target = $region56
        $region55: #{tpu_custom_call.1} parent=51 // pred_region
          %s2105 = smul.u32 32, %s47
          %s2106 = ssub.s32 38, %s2105
          %p2107 = scmp.lt.s32.totalorder %s2106, 32
          %s2108 = scalar_select %p2107, %s2106, 32
          %s2109 = smul.u32 128, %s2108
          %p2110 = scmp.ne.s32.totalorder 0, %s2109
          %s2111 = smul.addr %s46, 38
          %s2112 = sadd.s32 %s2105, %s2111
          %s2113 = smul.addr %s2112, 8
          %s2114 = scalar_lea.vmem %s11, %s2113
          // Predicated region
          $region57: #{tpu_custom_call.1} parent=55 // pred_check
            %p2115 = pneg %p2110
          $region58: #{tpu_custom_call.1} parent=55 // pred_check_branch
            %2117 = sbr.rel (%p2115) target = $region60
          $region59: #{tpu_custom_call.1} parent=55 // pred_region
            // Predicated region
            $region61: #{tpu_custom_call.1} parent=59 // pred_check
              _
            $region62: #{tpu_custom_call.1} parent=59 // pred_check_branch
              %2119 = sbr.rel (0) target = $region64
            $region63: #{tpu_custom_call.1} parent=59 // pred_region
              // Predicated region
              $region83: #{tpu_custom_call.1} parent=63 // pred_check
                _
              $region84: #{tpu_custom_call.1} parent=63 // pred_check_branch
                %2230 = sbr.rel (0) target = $region86
              $region85: #{tpu_custom_call.1} parent=63 // pred_region
                %s2231 = sshrl.u32 %s2108, 5
                // While loop
                $region87: #{tpu_custom_call.1} parent=85 // loop_pre_header
                  _
                $region88: #{tpu_custom_call.1} parent=85 // loop_header
                  %s2233 = sphi 0, %s2235
                  %p2234 = scmp.ge.s32.totalorder %s2233, %s2231
                  %s2238 = sphi 0, %s2307
                  %s2239 = sphi %s2093, %s2310
                  %s2240 = sphi %s2114, %s2311
                $region89: #{tpu_custom_call.1} parent=85 // loop_header_branch
                  %2237 = sbr.rel (%p2234) target = $region93
                $region90: #{tpu_custom_call.1} parent=85 // loop_body
                  %v2241 = vld [vmem:[%s2239] sm:$0xff]
                  %2242 = vst [vmem:[%s2240] sm:$0xff] %v2241
                  %v2243 = vld [vmem:[%s2239 + $0x8] sm:$0xff]
                  %2244 = vst [vmem:[%s2240 + $0x8] sm:$0xff] %v2243
                  %v2245 = vld [vmem:[%s2239 + $0x10] sm:$0xff]
                  %2246 = vst [vmem:[%s2240 + $0x10] sm:$0xff] %v2245
                  %v2247 = vld [vmem:[%s2239 + $0x18] sm:$0xff]
                  %2248 = vst [vmem:[%s2240 + $0x18] sm:$0xff] %v2247
                  %v2249 = vld [vmem:[%s2239 + $0x20] sm:$0xff]
                  %2250 = vst [vmem:[%s2240 + $0x20] sm:$0xff] %v2249
                  %v2251 = vld [vmem:[%s2239 + $0x28] sm:$0xff]
                  %2252 = vst [vmem:[%s2240 + $0x28] sm:$0xff] %v2251
                  %v2253 = vld [vmem:[%s2239 + $0x30] sm:$0xff]
                  %2254 = vst [vmem:[%s2240 + $0x30] sm:$0xff] %v2253
                  %v2255 = vld [vmem:[%s2239 + $0x38] sm:$0xff]
                  %2256 = vst [vmem:[%s2240 + $0x38] sm:$0xff] %v2255
                  %v2257 = vld [vmem:[%s2239 + $0x40] sm:$0xff]
                  %2258 = vst [vmem:[%s2240 + $0x40] sm:$0xff] %v2257
                  %v2259 = vld [vmem:[%s2239 + $0x48] sm:$0xff]
                  %2260 = vst [vmem:[%s2240 + $0x48] sm:$0xff] %v2259
                  %v2261 = vld [vmem:[%s2239 + $0x50] sm:$0xff]
                  %2262 = vst [vmem:[%s2240 + $0x50] sm:$0xff] %v2261
                  %v2263 = vld [vmem:[%s2239 + $0x58] sm:$0xff]
                  %2264 = vst [vmem:[%s2240 + $0x58] sm:$0xff] %v2263
                  %v2265 = vld [vmem:[%s2239 + $0x60] sm:$0xff]
                  %2266 = vst [vmem:[%s2240 + $0x60] sm:$0xff] %v2265
                  %v2267 = vld [vmem:[%s2239 + $0x68] sm:$0xff]
                  %2268 = vst [vmem:[%s2240 + $0x68] sm:$0xff] %v2267
                  %v2269 = vld [vmem:[%s2239 + $0x70] sm:$0xff]
                  %2270 = vst [vmem:[%s2240 + $0x70] sm:$0xff] %v2269
                  %v2271 = vld [vmem:[%s2239 + $0x78] sm:$0xff]
                  %2272 = vst [vmem:[%s2240 + $0x78] sm:$0xff] %v2271
                  %v2273 = vld [vmem:[%s2239 + $0x80] sm:$0xff]
                  %2274 = vst [vmem:[%s2240 + $0x80] sm:$0xff] %v2273
                  %v2275 = vld [vmem:[%s2239 + $0x88] sm:$0xff]
                  %2276 = vst [vmem:[%s2240 + $0x88] sm:$0xff] %v2275
                  %v2277 = vld [vmem:[%s2239 + $0x90] sm:$0xff]
                  %2278 = vst [vmem:[%s2240 + $0x90] sm:$0xff] %v2277
                  %v2279 = vld [vmem:[%s2239 + $0x98] sm:$0xff]
                  %2280 = vst [vmem:[%s2240 + $0x98] sm:$0xff] %v2279
                  %v2281 = vld [vmem:[%s2239 + $0xa0] sm:$0xff]
                  %2282 = vst [vmem:[%s2240 + $0xa0] sm:$0xff] %v2281
                  %v2283 = vld [vmem:[%s2239 + $0xa8] sm:$0xff]
                  %2284 = vst [vmem:[%s2240 + $0xa8] sm:$0xff] %v2283
                  %v2285 = vld [vmem:[%s2239 + $0xb0] sm:$0xff]
                  %2286 = vst [vmem:[%s2240 + $0xb0] sm:$0xff] %v2285
                  %v2287 = vld [vmem:[%s2239 + $0xb8] sm:$0xff]
                  %2288 = vst [vmem:[%s2240 + $0xb8] sm:$0xff] %v2287
                  %v2289 = vld [vmem:[%s2239 + $0xc0] sm:$0xff]
                  %2290 = vst [vmem:[%s2240 + $0xc0] sm:$0xff] %v2289
                  %v2291 = vld [vmem:[%s2239 + $0xc8] sm:$0xff]
                  %2292 = vst [vmem:[%s2240 + $0xc8] sm:$0xff] %v2291
                  %v2293 = vld [vmem:[%s2239 + $0xd0] sm:$0xff]
                  %2294 = vst [vmem:[%s2240 + $0xd0] sm:$0xff] %v2293
                  %v2295 = vld [vmem:[%s2239 + $0xd8] sm:$0xff]
                  %2296 = vst [vmem:[%s2240 + $0xd8] sm:$0xff] %v2295
                  %v2297 = vld [vmem:[%s2239 + $0xe0] sm:$0xff]
                  %2298 = vst [vmem:[%s2240 + $0xe0] sm:$0xff] %v2297
                  %v2299 = vld [vmem:[%s2239 + $0xe8] sm:$0xff]
                  %2300 = vst [vmem:[%s2240 + $0xe8] sm:$0xff] %v2299
                  %v2301 = vld [vmem:[%s2239 + $0xf0] sm:$0xff]
                  %2302 = vst [vmem:[%s2240 + $0xf0] sm:$0xff] %v2301
                  %v2303 = vld [vmem:[%s2239 + $0xf8] sm:$0xff]
                  %2304 = vst [vmem:[%s2240 + $0xf8] sm:$0xff] %v2303
                  %s2305 = sadd.s32 1, %s2238
                  %p2306 = scmp.ge.s32.totalorder %s2305, %s2231
                  %s2307 = scalar_select %p2306, 0, %s2305
                  %s2308 = smul.u32 %s2307, 256
                  %s2309 = smul.u32 %s2307, 256
                  %s2310 = scalar_lea.vmem %s2093, %s2308 [#allocation6]
                  %s2311 = scalar_lea.vmem %s2114, %s2309
                $region91: #{tpu_custom_call.1} parent=85 // loop_footer
                  %s2235 = sadd.s32 %s2233, 1
                $region92: #{tpu_custom_call.1} parent=85 // loop_footer_branch
                  %2232 = sbr.rel target = $region88
                $region93: #{tpu_custom_call.1} parent=85 // loop_exit
                  _
                %s2312 = sshrl.u32 %s2108, 5
                %s2313 = sand.u32 %s2108, 31
                %s2314 = smul.u32 %s2312, 32
                %s2315 = smul.u32 8, %s2314
                %s2316 = scalar_lea.vmem %s2093, %s2315 [#allocation6]
                %s2317 = smul.u32 8, %s2314
                %s2318 = scalar_lea.vmem %s2114, %s2317
                // While loop
                $region94: #{tpu_custom_call.1} parent=85 // loop_pre_header
                  _
                $region95: #{tpu_custom_call.1} parent=85 // loop_header
                  %s2320 = sphi 0, %s2322
                  %p2321 = scmp.ge.s32.totalorder %s2320, %s2313
                  %s2325 = sphi 0, %s2332
                  %s2326 = sphi %s2316, %s2335
                  %s2327 = sphi %s2318, %s2336
                $region96: #{tpu_custom_call.1} parent=85 // loop_header_branch
                  %2324 = sbr.rel (%p2321) target = $region100
                $region97: #{tpu_custom_call.1} parent=85 // loop_body
                  %v2328 = vld [vmem:[%s2326] sm:$0xff]
                  %2329 = vst [vmem:[%s2327] sm:$0xff] %v2328
                  %s2330 = sadd.s32 1, %s2325
                  %p2331 = scmp.ge.s32.totalorder %s2330, %s2313
                  %s2332 = scalar_select %p2331, 0, %s2330
                  %s2333 = smul.u32 %s2332, 8
                  %s2334 = smul.u32 %s2332, 8
                  %s2335 = scalar_lea.vmem %s2316, %s2333 [#allocation6]
                  %s2336 = scalar_lea.vmem %s2318, %s2334
                $region98: #{tpu_custom_call.1} parent=85 // loop_footer
                  %s2322 = sadd.s32 %s2320, 1
                $region99: #{tpu_custom_call.1} parent=85 // loop_footer_branch
                  %2319 = sbr.rel target = $region95
                $region100: #{tpu_custom_call.1} parent=85 // loop_exit
                  _
              $region86: #{tpu_custom_call.1} parent=63 // pred_fallthru
                _
              // Predicated region
              $region101: #{tpu_custom_call.1} parent=63 // pred_check
                _
              $region102: #{tpu_custom_call.1} parent=63 // pred_check_branch
                %2338 = sbr.rel target = $region104
              $region103: #{tpu_custom_call.1} parent=63 // pred_region
                _
              $region104: #{tpu_custom_call.1} parent=63 // pred_fallthru
                _
            $region64: #{tpu_custom_call.1} parent=59 // pred_fallthru
              _
            // Predicated region
            $region65: #{tpu_custom_call.1} parent=59 // pred_check
              _
            $region66: #{tpu_custom_call.1} parent=59 // pred_check_branch
              %2121 = sbr.rel target = $region68
            $region67: #{tpu_custom_call.1} parent=59 // pred_region
              %s2123 = sshrl.u32 %s2108, 5
              // While loop
              $region69: #{tpu_custom_call.1} parent=67 // loop_pre_header
                _
              $region70: #{tpu_custom_call.1} parent=67 // loop_header
                %s2125 = sphi 0, %s2127
                %p2126 = scmp.ge.s32.totalorder %s2125, %s2123
                %s2130 = sphi 0, %s2199
                %s2131 = sphi %s2093, %s2202
                %s2132 = sphi %s2114, %s2203
              $region71: #{tpu_custom_call.1} parent=67 // loop_header_branch
                %2129 = sbr.rel (%p2126) target = $region75
              $region72: #{tpu_custom_call.1} parent=67 // loop_body
                %v2133 = vld [vmem:[%s2131] sm:$0xff]
                %2134 = vst [vmem:[%s2132] sm:$0xff] %v2133
                %v2135 = vld [vmem:[%s2131 + $0x8] sm:$0xff]
                %2136 = vst [vmem:[%s2132 + $0x8] sm:$0xff] %v2135
                %v2137 = vld [vmem:[%s2131 + $0x10] sm:$0xff]
                %2138 = vst [vmem:[%s2132 + $0x10] sm:$0xff] %v2137
                %v2139 = vld [vmem:[%s2131 + $0x18] sm:$0xff]
                %2140 = vst [vmem:[%s2132 + $0x18] sm:$0xff] %v2139
                %v2141 = vld [vmem:[%s2131 + $0x20] sm:$0xff]
                %2142 = vst [vmem:[%s2132 + $0x20] sm:$0xff] %v2141
                %v2143 = vld [vmem:[%s2131 + $0x28] sm:$0xff]
                %2144 = vst [vmem:[%s2132 + $0x28] sm:$0xff] %v2143
                %v2145 = vld [vmem:[%s2131 + $0x30] sm:$0xff]
                %2146 = vst [vmem:[%s2132 + $0x30] sm:$0xff] %v2145
                %v2147 = vld [vmem:[%s2131 + $0x38] sm:$0xff]
                %2148 = vst [vmem:[%s2132 + $0x38] sm:$0xff] %v2147
                %v2149 = vld [vmem:[%s2131 + $0x40] sm:$0xff]
                %2150 = vst [vmem:[%s2132 + $0x40] sm:$0xff] %v2149
                %v2151 = vld [vmem:[%s2131 + $0x48] sm:$0xff]
                %2152 = vst [vmem:[%s2132 + $0x48] sm:$0xff] %v2151
                %v2153 = vld [vmem:[%s2131 + $0x50] sm:$0xff]
                %2154 = vst [vmem:[%s2132 + $0x50] sm:$0xff] %v2153
                %v2155 = vld [vmem:[%s2131 + $0x58] sm:$0xff]
                %2156 = vst [vmem:[%s2132 + $0x58] sm:$0xff] %v2155
                %v2157 = vld [vmem:[%s2131 + $0x60] sm:$0xff]
                %2158 = vst [vmem:[%s2132 + $0x60] sm:$0xff] %v2157
                %v2159 = vld [vmem:[%s2131 + $0x68] sm:$0xff]
                %2160 = vst [vmem:[%s2132 + $0x68] sm:$0xff] %v2159
                %v2161 = vld [vmem:[%s2131 + $0x70] sm:$0xff]
                %2162 = vst [vmem:[%s2132 + $0x70] sm:$0xff] %v2161
                %v2163 = vld [vmem:[%s2131 + $0x78] sm:$0xff]
                %2164 = vst [vmem:[%s2132 + $0x78] sm:$0xff] %v2163
                %v2165 = vld [vmem:[%s2131 + $0x80] sm:$0xff]
                %2166 = vst [vmem:[%s2132 + $0x80] sm:$0xff] %v2165
                %v2167 = vld [vmem:[%s2131 + $0x88] sm:$0xff]
                %2168 = vst [vmem:[%s2132 + $0x88] sm:$0xff] %v2167
                %v2169 = vld [vmem:[%s2131 + $0x90] sm:$0xff]
                %2170 = vst [vmem:[%s2132 + $0x90] sm:$0xff] %v2169
                %v2171 = vld [vmem:[%s2131 + $0x98] sm:$0xff]
                %2172 = vst [vmem:[%s2132 + $0x98] sm:$0xff] %v2171
                %v2173 = vld [vmem:[%s2131 + $0xa0] sm:$0xff]
                %2174 = vst [vmem:[%s2132 + $0xa0] sm:$0xff] %v2173
                %v2175 = vld [vmem:[%s2131 + $0xa8] sm:$0xff]
                %2176 = vst [vmem:[%s2132 + $0xa8] sm:$0xff] %v2175
                %v2177 = vld [vmem:[%s2131 + $0xb0] sm:$0xff]
                %2178 = vst [vmem:[%s2132 + $0xb0] sm:$0xff] %v2177
                %v2179 = vld [vmem:[%s2131 + $0xb8] sm:$0xff]
                %2180 = vst [vmem:[%s2132 + $0xb8] sm:$0xff] %v2179
                %v2181 = vld [vmem:[%s2131 + $0xc0] sm:$0xff]
                %2182 = vst [vmem:[%s2132 + $0xc0] sm:$0xff] %v2181
                %v2183 = vld [vmem:[%s2131 + $0xc8] sm:$0xff]
                %2184 = vst [vmem:[%s2132 + $0xc8] sm:$0xff] %v2183
                %v2185 = vld [vmem:[%s2131 + $0xd0] sm:$0xff]
                %2186 = vst [vmem:[%s2132 + $0xd0] sm:$0xff] %v2185
                %v2187 = vld [vmem:[%s2131 + $0xd8] sm:$0xff]
                %2188 = vst [vmem:[%s2132 + $0xd8] sm:$0xff] %v2187
                %v2189 = vld [vmem:[%s2131 + $0xe0] sm:$0xff]
                %2190 = vst [vmem:[%s2132 + $0xe0] sm:$0xff] %v2189
                %v2191 = vld [vmem:[%s2131 + $0xe8] sm:$0xff]
                %2192 = vst [vmem:[%s2132 + $0xe8] sm:$0xff] %v2191
                %v2193 = vld [vmem:[%s2131 + $0xf0] sm:$0xff]
                %2194 = vst [vmem:[%s2132 + $0xf0] sm:$0xff] %v2193
                %v2195 = vld [vmem:[%s2131 + $0xf8] sm:$0xff]
                %2196 = vst [vmem:[%s2132 + $0xf8] sm:$0xff] %v2195
                %s2197 = sadd.s32 1, %s2130
                %p2198 = scmp.ge.s32.totalorder %s2197, %s2123
                %s2199 = scalar_select %p2198, 0, %s2197
                %s2200 = smul.u32 %s2199, 256
                %s2201 = smul.u32 %s2199, 256
                %s2202 = scalar_lea.vmem %s2093, %s2200 [#allocation6]
                %s2203 = scalar_lea.vmem %s2114, %s2201
              $region73: #{tpu_custom_call.1} parent=67 // loop_footer
                %s2127 = sadd.s32 %s2125, 1
              $region74: #{tpu_custom_call.1} parent=67 // loop_footer_branch
                %2124 = sbr.rel target = $region70
              $region75: #{tpu_custom_call.1} parent=67 // loop_exit
                _
              %s2204 = sshrl.u32 %s2108, 5
              %s2205 = sand.u32 %s2108, 31
              %s2206 = smul.u32 %s2204, 32
              %s2207 = smul.u32 8, %s2206
              %s2208 = scalar_lea.vmem %s2093, %s2207 [#allocation6]
              %s2209 = smul.u32 8, %s2206
              %s2210 = scalar_lea.vmem %s2114, %s2209
              // While loop
              $region76: #{tpu_custom_call.1} parent=67 // loop_pre_header
                _
              $region77: #{tpu_custom_call.1} parent=67 // loop_header
                %s2212 = sphi 0, %s2214
                %p2213 = scmp.ge.s32.totalorder %s2212, %s2205
                %s2217 = sphi 0, %s2224
                %s2218 = sphi %s2208, %s2227
                %s2219 = sphi %s2210, %s2228
              $region78: #{tpu_custom_call.1} parent=67 // loop_header_branch
                %2216 = sbr.rel (%p2213) target = $region82
              $region79: #{tpu_custom_call.1} parent=67 // loop_body
                %v2220 = vld [vmem:[%s2218] sm:$0xff]
                %2221 = vst [vmem:[%s2219] sm:$0xff] %v2220
                %s2222 = sadd.s32 1, %s2217
                %p2223 = scmp.ge.s32.totalorder %s2222, %s2205
                %s2224 = scalar_select %p2223, 0, %s2222
                %s2225 = smul.u32 %s2224, 8
                %s2226 = smul.u32 %s2224, 8
                %s2227 = scalar_lea.vmem %s2208, %s2225 [#allocation6]
                %s2228 = scalar_lea.vmem %s2210, %s2226
              $region80: #{tpu_custom_call.1} parent=67 // loop_footer
                %s2214 = sadd.s32 %s2212, 1
              $region81: #{tpu_custom_call.1} parent=67 // loop_footer_branch
                %2211 = sbr.rel target = $region77
              $region82: #{tpu_custom_call.1} parent=67 // loop_exit
                _
            $region68: #{tpu_custom_call.1} parent=59 // pred_fallthru
              _
          $region60: #{tpu_custom_call.1} parent=55 // pred_fallthru
            _
          %2339 = vnop
        $region56: #{tpu_custom_call.1} parent=51 // pred_fallthru
          _
        // Predicated region
        $region105: #{tpu_custom_call.1} parent=51 // pred_check
          %p2340 = pneg %p296
        $region106: #{tpu_custom_call.1} parent=51 // pred_check_branch
          %2342 = sbr.rel (%p2340) target = $region108
        $region107: #{tpu_custom_call.1} parent=51 // pred_region
          %s2343 = smul.u32 32, %s47
          %s2344 = ssub.s32 38, %s2343
          %p2345 = scmp.lt.s32.totalorder %s2344, 32
          %s2346 = scalar_select %p2345, %s2344, 32
          %s2347 = smul.u32 128, %s2346
          %p2348 = scmp.ne.s32.totalorder 0, %s2347
          %s2349 = smul.addr %s46, 38
          %s2350 = sadd.s32 %s2343, %s2349
          %s2351 = smul.addr %s2350, 8
          %s2352 = scalar_lea.vmem %s12, %s2351
          // Predicated region
          $region109: #{tpu_custom_call.1} parent=107 // pred_check
            %p2353 = pneg %p2348
          $region110: #{tpu_custom_call.1} parent=107 // pred_check_branch
            %2355 = sbr.rel (%p2353) target = $region112
          $region111: #{tpu_custom_call.1} parent=107 // pred_region
            // Predicated region
            $region113: #{tpu_custom_call.1} parent=111 // pred_check
              _
            $region114: #{tpu_custom_call.1} parent=111 // pred_check_branch
              %2357 = sbr.rel (0) target = $region116
            $region115: #{tpu_custom_call.1} parent=111 // pred_region
              // Predicated region
              $region135: #{tpu_custom_call.1} parent=115 // pred_check
                _
              $region136: #{tpu_custom_call.1} parent=115 // pred_check_branch
                %2468 = sbr.rel (0) target = $region138
              $region137: #{tpu_custom_call.1} parent=115 // pred_region
                %s2469 = sshrl.u32 %s2346, 5
                // While loop
                $region139: #{tpu_custom_call.1} parent=137 // loop_pre_header
                  _
                $region140: #{tpu_custom_call.1} parent=137 // loop_header
                  %s2471 = sphi 0, %s2473
                  %p2472 = scmp.ge.s32.totalorder %s2471, %s2469
                  %s2476 = sphi 0, %s2545
                  %s2477 = sphi %s2097, %s2548
                  %s2478 = sphi %s2352, %s2549
                $region141: #{tpu_custom_call.1} parent=137 // loop_header_branch
                  %2475 = sbr.rel (%p2472) target = $region145
                $region142: #{tpu_custom_call.1} parent=137 // loop_body
                  %v2479 = vld [vmem:[%s2477] sm:$0xff]
                  %2480 = vst [vmem:[%s2478] sm:$0xff] %v2479
                  %v2481 = vld [vmem:[%s2477 + $0x8] sm:$0xff]
                  %2482 = vst [vmem:[%s2478 + $0x8] sm:$0xff] %v2481
                  %v2483 = vld [vmem:[%s2477 + $0x10] sm:$0xff]
                  %2484 = vst [vmem:[%s2478 + $0x10] sm:$0xff] %v2483
                  %v2485 = vld [vmem:[%s2477 + $0x18] sm:$0xff]
                  %2486 = vst [vmem:[%s2478 + $0x18] sm:$0xff] %v2485
                  %v2487 = vld [vmem:[%s2477 + $0x20] sm:$0xff]
                  %2488 = vst [vmem:[%s2478 + $0x20] sm:$0xff] %v2487
                  %v2489 = vld [vmem:[%s2477 + $0x28] sm:$0xff]
                  %2490 = vst [vmem:[%s2478 + $0x28] sm:$0xff] %v2489
                  %v2491 = vld [vmem:[%s2477 + $0x30] sm:$0xff]
                  %2492 = vst [vmem:[%s2478 + $0x30] sm:$0xff] %v2491
                  %v2493 = vld [vmem:[%s2477 + $0x38] sm:$0xff]
                  %2494 = vst [vmem:[%s2478 + $0x38] sm:$0xff] %v2493
                  %v2495 = vld [vmem:[%s2477 + $0x40] sm:$0xff]
                  %2496 = vst [vmem:[%s2478 + $0x40] sm:$0xff] %v2495
                  %v2497 = vld [vmem:[%s2477 + $0x48] sm:$0xff]
                  %2498 = vst [vmem:[%s2478 + $0x48] sm:$0xff] %v2497
                  %v2499 = vld [vmem:[%s2477 + $0x50] sm:$0xff]
                  %2500 = vst [vmem:[%s2478 + $0x50] sm:$0xff] %v2499
                  %v2501 = vld [vmem:[%s2477 + $0x58] sm:$0xff]
                  %2502 = vst [vmem:[%s2478 + $0x58] sm:$0xff] %v2501
                  %v2503 = vld [vmem:[%s2477 + $0x60] sm:$0xff]
                  %2504 = vst [vmem:[%s2478 + $0x60] sm:$0xff] %v2503
                  %v2505 = vld [vmem:[%s2477 + $0x68] sm:$0xff]
                  %2506 = vst [vmem:[%s2478 + $0x68] sm:$0xff] %v2505
                  %v2507 = vld [vmem:[%s2477 + $0x70] sm:$0xff]
                  %2508 = vst [vmem:[%s2478 + $0x70] sm:$0xff] %v2507
                  %v2509 = vld [vmem:[%s2477 + $0x78] sm:$0xff]
                  %2510 = vst [vmem:[%s2478 + $0x78] sm:$0xff] %v2509
                  %v2511 = vld [vmem:[%s2477 + $0x80] sm:$0xff]
                  %2512 = vst [vmem:[%s2478 + $0x80] sm:$0xff] %v2511
                  %v2513 = vld [vmem:[%s2477 + $0x88] sm:$0xff]
                  %2514 = vst [vmem:[%s2478 + $0x88] sm:$0xff] %v2513
                  %v2515 = vld [vmem:[%s2477 + $0x90] sm:$0xff]
                  %2516 = vst [vmem:[%s2478 + $0x90] sm:$0xff] %v2515
                  %v2517 = vld [vmem:[%s2477 + $0x98] sm:$0xff]
                  %2518 = vst [vmem:[%s2478 + $0x98] sm:$0xff] %v2517
                  %v2519 = vld [vmem:[%s2477 + $0xa0] sm:$0xff]
                  %2520 = vst [vmem:[%s2478 + $0xa0] sm:$0xff] %v2519
                  %v2521 = vld [vmem:[%s2477 + $0xa8] sm:$0xff]
                  %2522 = vst [vmem:[%s2478 + $0xa8] sm:$0xff] %v2521
                  %v2523 = vld [vmem:[%s2477 + $0xb0] sm:$0xff]
                  %2524 = vst [vmem:[%s2478 + $0xb0] sm:$0xff] %v2523
                  %v2525 = vld [vmem:[%s2477 + $0xb8] sm:$0xff]
                  %2526 = vst [vmem:[%s2478 + $0xb8] sm:$0xff] %v2525
                  %v2527 = vld [vmem:[%s2477 + $0xc0] sm:$0xff]
                  %2528 = vst [vmem:[%s2478 + $0xc0] sm:$0xff] %v2527
                  %v2529 = vld [vmem:[%s2477 + $0xc8] sm:$0xff]
                  %2530 = vst [vmem:[%s2478 + $0xc8] sm:$0xff] %v2529
                  %v2531 = vld [vmem:[%s2477 + $0xd0] sm:$0xff]
                  %2532 = vst [vmem:[%s2478 + $0xd0] sm:$0xff] %v2531
                  %v2533 = vld [vmem:[%s2477 + $0xd8] sm:$0xff]
                  %2534 = vst [vmem:[%s2478 + $0xd8] sm:$0xff] %v2533
                  %v2535 = vld [vmem:[%s2477 + $0xe0] sm:$0xff]
                  %2536 = vst [vmem:[%s2478 + $0xe0] sm:$0xff] %v2535
                  %v2537 = vld [vmem:[%s2477 + $0xe8] sm:$0xff]
                  %2538 = vst [vmem:[%s2478 + $0xe8] sm:$0xff] %v2537
                  %v2539 = vld [vmem:[%s2477 + $0xf0] sm:$0xff]
                  %2540 = vst [vmem:[%s2478 + $0xf0] sm:$0xff] %v2539
                  %v2541 = vld [vmem:[%s2477 + $0xf8] sm:$0xff]
                  %2542 = vst [vmem:[%s2478 + $0xf8] sm:$0xff] %v2541
                  %s2543 = sadd.s32 1, %s2476
                  %p2544 = scmp.ge.s32.totalorder %s2543, %s2469
                  %s2545 = scalar_select %p2544, 0, %s2543
                  %s2546 = smul.u32 %s2545, 256
                  %s2547 = smul.u32 %s2545, 256
                  %s2548 = scalar_lea.vmem %s2097, %s2546 [#allocation7]
                  %s2549 = scalar_lea.vmem %s2352, %s2547
                $region143: #{tpu_custom_call.1} parent=137 // loop_footer
                  %s2473 = sadd.s32 %s2471, 1
                $region144: #{tpu_custom_call.1} parent=137 // loop_footer_branch
                  %2470 = sbr.rel target = $region140
                $region145: #{tpu_custom_call.1} parent=137 // loop_exit
                  _
                %s2550 = sshrl.u32 %s2346, 5
                %s2551 = sand.u32 %s2346, 31
                %s2552 = smul.u32 %s2550, 32
                %s2553 = smul.u32 8, %s2552
                %s2554 = scalar_lea.vmem %s2097, %s2553 [#allocation7]
                %s2555 = smul.u32 8, %s2552
                %s2556 = scalar_lea.vmem %s2352, %s2555
                // While loop
                $region146: #{tpu_custom_call.1} parent=137 // loop_pre_header
                  _
                $region147: #{tpu_custom_call.1} parent=137 // loop_header
                  %s2558 = sphi 0, %s2560
                  %p2559 = scmp.ge.s32.totalorder %s2558, %s2551
                  %s2563 = sphi 0, %s2570
                  %s2564 = sphi %s2554, %s2573
                  %s2565 = sphi %s2556, %s2574
                $region148: #{tpu_custom_call.1} parent=137 // loop_header_branch
                  %2562 = sbr.rel (%p2559) target = $region152
                $region149: #{tpu_custom_call.1} parent=137 // loop_body
                  %v2566 = vld [vmem:[%s2564] sm:$0xff]
                  %2567 = vst [vmem:[%s2565] sm:$0xff] %v2566
                  %s2568 = sadd.s32 1, %s2563
                  %p2569 = scmp.ge.s32.totalorder %s2568, %s2551
                  %s2570 = scalar_select %p2569, 0, %s2568
                  %s2571 = smul.u32 %s2570, 8
                  %s2572 = smul.u32 %s2570, 8
                  %s2573 = scalar_lea.vmem %s2554, %s2571 [#allocation7]
                  %s2574 = scalar_lea.vmem %s2556, %s2572
                $region150: #{tpu_custom_call.1} parent=137 // loop_footer
                  %s2560 = sadd.s32 %s2558, 1
                $region151: #{tpu_custom_call.1} parent=137 // loop_footer_branch
                  %2557 = sbr.rel target = $region147
                $region152: #{tpu_custom_call.1} parent=137 // loop_exit
                  _
              $region138: #{tpu_custom_call.1} parent=115 // pred_fallthru
                _
              // Predicated region
              $region153: #{tpu_custom_call.1} parent=115 // pred_check
                _
              $region154: #{tpu_custom_call.1} parent=115 // pred_check_branch
                %2576 = sbr.rel target = $region156
              $region155: #{tpu_custom_call.1} parent=115 // pred_region
                _
              $region156: #{tpu_custom_call.1} parent=115 // pred_fallthru
                _
            $region116: #{tpu_custom_call.1} parent=111 // pred_fallthru
              _
            // Predicated region
            $region117: #{tpu_custom_call.1} parent=111 // pred_check
              _
            $region118: #{tpu_custom_call.1} parent=111 // pred_check_branch
              %2359 = sbr.rel target = $region120
            $region119: #{tpu_custom_call.1} parent=111 // pred_region
              %s2361 = sshrl.u32 %s2346, 5
              // While loop
              $region121: #{tpu_custom_call.1} parent=119 // loop_pre_header
                _
              $region122: #{tpu_custom_call.1} parent=119 // loop_header
                %s2363 = sphi 0, %s2365
                %p2364 = scmp.ge.s32.totalorder %s2363, %s2361
                %s2368 = sphi 0, %s2437
                %s2369 = sphi %s2097, %s2440
                %s2370 = sphi %s2352, %s2441
              $region123: #{tpu_custom_call.1} parent=119 // loop_header_branch
                %2367 = sbr.rel (%p2364) target = $region127
              $region124: #{tpu_custom_call.1} parent=119 // loop_body
                %v2371 = vld [vmem:[%s2369] sm:$0xff]
                %2372 = vst [vmem:[%s2370] sm:$0xff] %v2371
                %v2373 = vld [vmem:[%s2369 + $0x8] sm:$0xff]
                %2374 = vst [vmem:[%s2370 + $0x8] sm:$0xff] %v2373
                %v2375 = vld [vmem:[%s2369 + $0x10] sm:$0xff]
                %2376 = vst [vmem:[%s2370 + $0x10] sm:$0xff] %v2375
                %v2377 = vld [vmem:[%s2369 + $0x18] sm:$0xff]
                %2378 = vst [vmem:[%s2370 + $0x18] sm:$0xff] %v2377
                %v2379 = vld [vmem:[%s2369 + $0x20] sm:$0xff]
                %2380 = vst [vmem:[%s2370 + $0x20] sm:$0xff] %v2379
                %v2381 = vld [vmem:[%s2369 + $0x28] sm:$0xff]
                %2382 = vst [vmem:[%s2370 + $0x28] sm:$0xff] %v2381
                %v2383 = vld [vmem:[%s2369 + $0x30] sm:$0xff]
                %2384 = vst [vmem:[%s2370 + $0x30] sm:$0xff] %v2383
                %v2385 = vld [vmem:[%s2369 + $0x38] sm:$0xff]
                %2386 = vst [vmem:[%s2370 + $0x38] sm:$0xff] %v2385
                %v2387 = vld [vmem:[%s2369 + $0x40] sm:$0xff]
                %2388 = vst [vmem:[%s2370 + $0x40] sm:$0xff] %v2387
                %v2389 = vld [vmem:[%s2369 + $0x48] sm:$0xff]
                %2390 = vst [vmem:[%s2370 + $0x48] sm:$0xff] %v2389
                %v2391 = vld [vmem:[%s2369 + $0x50] sm:$0xff]
                %2392 = vst [vmem:[%s2370 + $0x50] sm:$0xff] %v2391
                %v2393 = vld [vmem:[%s2369 + $0x58] sm:$0xff]
                %2394 = vst [vmem:[%s2370 + $0x58] sm:$0xff] %v2393
                %v2395 = vld [vmem:[%s2369 + $0x60] sm:$0xff]
                %2396 = vst [vmem:[%s2370 + $0x60] sm:$0xff] %v2395
                %v2397 = vld [vmem:[%s2369 + $0x68] sm:$0xff]
                %2398 = vst [vmem:[%s2370 + $0x68] sm:$0xff] %v2397
                %v2399 = vld [vmem:[%s2369 + $0x70] sm:$0xff]
                %2400 = vst [vmem:[%s2370 + $0x70] sm:$0xff] %v2399
                %v2401 = vld [vmem:[%s2369 + $0x78] sm:$0xff]
                %2402 = vst [vmem:[%s2370 + $0x78] sm:$0xff] %v2401
                %v2403 = vld [vmem:[%s2369 + $0x80] sm:$0xff]
                %2404 = vst [vmem:[%s2370 + $0x80] sm:$0xff] %v2403
                %v2405 = vld [vmem:[%s2369 + $0x88] sm:$0xff]
                %2406 = vst [vmem:[%s2370 + $0x88] sm:$0xff] %v2405
                %v2407 = vld [vmem:[%s2369 + $0x90] sm:$0xff]
                %2408 = vst [vmem:[%s2370 + $0x90] sm:$0xff] %v2407
                %v2409 = vld [vmem:[%s2369 + $0x98] sm:$0xff]
                %2410 = vst [vmem:[%s2370 + $0x98] sm:$0xff] %v2409
                %v2411 = vld [vmem:[%s2369 + $0xa0] sm:$0xff]
                %2412 = vst [vmem:[%s2370 + $0xa0] sm:$0xff] %v2411
                %v2413 = vld [vmem:[%s2369 + $0xa8] sm:$0xff]
                %2414 = vst [vmem:[%s2370 + $0xa8] sm:$0xff] %v2413
                %v2415 = vld [vmem:[%s2369 + $0xb0] sm:$0xff]
                %2416 = vst [vmem:[%s2370 + $0xb0] sm:$0xff] %v2415
                %v2417 = vld [vmem:[%s2369 + $0xb8] sm:$0xff]
                %2418 = vst [vmem:[%s2370 + $0xb8] sm:$0xff] %v2417
                %v2419 = vld [vmem:[%s2369 + $0xc0] sm:$0xff]
                %2420 = vst [vmem:[%s2370 + $0xc0] sm:$0xff] %v2419
                %v2421 = vld [vmem:[%s2369 + $0xc8] sm:$0xff]
                %2422 = vst [vmem:[%s2370 + $0xc8] sm:$0xff] %v2421
                %v2423 = vld [vmem:[%s2369 + $0xd0] sm:$0xff]
                %2424 = vst [vmem:[%s2370 + $0xd0] sm:$0xff] %v2423
                %v2425 = vld [vmem:[%s2369 + $0xd8] sm:$0xff]
                %2426 = vst [vmem:[%s2370 + $0xd8] sm:$0xff] %v2425
                %v2427 = vld [vmem:[%s2369 + $0xe0] sm:$0xff]
                %2428 = vst [vmem:[%s2370 + $0xe0] sm:$0xff] %v2427
                %v2429 = vld [vmem:[%s2369 + $0xe8] sm:$0xff]
                %2430 = vst [vmem:[%s2370 + $0xe8] sm:$0xff] %v2429
                %v2431 = vld [vmem:[%s2369 + $0xf0] sm:$0xff]
                %2432 = vst [vmem:[%s2370 + $0xf0] sm:$0xff] %v2431
                %v2433 = vld [vmem:[%s2369 + $0xf8] sm:$0xff]
                %2434 = vst [vmem:[%s2370 + $0xf8] sm:$0xff] %v2433
                %s2435 = sadd.s32 1, %s2368
                %p2436 = scmp.ge.s32.totalorder %s2435, %s2361
                %s2437 = scalar_select %p2436, 0, %s2435
                %s2438 = smul.u32 %s2437, 256
                %s2439 = smul.u32 %s2437, 256
                %s2440 = scalar_lea.vmem %s2097, %s2438 [#allocation7]
                %s2441 = scalar_lea.vmem %s2352, %s2439
              $region125: #{tpu_custom_call.1} parent=119 // loop_footer
                %s2365 = sadd.s32 %s2363, 1
              $region126: #{tpu_custom_call.1} parent=119 // loop_footer_branch
                %2362 = sbr.rel target = $region122
              $region127: #{tpu_custom_call.1} parent=119 // loop_exit
                _
              %s2442 = sshrl.u32 %s2346, 5
              %s2443 = sand.u32 %s2346, 31
              %s2444 = smul.u32 %s2442, 32
              %s2445 = smul.u32 8, %s2444
              %s2446 = scalar_lea.vmem %s2097, %s2445 [#allocation7]
              %s2447 = smul.u32 8, %s2444
              %s2448 = scalar_lea.vmem %s2352, %s2447
              // While loop
              $region128: #{tpu_custom_call.1} parent=119 // loop_pre_header
                _
              $region129: #{tpu_custom_call.1} parent=119 // loop_header
                %s2450 = sphi 0, %s2452
                %p2451 = scmp.ge.s32.totalorder %s2450, %s2443
                %s2455 = sphi 0, %s2462
                %s2456 = sphi %s2446, %s2465
                %s2457 = sphi %s2448, %s2466
              $region130: #{tpu_custom_call.1} parent=119 // loop_header_branch
                %2454 = sbr.rel (%p2451) target = $region134
              $region131: #{tpu_custom_call.1} parent=119 // loop_body
                %v2458 = vld [vmem:[%s2456] sm:$0xff]
                %2459 = vst [vmem:[%s2457] sm:$0xff] %v2458
                %s2460 = sadd.s32 1, %s2455
                %p2461 = scmp.ge.s32.totalorder %s2460, %s2443
                %s2462 = scalar_select %p2461, 0, %s2460
                %s2463 = smul.u32 %s2462, 8
                %s2464 = smul.u32 %s2462, 8
                %s2465 = scalar_lea.vmem %s2446, %s2463 [#allocation7]
                %s2466 = scalar_lea.vmem %s2448, %s2464
              $region132: #{tpu_custom_call.1} parent=119 // loop_footer
                %s2452 = sadd.s32 %s2450, 1
              $region133: #{tpu_custom_call.1} parent=119 // loop_footer_branch
                %2449 = sbr.rel target = $region129
              $region134: #{tpu_custom_call.1} parent=119 // loop_exit
                _
            $region120: #{tpu_custom_call.1} parent=111 // pred_fallthru
              _
          $region112: #{tpu_custom_call.1} parent=107 // pred_fallthru
            _
          %2577 = vnop
        $region108: #{tpu_custom_call.1} parent=51 // pred_fallthru
          _
        // Predicated region
        $region157: #{tpu_custom_call.1} parent=51 // pred_check
          %p2578 = pneg %p324
        $region158: #{tpu_custom_call.1} parent=51 // pred_check_branch
          %2580 = sbr.rel (%p2578) target = $region160
        $region159: #{tpu_custom_call.1} parent=51 // pred_region
          %s2582 = ssub.s32 16, 16
          %2583 = vsyncadd %s2099, %s2582
          %s2584 = smul.addr %s46, 2
          %s2585 = sadd.s32 %s47, %s2584
          %s2586 = smul.addr %s2585, 16
          %s2587 = scalar_lea.hbm %s13, %s2586
          %s2589 = sshll.u32 %s2101, 4
          %s2590 = int_to_ptr.vmem [resolvable:$true] %s2589
          %2592 = dma.vmem_to_hbm [thread:$0]  %s2590, 16, %s2587, %s2099
        $region160: #{tpu_custom_call.1} parent=51 // pred_fallthru
          _
      $region52: #{tpu_custom_call.1} parent=5 // pred_fallthru
        _
      %p2593 = scmp.le.s32.totalorder 2, %s37
      // Predicated region
      $region161: #{tpu_custom_call.1} parent=5 // pred_check
        %p2594 = pneg %p2593
      $region162: #{tpu_custom_call.1} parent=5 // pred_check_branch
        %2596 = sbr.rel (%p2594) target = $region164
      $region163: #{tpu_custom_call.1} parent=5 // pred_region
        %s2597 = ssub.s32 %s37, 2
        // Predicated region
        $region165: #{tpu_custom_call.1} parent=163 // pred_check
          %p2598 = pneg %p274
        $region166: #{tpu_custom_call.1} parent=163 // pred_check_branch
          %2600 = sbr.rel (%p2598) target = $region168
        $region167: #{tpu_custom_call.1} parent=163 // pred_region
          %s2601 = sand.u32 %s259, 1
          %s2602 = sand.u32 %s259, 1
          %s2603 = smul.addr %s2602, 256
          %s2604 = scalar_lea.vmem [#allocation6], %s2603
        $region168: #{tpu_custom_call.1} parent=163 // pred_fallthru
          _
        // Predicated region
        $region169: #{tpu_custom_call.1} parent=163 // pred_check
          %p2605 = pneg %p302
        $region170: #{tpu_custom_call.1} parent=163 // pred_check_branch
          %2607 = sbr.rel (%p2605) target = $region172
        $region171: #{tpu_custom_call.1} parent=163 // pred_region
          %s2608 = sand.u32 %s287, 1
          %s2609 = sand.u32 %s287, 1
          %s2610 = smul.addr %s2609, 256
          %s2611 = scalar_lea.vmem [#allocation7], %s2610
        $region172: #{tpu_custom_call.1} parent=163 // pred_fallthru
          _
        // Predicated region
        $region173: #{tpu_custom_call.1} parent=163 // pred_check
          %p2612 = pneg %p330
        $region174: #{tpu_custom_call.1} parent=163 // pred_check_branch
          %2614 = sbr.rel (%p2612) target = $region176
        $region175: #{tpu_custom_call.1} parent=163 // pred_region
          %s2615 = sand.u32 %s315, 1
          %s2616 = scalar_lea.sflag [#allocation9], %s2615
          %s2617 = sand.u32 %s315, 1
          %s2618 = scalar_lea.vmem [#allocation8], %s2617
          %2619 = dma.done %s2616, 16
        $region176: #{tpu_custom_call.1} parent=163 // pred_fallthru
          _
      $region164: #{tpu_custom_call.1} parent=5 // pred_fallthru
        _
    $region6: #{tpu_custom_call.1} parent=1 // loop_footer
      %s41 = sadd.s32 1, %s37
    $region7: #{tpu_custom_call.1} parent=1 // loop_footer_branch
      %36 = sbr.rel target = $region3
    $region8: #{tpu_custom_call.1} parent=1 // loop_exit
      _
    %2620 = vsyncpa [#allocation9], 1
    %s2621 = scalar_lea.sflag [#allocation9], 1
    %2622 = vsyncpa %s2621, 1

</llo_original>
